<compile_context>
chip_gen: v7x
topology: tpu7x:2x2x1
jax: 0.10.0
libtpu: 0.0.40
codegen_flags: <defaults>
</compile_context>

<pallas_src>
import functools

import jax
import jax.numpy as jnp
from jax.experimental import pallas as pl
from jax.experimental.pallas import tpu as pltpu

LEAKY_SLOPE = 0.01
IN_EPS = 1e-5
POOL = 2                 # MaxPool3d kernel/stride
POOL3 = POOL ** 3        # 8 spatial positions per pooling window
KVOL = 27                # 3*3*3 conv taps (C_in = 1)
KBAND = 32               # per-position contraction band, 27 taps padded to a sublane multiple
OC = 32                  # conv output channels
QG = 4                   # pooled positions packed per 128-lane group
LG = QG * OC             # = 128 lanes: fully real (no channel padding)
K2 = QG * KBAND          # = 128 packed im2col contraction width


def _leaky(x):
    return jnp.where(x > 0, x, LEAKY_SLOPE * x)


def _fused_kernel(pat_ref, wc_ref, bc_ref, w1_hbm, b1_ref, w2_ref, b2_ref, w3_ref, b3_ref,
                  out_ref, conv_sc, feat_sc, w1_vmem, w1_sem, *, n_seg, n_grp):
    # Kick off the fc1-weight DMA (the dominant HBM read, 288 KiB bf16) immediately; it
    # overlaps the conv + pool compute below and is waited on right before the fc1 matmul.
    w1_cp = pltpu.make_async_copy(w1_hbm, w1_vmem, w1_sem)
    w1_cp.start()

    # ---- Conv3d as ONE packed im2col matmul.  wc is (128,128) block-diagonal, so lane band
    #      q of each output row holds the 32 conv channels of pooled-position 4g+q at window
    #      offset o (rows ordered (g, s, o)).  All 128 output lanes are real data.
    conv_sc[...] = jnp.dot(pat_ref[...], wc_ref[...], preferred_element_type=jnp.float32)

    # ---- MaxPool3d(2): every pooling window is 8 consecutive sublane-aligned rows -> one
    #      vectorized sublane max.  Bias + LeakyReLU are monotone, so applying them after the
    #      max is exact and touches 8x fewer elements.
    rows = n_grp * n_seg
    pooled = jnp.max(conv_sc[...].reshape(rows, POOL3, LG), axis=1)       # (n_grp*S, 128)
    pooled = _leaky(pooled + bc_ref[...])                                 # f32 math (v5e VPU)

    # ---- Compact feature slab (S, n_grp*128) = (S, 2304), bf16 at the store (fc1 LHS dtype).
    #      18 dense, lane-aligned 128-wide stores (rows for group g are the contiguous
    #      3-row block [g*S, (g+1)*S)).
    for g in range(n_grp):
        feat_sc[:, g * LG:(g + 1) * LG] = (
            pooled[g * n_seg:(g + 1) * n_seg, :].astype(jnp.bfloat16))

    # ---- FC stack + InstanceNorm1d + Softmax + mean over segments (all in VMEM).
    w1_cp.wait()
    h = _leaky(jnp.dot(feat_sc[...], w1_vmem[...],
                       preferred_element_type=jnp.float32) + b1_ref[...])
    h = _leaky(jnp.dot(h, w2_ref[...], preferred_element_type=jnp.float32) + b2_ref[...])
    logits = jnp.dot(h, w3_ref[...], preferred_element_type=jnp.float32) + b3_ref[...]

    # InstanceNorm1d on each segment's (1, num_classes) vector: biased var, eps=1e-5, no affine.
    # (Matches torch's treatment of the unsqueezed (1, 8) input as (C=1, L=8).)
    mu = jnp.mean(logits, axis=-1, keepdims=True)
    var = jnp.mean((logits - mu) ** 2, axis=-1, keepdims=True)
    y = (logits - mu) * jax.lax.rsqrt(var + IN_EPS)

    # Dropout: identity at inference.
    # TODO(synk): training-mode dropout RNG/scaling is not modeled here.
    m = jnp.max(y, axis=-1, keepdims=True)
    e = jnp.exp(y - m)
    probs = e * pl.reciprocal(jnp.sum(e, axis=-1, keepdims=True), approx=True)
    out_ref[...] = jnp.mean(probs, axis=0, keepdims=True)                 # (1, num_classes)


def prepare_params(params):
    """One-time layout prep of the PyTorch-layout weights for the fused kernel."""
    conv_w, conv_b, fc1_w, fc1_b, fc2_w, fc2_b, fc3_w, fc3_b = params
    oc, c_in, k, _, _ = conv_w.shape
    assert c_in == 1 and k == 3 and oc == OC
    hid1, feat_dim = fc1_w.shape
    pp = feat_dim // OC                                           # pooled spatial positions

    # Conv weight block (KBAND, OC): taps ordered (kd,kh,kw), padded 27->32; then replicate
    # block-diagonally 4x so one matmul packs 4 pooled positions into the 128 output lanes.
    wblk = jnp.zeros((KBAND, OC), jnp.float32).at[:KVOL, :].set(conv_w.reshape(OC, KVOL).T)
    wc2 = jnp.kron(jnp.eye(QG, dtype=jnp.float32), wblk)         # (128, 128) block-diagonal
    bc2 = jnp.tile(conv_b.astype(jnp.float32), QG).reshape(1, LG)

    # fc1 weight: torch flatten order is channel-major (c*pp + p); the kernel's compact
    # feature order is position-major (p*OC + c).  Pre-permute + transpose once, bf16.
    w1 = fc1_w.reshape(hid1, OC, pp).transpose(2, 1, 0).reshape(pp * OC, hid1)

    return (wc2.astype(jnp.bfloat16), bc2,
            w1.astype(jnp.bfloat16), fc1_b.reshape(1, -1).astype(jnp.float32),
            fc2_w.T.astype(jnp.float32), fc2_b.reshape(1, -1).astype(jnp.float32),
            fc3_w.T.astype(jnp.float32), fc3_b.reshape(1, -1).astype(jnp.float32))


def segmented_3dcnn_forward(segments, prepared):
    wc2, bc2, w1, b1, w2, b2, w3, b3 = prepared
    _, S, C, D, H, W = segments.shape
    assert C == 1
    # Guard: PyTorch MaxPool3d floor mode would drop trailing elements otherwise.
    assert D % POOL == 0 and H % POOL == 0 and W % POOL == 0
    Dp, Hp, Wp = D // POOL, H // POOL, W // POOL
    PP = Dp * Hp * Wp
    assert PP % QG == 0
    NG = PP // QG
    feat_dim, hid1 = w1.shape
    num_classes = w3.shape[1]
    assert feat_dim == PP * OC

    # ---- im2col glue: 27 static shifted slices (no gather) + small static transposes.
    #      Rows ordered (g, s, o) with o = pooling-window offset (dd,hh,ww) innermost so every
    #      MaxPool3d(2) window is 8 consecutive rows; columns ordered (q, k) so lane band q
    #      carries the taps of pooled position 4g+q (matching the block-diagonal conv weight).
    x = segments[0, :, 0].astype(jnp.float32)                     # (S, D, H, W)
    xp = jnp.pad(x, ((0, 0), (1, 1), (1, 1), (1, 1)))
    taps = jnp.stack([xp[:, kd:kd + D, kh:kh + H, kw:kw + W]
                      for kd in range(3) for kh in range(3) for kw in range(3)],
                     axis=-1)                                     # (S, D, H, W, 27)
    t = taps.reshape(S, Dp, POOL, Hp, POOL, Wp, POOL, KVOL)
    t = t.transpose(1, 3, 5, 0, 2, 4, 6, 7)                       # (dp,hp,wp, s, dd,hh,ww, k)
    t = t.reshape(NG, QG, S, POOL3, KVOL)                         # (g, q, s, o, k)
    t = t.transpose(0, 2, 3, 1, 4)                                # (g, s, o, q, k)
    t = jnp.pad(t, ((0, 0), (0, 0), (0, 0), (0, 0), (0, KBAND - KVOL)))
    pat = t.reshape(NG * S * POOL3, K2).astype(jnp.bfloat16)      # (NG*S*8, 128)

    kernel = functools.partial(_fused_kernel, n_seg=S, n_grp=NG)
    vm = pl.BlockSpec(memory_space=pltpu.MemorySpace.VMEM)
    out = pl.pallas_call(
        kernel,
        out_shape=jax.ShapeDtypeStruct((1, num_classes), jnp.float32),
        in_specs=[vm, vm, vm,
                  pl.BlockSpec(memory_space=pl.ANY),   # fc1 weight stays in HBM; manual DMA
                  vm, vm, vm, vm, vm],
        out_specs=vm,
        scratch_shapes=[
            pltpu.VMEM((NG * S * POOL3, K2), jnp.float32),   # packed conv pre-activations
            pltpu.VMEM((S, feat_dim), jnp.bfloat16),         # compact pooled features (S,2304)
            pltpu.VMEM((feat_dim, hid1), jnp.bfloat16),      # fc1 weight landing buffer
            pltpu.SemaphoreType.DMA(()),                     # fc1 weight DMA completion
        ],
    )(pat, wc2, bc2, w1, b1, w2, b2, w3, b3)
    return out[0]                                               # (num_classes,)


if __name__ == "__main__":
    # conv_layers = [(1, 32, 3, 1, 1, 2)] -> flatten = 32*2*6*6 = 2304 (matches prev_layer_size)
    # fc_layers = [64, 32], num_classes = 8.
    S, C_in, D, H, W = 3, 1, 4, 12, 12
    OC_, num_classes, hid1, hid2 = 32, 8, 64, 32

    key = jax.random.PRNGKey(0)
    ks = jax.random.split(key, 9)
    conv_w = 0.10 * jax.random.normal(ks[0], (OC_, C_in, 3, 3, 3), jnp.float32)
    conv_b = 0.10 * jax.random.normal(ks[1], (OC_,), jnp.float32)
    fc1_w = 0.02 * jax.random.normal(ks[2], (hid1, 2304), jnp.float32)
    fc1_b = 0.02 * jax.random.normal(ks[3], (hid1,), jnp.float32)
    fc2_w = 0.05 * jax.random.normal(ks[4], (hid2, hid1), jnp.float32)
    fc2_b = 0.05 * jax.random.normal(ks[5], (hid2,), jnp.float32)
    fc3_w = 0.10 * jax.random.normal(ks[6], (num_classes, hid2), jnp.float32)
    fc3_b = 0.10 * jax.random.normal(ks[7], (num_classes,), jnp.float32)
    params = (conv_w, conv_b, fc1_w, fc1_b, fc2_w, fc2_b, fc3_w, fc3_b)

    prepared = prepare_params(params)   # one-time weight layout prep (outside jit)
    segments = jax.random.normal(ks[8], (1, S, C_in, D, H, W), jnp.float32)

    fwd = jax.jit(segmented_3dcnn_forward)
    result = jax.block_until_ready(fwd(segments, prepared))

    assert result.shape == (num_classes,)
    assert bool(jnp.all(jnp.isfinite(result)))
    # Mean of per-segment softmaxes sums to 1 (approx reciprocal -> loose tolerance).
    assert abs(float(jnp.sum(result)) - 1.0) < 5e-3
    print("KERNEL_OK")
</pallas_src>

<mosaic_0001>
module attributes {stable_mosaic.version = 11 : i64} {
  func.func @_fused_kernel(%arg0: memref<432x128xbf16, #tpu.memory_space<vmem>>, %arg1: memref<128x128xbf16, #tpu.memory_space<vmem>>, %arg2: memref<1x128xf32, #tpu.memory_space<vmem>>, %arg3: memref<2304x64xbf16, #tpu.memory_space<any>>, %arg4: memref<1x64xf32, #tpu.memory_space<vmem>>, %arg5: memref<64x32xf32, #tpu.memory_space<vmem>>, %arg6: memref<1x32xf32, #tpu.memory_space<vmem>>, %arg7: memref<32x8xf32, #tpu.memory_space<vmem>>, %arg8: memref<1x8xf32, #tpu.memory_space<vmem>>, %arg9: memref<1x8xf32, #tpu.memory_space<vmem>>, %arg10: memref<432x128xf32, #tpu.memory_space<vmem>>, %arg11: memref<3x2304xbf16, #tpu.memory_space<vmem>>, %arg12: memref<2304x64xbf16, #tpu.memory_space<vmem>>, %arg13: memref<!tpu.dma_semaphore, #tpu.memory_space<semaphore_mem>>) attributes {dimension_semantics = [], scalar_prefetch = 0 : i64, scratch_operands = 4 : i64, tpu.core_type = #tpu.core_type<tc>} {
    tpu.enqueue_dma source(%arg3 : memref<2304x64xbf16, #tpu.memory_space<any>>) target(%arg12 : memref<2304x64xbf16, #tpu.memory_space<vmem>>) target_semaphore(%arg13 : memref<!tpu.dma_semaphore, #tpu.memory_space<semaphore_mem>>)
    %c0 = arith.constant 0 : index
    %c0_0 = arith.constant 0 : index
    %0 = vector.load %arg0[%c0, %c0_0] : memref<432x128xbf16, #tpu.memory_space<vmem>>, vector<432x128xbf16>
    %c0_1 = arith.constant 0 : index
    %c0_2 = arith.constant 0 : index
    %1 = vector.load %arg1[%c0_1, %c0_2] : memref<128x128xbf16, #tpu.memory_space<vmem>>, vector<128x128xbf16>
    %cst = arith.constant dense<0.000000e+00> : vector<432x128xf32>
    %2 = tpu.matmul %0, %1, %cst {dimension_numbers = #tpu.dot_dimension_numbers<[1], [0], [0], [1], [0, 0, 1, 1], [], []>} : vector<432x128xbf16>, vector<128x128xbf16>, vector<432x128xf32> -> vector<432x128xf32>
    %c0_3 = arith.constant 0 : index
    %c0_4 = arith.constant 0 : index
    %3 = vector.load %arg10[%c0_3, %c0_4] : memref<432x128xf32, #tpu.memory_space<vmem>>, vector<432x128xf32>
    tpu.vector_store %arg10[%c0_3, %c0_4], %2 {strides = array<i32>} : memref<432x128xf32, #tpu.memory_space<vmem>>, vector<432x128xf32>,
    %c0_5 = arith.constant 0 : index
    %c0_6 = arith.constant 0 : index
    %4 = vector.load %arg10[%c0_5, %c0_6] : memref<432x128xf32, #tpu.memory_space<vmem>>, vector<432x128xf32>
    %5 = vector.shape_cast %4 : vector<432x128xf32> to vector<54x8x128xf32>
    %cst_7 = arith.constant dense<0xFF800000> : vector<54x128xf32>
    %6 = vector.multi_reduction <maximumf>, %5, %cst_7 [1] : vector<54x8x128xf32> to vector<54x128xf32>
    %c0_8 = arith.constant 0 : index
    %c0_9 = arith.constant 0 : index
    %7 = vector.load %arg2[%c0_8, %c0_9] : memref<1x128xf32, #tpu.memory_space<vmem>>, vector<1x128xf32>
    %8 = vector.broadcast %7 : vector<1x128xf32> to vector<54x128xf32>
    %9 = arith.addf %6, %8 : vector<54x128xf32>
    %cst_10 = arith.constant 0.000000e+00 : f32
    %10 = vector.broadcast %cst_10 : f32 to vector<54x128xf32>
    %11 = arith.cmpf ogt, %9, %10 : vector<54x128xf32>
    %cst_11 = arith.constant 0.00999999977 : f32
    %12 = vector.broadcast %cst_11 : f32 to vector<54x128xf32>
    %13 = arith.mulf %12, %9 : vector<54x128xf32>
    %14 = arith.select %11, %9, %13 : vector<54x128xi1>, vector<54x128xf32>
    %15 = vector.extract_strided_slice %14 {offsets = [0, 0], sizes = [3, 128], strides = [1, 1]} : vector<54x128xf32> to vector<3x128xf32>
    %16 = arith.truncf %15 : vector<3x128xf32> to vector<3x128xbf16>
    %c0_12 = arith.constant 0 : index
    %c0_13 = arith.constant 0 : index
    %17 = vector.load %arg11[%c0_12, %c0_13] : memref<3x2304xbf16, #tpu.memory_space<vmem>>, vector<3x128xbf16>
    tpu.vector_store %arg11[%c0_12, %c0_13], %16 {strides = array<i32>} : memref<3x2304xbf16, #tpu.memory_space<vmem>>, vector<3x128xbf16>,
    %18 = vector.extract_strided_slice %14 {offsets = [3, 0], sizes = [3, 128], strides = [1, 1]} : vector<54x128xf32> to vector<3x128xf32>
    %19 = arith.truncf %18 : vector<3x128xf32> to vector<3x128xbf16>
    %c0_14 = arith.constant 0 : index
    %c128 = arith.constant 128 : index
    %20 = vector.load %arg11[%c0_14, %c128] : memref<3x2304xbf16, #tpu.memory_space<vmem>>, vector<3x128xbf16>
    tpu.vector_store %arg11[%c0_14, %c128], %19 {strides = array<i32>} : memref<3x2304xbf16, #tpu.memory_space<vmem>>, vector<3x128xbf16>,
    %21 = vector.extract_strided_slice %14 {offsets = [6, 0], sizes = [3, 128], strides = [1, 1]} : vector<54x128xf32> to vector<3x128xf32>
    %22 = arith.truncf %21 : vector<3x128xf32> to vector<3x128xbf16>
    %c0_15 = arith.constant 0 : index
    %c256 = arith.constant 256 : index
    %23 = vector.load %arg11[%c0_15, %c256] : memref<3x2304xbf16, #tpu.memory_space<vmem>>, vector<3x128xbf16>
    tpu.vector_store %arg11[%c0_15, %c256], %22 {strides = array<i32>} : memref<3x2304xbf16, #tpu.memory_space<vmem>>, vector<3x128xbf16>,
    %24 = vector.extract_strided_slice %14 {offsets = [9, 0], sizes = [3, 128], strides = [1, 1]} : vector<54x128xf32> to vector<3x128xf32>
    %25 = arith.truncf %24 : vector<3x128xf32> to vector<3x128xbf16>
    %c0_16 = arith.constant 0 : index
    %c384 = arith.constant 384 : index
    %26 = vector.load %arg11[%c0_16, %c384] : memref<3x2304xbf16, #tpu.memory_space<vmem>>, vector<3x128xbf16>
    tpu.vector_store %arg11[%c0_16, %c384], %25 {strides = array<i32>} : memref<3x2304xbf16, #tpu.memory_space<vmem>>, vector<3x128xbf16>,
    %27 = vector.extract_strided_slice %14 {offsets = [12, 0], sizes = [3, 128], strides = [1, 1]} : vector<54x128xf32> to vector<3x128xf32>
    %28 = arith.truncf %27 : vector<3x128xf32> to vector<3x128xbf16>
    %c0_17 = arith.constant 0 : index
    %c512 = arith.constant 512 : index
    %29 = vector.load %arg11[%c0_17, %c512] : memref<3x2304xbf16, #tpu.memory_space<vmem>>, vector<3x128xbf16>
    tpu.vector_store %arg11[%c0_17, %c512], %28 {strides = array<i32>} : memref<3x2304xbf16, #tpu.memory_space<vmem>>, vector<3x128xbf16>,
    %30 = vector.extract_strided_slice %14 {offsets = [15, 0], sizes = [3, 128], strides = [1, 1]} : vector<54x128xf32> to vector<3x128xf32>
    %31 = arith.truncf %30 : vector<3x128xf32> to vector<3x128xbf16>
    %c0_18 = arith.constant 0 : index
    %c640 = arith.constant 640 : index
    %32 = vector.load %arg11[%c0_18, %c640] : memref<3x2304xbf16, #tpu.memory_space<vmem>>, vector<3x128xbf16>
    tpu.vector_store %arg11[%c0_18, %c640], %31 {strides = array<i32>} : memref<3x2304xbf16, #tpu.memory_space<vmem>>, vector<3x128xbf16>,
    %33 = vector.extract_strided_slice %14 {offsets = [18, 0], sizes = [3, 128], strides = [1, 1]} : vector<54x128xf32> to vector<3x128xf32>
    %34 = arith.truncf %33 : vector<3x128xf32> to vector<3x128xbf16>
    %c0_19 = arith.constant 0 : index
    %c768 = arith.constant 768 : index
    %35 = vector.load %arg11[%c0_19, %c768] : memref<3x2304xbf16, #tpu.memory_space<vmem>>, vector<3x128xbf16>
    tpu.vector_store %arg11[%c0_19, %c768], %34 {strides = array<i32>} : memref<3x2304xbf16, #tpu.memory_space<vmem>>, vector<3x128xbf16>,
    %36 = vector.extract_strided_slice %14 {offsets = [21, 0], sizes = [3, 128], strides = [1, 1]} : vector<54x128xf32> to vector<3x128xf32>
    %37 = arith.truncf %36 : vector<3x128xf32> to vector<3x128xbf16>
    %c0_20 = arith.constant 0 : index
    %c896 = arith.constant 896 : index
    %38 = vector.load %arg11[%c0_20, %c896] : memref<3x2304xbf16, #tpu.memory_space<vmem>>, vector<3x128xbf16>
    tpu.vector_store %arg11[%c0_20, %c896], %37 {strides = array<i32>} : memref<3x2304xbf16, #tpu.memory_space<vmem>>, vector<3x128xbf16>,
    %39 = vector.extract_strided_slice %14 {offsets = [24, 0], sizes = [3, 128], strides = [1, 1]} : vector<54x128xf32> to vector<3x128xf32>
    %40 = arith.truncf %39 : vector<3x128xf32> to vector<3x128xbf16>
    %c0_21 = arith.constant 0 : index
    %c1024 = arith.constant 1024 : index
    %41 = vector.load %arg11[%c0_21, %c1024] : memref<3x2304xbf16, #tpu.memory_space<vmem>>, vector<3x128xbf16>
    tpu.vector_store %arg11[%c0_21, %c1024], %40 {strides = array<i32>} : memref<3x2304xbf16, #tpu.memory_space<vmem>>, vector<3x128xbf16>,
    %42 = vector.extract_strided_slice %14 {offsets = [27, 0], sizes = [3, 128], strides = [1, 1]} : vector<54x128xf32> to vector<3x128xf32>
    %43 = arith.truncf %42 : vector<3x128xf32> to vector<3x128xbf16>
    %c0_22 = arith.constant 0 : index
    %c1152 = arith.constant 1152 : index
    %44 = vector.load %arg11[%c0_22, %c1152] : memref<3x2304xbf16, #tpu.memory_space<vmem>>, vector<3x128xbf16>
    tpu.vector_store %arg11[%c0_22, %c1152], %43 {strides = array<i32>} : memref<3x2304xbf16, #tpu.memory_space<vmem>>, vector<3x128xbf16>,
    %45 = vector.extract_strided_slice %14 {offsets = [30, 0], sizes = [3, 128], strides = [1, 1]} : vector<54x128xf32> to vector<3x128xf32>
    %46 = arith.truncf %45 : vector<3x128xf32> to vector<3x128xbf16>
    %c0_23 = arith.constant 0 : index
    %c1280 = arith.constant 1280 : index
    %47 = vector.load %arg11[%c0_23, %c1280] : memref<3x2304xbf16, #tpu.memory_space<vmem>>, vector<3x128xbf16>
    tpu.vector_store %arg11[%c0_23, %c1280], %46 {strides = array<i32>} : memref<3x2304xbf16, #tpu.memory_space<vmem>>, vector<3x128xbf16>,
    %48 = vector.extract_strided_slice %14 {offsets = [33, 0], sizes = [3, 128], strides = [1, 1]} : vector<54x128xf32> to vector<3x128xf32>
    %49 = arith.truncf %48 : vector<3x128xf32> to vector<3x128xbf16>
    %c0_24 = arith.constant 0 : index
    %c1408 = arith.constant 1408 : index
    %50 = vector.load %arg11[%c0_24, %c1408] : memref<3x2304xbf16, #tpu.memory_space<vmem>>, vector<3x128xbf16>
    tpu.vector_store %arg11[%c0_24, %c1408], %49 {strides = array<i32>} : memref<3x2304xbf16, #tpu.memory_space<vmem>>, vector<3x128xbf16>,
    %51 = vector.extract_strided_slice %14 {offsets = [36, 0], sizes = [3, 128], strides = [1, 1]} : vector<54x128xf32> to vector<3x128xf32>
    %52 = arith.truncf %51 : vector<3x128xf32> to vector<3x128xbf16>
    %c0_25 = arith.constant 0 : index
    %c1536 = arith.constant 1536 : index
    %53 = vector.load %arg11[%c0_25, %c1536] : memref<3x2304xbf16, #tpu.memory_space<vmem>>, vector<3x128xbf16>
    tpu.vector_store %arg11[%c0_25, %c1536], %52 {strides = array<i32>} : memref<3x2304xbf16, #tpu.memory_space<vmem>>, vector<3x128xbf16>,
    %54 = vector.extract_strided_slice %14 {offsets = [39, 0], sizes = [3, 128], strides = [1, 1]} : vector<54x128xf32> to vector<3x128xf32>
    %55 = arith.truncf %54 : vector<3x128xf32> to vector<3x128xbf16>
    %c0_26 = arith.constant 0 : index
    %c1664 = arith.constant 1664 : index
    %56 = vector.load %arg11[%c0_26, %c1664] : memref<3x2304xbf16, #tpu.memory_space<vmem>>, vector<3x128xbf16>
    tpu.vector_store %arg11[%c0_26, %c1664], %55 {strides = array<i32>} : memref<3x2304xbf16, #tpu.memory_space<vmem>>, vector<3x128xbf16>,
    %57 = vector.extract_strided_slice %14 {offsets = [42, 0], sizes = [3, 128], strides = [1, 1]} : vector<54x128xf32> to vector<3x128xf32>
    %58 = arith.truncf %57 : vector<3x128xf32> to vector<3x128xbf16>
    %c0_27 = arith.constant 0 : index
    %c1792 = arith.constant 1792 : index
    %59 = vector.load %arg11[%c0_27, %c1792] : memref<3x2304xbf16, #tpu.memory_space<vmem>>, vector<3x128xbf16>
    tpu.vector_store %arg11[%c0_27, %c1792], %58 {strides = array<i32>} : memref<3x2304xbf16, #tpu.memory_space<vmem>>, vector<3x128xbf16>,
    %60 = vector.extract_strided_slice %14 {offsets = [45, 0], sizes = [3, 128], strides = [1, 1]} : vector<54x128xf32> to vector<3x128xf32>
    %61 = arith.truncf %60 : vector<3x128xf32> to vector<3x128xbf16>
    %c0_28 = arith.constant 0 : index
    %c1920 = arith.constant 1920 : index
    %62 = vector.load %arg11[%c0_28, %c1920] : memref<3x2304xbf16, #tpu.memory_space<vmem>>, vector<3x128xbf16>
    tpu.vector_store %arg11[%c0_28, %c1920], %61 {strides = array<i32>} : memref<3x2304xbf16, #tpu.memory_space<vmem>>, vector<3x128xbf16>,
    %63 = vector.extract_strided_slice %14 {offsets = [48, 0], sizes = [3, 128], strides = [1, 1]} : vector<54x128xf32> to vector<3x128xf32>
    %64 = arith.truncf %63 : vector<3x128xf32> to vector<3x128xbf16>
    %c0_29 = arith.constant 0 : index
    %c2048 = arith.constant 2048 : index
    %65 = vector.load %arg11[%c0_29, %c2048] : memref<3x2304xbf16, #tpu.memory_space<vmem>>, vector<3x128xbf16>
    tpu.vector_store %arg11[%c0_29, %c2048], %64 {strides = array<i32>} : memref<3x2304xbf16, #tpu.memory_space<vmem>>, vector<3x128xbf16>,
    %66 = vector.extract_strided_slice %14 {offsets = [51, 0], sizes = [3, 128], strides = [1, 1]} : vector<54x128xf32> to vector<3x128xf32>
    %67 = arith.truncf %66 : vector<3x128xf32> to vector<3x128xbf16>
    %c0_30 = arith.constant 0 : index
    %c2176 = arith.constant 2176 : index
    %68 = vector.load %arg11[%c0_30, %c2176] : memref<3x2304xbf16, #tpu.memory_space<vmem>>, vector<3x128xbf16>
    tpu.vector_store %arg11[%c0_30, %c2176], %67 {strides = array<i32>} : memref<3x2304xbf16, #tpu.memory_space<vmem>>, vector<3x128xbf16>,
    tpu.wait_dma2 semaphore(%arg13 : memref<!tpu.dma_semaphore, #tpu.memory_space<semaphore_mem>>) src(%arg3 : memref<2304x64xbf16, #tpu.memory_space<any>>) dst(%arg12 : memref<2304x64xbf16, #tpu.memory_space<vmem>>)
    %c0_31 = arith.constant 0 : index
    %c0_32 = arith.constant 0 : index
    %69 = vector.load %arg11[%c0_31, %c0_32] : memref<3x2304xbf16, #tpu.memory_space<vmem>>, vector<3x2304xbf16>
    %c0_33 = arith.constant 0 : index
    %c0_34 = arith.constant 0 : index
    %70 = vector.load %arg12[%c0_33, %c0_34] : memref<2304x64xbf16, #tpu.memory_space<vmem>>, vector<2304x64xbf16>
    %cst_35 = arith.constant dense<0.000000e+00> : vector<3x64xf32>
    %71 = tpu.matmul %69, %70, %cst_35 {dimension_numbers = #tpu.dot_dimension_numbers<[1], [0], [0], [1], [0, 0, 1, 1], [], []>} : vector<3x2304xbf16>, vector<2304x64xbf16>, vector<3x64xf32> -> vector<3x64xf32>
    %c0_36 = arith.constant 0 : index
    %c0_37 = arith.constant 0 : index
    %72 = vector.load %arg4[%c0_36, %c0_37] : memref<1x64xf32, #tpu.memory_space<vmem>>, vector<1x64xf32>
    %73 = vector.broadcast %72 : vector<1x64xf32> to vector<3x64xf32>
    %74 = arith.addf %71, %73 : vector<3x64xf32>
    %cst_38 = arith.constant 0.000000e+00 : f32
    %75 = vector.broadcast %cst_38 : f32 to vector<3x64xf32>
    %76 = arith.cmpf ogt, %74, %75 : vector<3x64xf32>
    %cst_39 = arith.constant 0.00999999977 : f32
    %77 = vector.broadcast %cst_39 : f32 to vector<3x64xf32>
    %78 = arith.mulf %77, %74 : vector<3x64xf32>
    %79 = arith.select %76, %74, %78 : vector<3x64xi1>, vector<3x64xf32>
    %c0_40 = arith.constant 0 : index
    %c0_41 = arith.constant 0 : index
    %80 = vector.load %arg5[%c0_40, %c0_41] : memref<64x32xf32, #tpu.memory_space<vmem>>, vector<64x32xf32>
    %cst_42 = arith.constant dense<0.000000e+00> : vector<3x32xf32>
    %81 = tpu.matmul %79, %80, %cst_42 {dimension_numbers = #tpu.dot_dimension_numbers<[1], [0], [0], [1], [0, 0, 1, 1], [], []>} : vector<3x64xf32>, vector<64x32xf32>, vector<3x32xf32> -> vector<3x32xf32>
    %c0_43 = arith.constant 0 : index
    %c0_44 = arith.constant 0 : index
    %82 = vector.load %arg6[%c0_43, %c0_44] : memref<1x32xf32, #tpu.memory_space<vmem>>, vector<1x32xf32>
    %83 = vector.broadcast %82 : vector<1x32xf32> to vector<3x32xf32>
    %84 = arith.addf %81, %83 : vector<3x32xf32>
    %cst_45 = arith.constant 0.000000e+00 : f32
    %85 = vector.broadcast %cst_45 : f32 to vector<3x32xf32>
    %86 = arith.cmpf ogt, %84, %85 : vector<3x32xf32>
    %cst_46 = arith.constant 0.00999999977 : f32
    %87 = vector.broadcast %cst_46 : f32 to vector<3x32xf32>
    %88 = arith.mulf %87, %84 : vector<3x32xf32>
    %89 = arith.select %86, %84, %88 : vector<3x32xi1>, vector<3x32xf32>
    %c0_47 = arith.constant 0 : index
    %c0_48 = arith.constant 0 : index
    %90 = vector.load %arg7[%c0_47, %c0_48] : memref<32x8xf32, #tpu.memory_space<vmem>>, vector<32x8xf32>
    %cst_49 = arith.constant dense<0.000000e+00> : vector<3x8xf32>
    %91 = tpu.matmul %89, %90, %cst_49 {dimension_numbers = #tpu.dot_dimension_numbers<[1], [0], [0], [1], [0, 0, 1, 1], [], []>} : vector<3x32xf32>, vector<32x8xf32>, vector<3x8xf32> -> vector<3x8xf32>
    %c0_50 = arith.constant 0 : index
    %c0_51 = arith.constant 0 : index
    %92 = vector.load %arg8[%c0_50, %c0_51] : memref<1x8xf32, #tpu.memory_space<vmem>>, vector<1x8xf32>
    %93 = vector.broadcast %92 : vector<1x8xf32> to vector<3x8xf32>
    %94 = arith.addf %91, %93 : vector<3x8xf32>
    %cst_52 = arith.constant dense<0.000000e+00> : vector<3xf32>
    %95 = vector.multi_reduction <add>, %94, %cst_52 [1] : vector<3x8xf32> to vector<3xf32>
    %96 = vector.shape_cast %95 : vector<3xf32> to vector<3x1xf32>
    %cst_53 = arith.constant 8.000000e+00 : f32
    %97 = vector.broadcast %cst_53 : f32 to vector<3x1xf32>
    %98 = arith.divf %96, %97 : vector<3x1xf32>
    %99 = vector.broadcast %98 : vector<3x1xf32> to vector<3x8xf32>
    %100 = arith.subf %94, %99 : vector<3x8xf32>
    %101 = arith.mulf %100, %100 : vector<3x8xf32>
    %cst_54 = arith.constant dense<0.000000e+00> : vector<3xf32>
    %102 = vector.multi_reduction <add>, %101, %cst_54 [1] : vector<3x8xf32> to vector<3xf32>
    %103 = vector.shape_cast %102 : vector<3xf32> to vector<3x1xf32>
    %cst_55 = arith.constant 8.000000e+00 : f32
    %104 = vector.broadcast %cst_55 : f32 to vector<3x1xf32>
    %105 = arith.divf %103, %104 : vector<3x1xf32>
    %106 = vector.broadcast %98 : vector<3x1xf32> to vector<3x8xf32>
    %107 = arith.subf %94, %106 : vector<3x8xf32>
    %cst_56 = arith.constant 9.99999974E-6 : f32
    %108 = vector.broadcast %cst_56 : f32 to vector<3x1xf32>
    %109 = arith.addf %105, %108 : vector<3x1xf32>
    %110 = math.rsqrt %109 : vector<3x1xf32>
    %111 = vector.broadcast %110 : vector<3x1xf32> to vector<3x8xf32>
    %112 = arith.mulf %107, %111 : vector<3x8xf32>
    %cst_57 = arith.constant dense<0xFF800000> : vector<3xf32>
    %113 = vector.multi_reduction <maximumf>, %112, %cst_57 [1] : vector<3x8xf32> to vector<3xf32>
    %114 = vector.shape_cast %113 : vector<3xf32> to vector<3x1xf32>
    %115 = vector.broadcast %114 : vector<3x1xf32> to vector<3x8xf32>
    %116 = arith.subf %112, %115 : vector<3x8xf32>
    %117 = math.exp %116 : vector<3x8xf32>
    %cst_58 = arith.constant dense<0.000000e+00> : vector<3xf32>
    %118 = vector.multi_reduction <add>, %117, %cst_58 [1] : vector<3x8xf32> to vector<3xf32>
    %119 = vector.shape_cast %118 : vector<3xf32> to vector<3x1xf32>
    %120 = tpu.reciprocal %119 {approx = true} : vector<3x1xf32> -> vector<3x1xf32>
    %121 = vector.broadcast %120 : vector<3x1xf32> to vector<3x8xf32>
    %122 = arith.mulf %117, %121 : vector<3x8xf32>
    %cst_59 = arith.constant dense<0.000000e+00> : vector<8xf32>
    %123 = vector.multi_reduction <add>, %122, %cst_59 [0] : vector<3x8xf32> to vector<8xf32>
    %124 = vector.shape_cast %123 : vector<8xf32> to vector<1x8xf32>
    %cst_60 = arith.constant 3.000000e+00 : f32
    %125 = vector.broadcast %cst_60 : f32 to vector<1x8xf32>
    %126 = arith.divf %124, %125 : vector<1x8xf32>
    %c0_61 = arith.constant 0 : index
    %c0_62 = arith.constant 0 : index
    %127 = vector.load %arg9[%c0_61, %c0_62] : memref<1x8xf32, #tpu.memory_space<vmem>>, vector<1x8xf32>
    tpu.vector_store %arg9[%c0_61, %c0_62], %126 {strides = array<i32>} : memref<1x8xf32, #tpu.memory_space<vmem>>, vector<1x8xf32>,
    return
  }
}

</mosaic_0001>

<llo_original>
// kernel: segmented_3dcnn_forward.1
$region0: #{segmented_3dcnn_forward.1}
  #allocation0 [shape = 'u32[]', space=smem, size = 0x4, offset = 0x4, fixed_abs, tag = 'smem constant byte address 0x4 - core index']
  #allocation1 [shape = 'u32[144,128]{1,0:T(1,128)}', space=vmem, size = 0x12000, scoped, tag = 'internal scratch']
  #allocation2 [shape = 'f32[432,128]{1,0:T(8,128)}', space=vmem, size = 0x36000, scoped, tag = 'scratch operand']
  #allocation3 [shape = 'bf16[3,2304]{1,0:T(4,128)(2,1)}', space=vmem, size = 0x4800, scoped, tag = 'scratch operand']
  #allocation4 [shape = 'bf16[2304,64]{1,0:T(16,128)(2,1)}', space=vmem, size = 0x90000, scoped, tag = 'scratch operand']
  #allocation5 [shape = 's32[1]{0}', space=sflag, size = 0x4, scoped, tag = 'scratch operand']
  #allocation8 [shape = 's32[]', space=sflag, size = 0x4, offset = 0, fixed_abs, tag = 'sflag constant byte address 0x0 - dummy sync flag']
  %s0 = inlined_call_operand.vmem [shape: bf16[432,128], index: 0, kind: input, shape index: {}]
  %s1 = inlined_call_operand.vmem [shape: bf16[128,128], index: 1, kind: input, shape index: {}]
  %s2 = inlined_call_operand.vmem [shape: f32[1,128], index: 2, kind: input, shape index: {}]
  %s3 = inlined_call_operand.vmem [shape: bf16[2304,64], index: 3, kind: input, shape index: {}]
  %s4 = inlined_call_operand.vmem [shape: f32[1,64], index: 4, kind: input, shape index: {}]
  %s5 = inlined_call_operand.vmem [shape: f32[64,32], index: 5, kind: input, shape index: {}]
  %s6 = inlined_call_operand.vmem [shape: f32[1,32], index: 6, kind: input, shape index: {}]
  %s7 = inlined_call_operand.vmem [shape: f32[32,8], index: 7, kind: input, shape index: {}]
  %s8 = inlined_call_operand.vmem [shape: f32[1,8], index: 8, kind: input, shape index: {}]
  %s9 = inlined_call_operand.hbm [shape: f32[1,8], index: 9, kind: output, shape index: {}]
  %s10 = sld [smem:[#allocation0]]
  $region76: #{segmented_3dcnn_forward.1} parent=0
    _
  %s12 = ssub.s32 1, %s10
  %s13 = scalar_select 0, %s12, %s10
  $region1: #{segmented_3dcnn_forward.1} parent=0
    #allocation6 [shape = 'u8[512]{0}', space=vmem, size = 0x400, scoped, tag = 'output window, operand 0, single buffered']
    #allocation7 [shape = 's32[1]{0}', space=sflag, size = 0x4, scoped, tag = 'scoped memory for segmented_3dcnn_forward.1']
    %14 = vsyncpa [#allocation7], 0
    // Predicated region
    $region2: #{segmented_3dcnn_forward.1} parent=1 // pred_check
      _
    $region3: #{segmented_3dcnn_forward.1} parent=1 // pred_check_branch
      %16 = sbr.rel (0) target = $region5
    $region4: #{segmented_3dcnn_forward.1} parent=1 // pred_region
      _
    $region5: #{segmented_3dcnn_forward.1} parent=1 // pred_fallthru
      _
    // Predicated region
    $region6: #{segmented_3dcnn_forward.1} parent=1 // pred_check
      _
    $region7: #{segmented_3dcnn_forward.1} parent=1 // pred_check_branch
      %18 = sbr.rel (0) target = $region9
    $region8: #{segmented_3dcnn_forward.1} parent=1 // pred_region
      _
    $region9: #{segmented_3dcnn_forward.1} parent=1 // pred_fallthru
      _
    // Predicated region
    $region10: #{segmented_3dcnn_forward.1} parent=1 // pred_check
      _
    $region11: #{segmented_3dcnn_forward.1} parent=1 // pred_check_branch
      %20 = sbr.rel (0) target = $region13
    $region12: #{segmented_3dcnn_forward.1} parent=1 // pred_region
      _
    $region13: #{segmented_3dcnn_forward.1} parent=1 // pred_fallthru
      _
    // Predicated region
    $region14: #{segmented_3dcnn_forward.1} parent=1 // pred_check
      _
    $region15: #{segmented_3dcnn_forward.1} parent=1 // pred_check_branch
      %22 = sbr.rel (0) target = $region17
    $region16: #{segmented_3dcnn_forward.1} parent=1 // pred_region
      _
    $region17: #{segmented_3dcnn_forward.1} parent=1 // pred_fallthru
      _
    // Predicated region
    $region18: #{segmented_3dcnn_forward.1} parent=1 // pred_check
      _
    $region19: #{segmented_3dcnn_forward.1} parent=1 // pred_check_branch
      %24 = sbr.rel (0) target = $region21
    $region20: #{segmented_3dcnn_forward.1} parent=1 // pred_region
      _
    $region21: #{segmented_3dcnn_forward.1} parent=1 // pred_fallthru
      _
    // Predicated region
    $region22: #{segmented_3dcnn_forward.1} parent=1 // pred_check
      _
    $region23: #{segmented_3dcnn_forward.1} parent=1 // pred_check_branch
      %26 = sbr.rel (0) target = $region25
    $region24: #{segmented_3dcnn_forward.1} parent=1 // pred_region
      _
    $region25: #{segmented_3dcnn_forward.1} parent=1 // pred_fallthru
      _
    // Predicated region
    $region26: #{segmented_3dcnn_forward.1} parent=1 // pred_check
      _
    $region27: #{segmented_3dcnn_forward.1} parent=1 // pred_check_branch
      %28 = sbr.rel (0) target = $region29
    $region28: #{segmented_3dcnn_forward.1} parent=1 // pred_region
      _
    $region29: #{segmented_3dcnn_forward.1} parent=1 // pred_fallthru
      _
    // Predicated region
    $region30: #{segmented_3dcnn_forward.1} parent=1 // pred_check
      _
    $region31: #{segmented_3dcnn_forward.1} parent=1 // pred_check_branch
      %30 = sbr.rel (0) target = $region33
    $region32: #{segmented_3dcnn_forward.1} parent=1 // pred_region
      _
    $region33: #{segmented_3dcnn_forward.1} parent=1 // pred_fallthru
      _
    %p33 = scmp.lt.u32.totalorder 1152, 8
    %p34 = pneg %p33
    // Predicated region
    $region34: #{segmented_3dcnn_forward.1} parent=1 // pred_check
      _
    $region35: #{segmented_3dcnn_forward.1} parent=1 // pred_check_branch
      %36 = sbr.rel (%p33) target = $region37
    $region36: #{segmented_3dcnn_forward.1} parent=1 // pred_region
      %s51 = sand.u32 1152, 7
      %p52 = scmp.eq.s32.totalorder %s51, 0
      // Predicated region
      $region49: #{segmented_3dcnn_forward.1} parent=36 // pred_check
        %p53 = pneg %p52
      $region50: #{segmented_3dcnn_forward.1} parent=36 // pred_check_branch
        %55 = sbr.rel (%p53) target = $region52
      $region51: #{segmented_3dcnn_forward.1} parent=36 // pred_region
        loop: start=0, step=1, limit=1
        $region53: #{segmented_3dcnn_forward.1} parent=51 // loop_pre_header
          _
        $region54: #{segmented_3dcnn_forward.1} parent=51 // loop_header
          %s57 = sphi 0, %s61
          %p58 = scmp.ge.s32.totalorder %s57, 1
          %s62 = sphi %s3, %s3
          %s63 = sphi [#allocation4], [#allocation4]
        $region55: #{segmented_3dcnn_forward.1} parent=51 // loop_header_branch
          %60 = sbr.rel (%p58) target = $region59
        $region56: #{segmented_3dcnn_forward.1} parent=51 // loop_body
          %v64 = vld [vmem:[%s62] sm:$0xff]
          %65 = vst [vmem:[%s63] sm:$0xff] %v64
          %v66 = vld [vmem:[%s62 + $0x8] sm:$0xff]
          %67 = vst [vmem:[%s63 + $0x8] sm:$0xff] %v66
          %v68 = vld [vmem:[%s62 + $0x10] sm:$0xff]
          %69 = vst [vmem:[%s63 + $0x10] sm:$0xff] %v68
          %v70 = vld [vmem:[%s62 + $0x18] sm:$0xff]
          %71 = vst [vmem:[%s63 + $0x18] sm:$0xff] %v70
          %v72 = vld [vmem:[%s62 + $0x20] sm:$0xff]
          %73 = vst [vmem:[%s63 + $0x20] sm:$0xff] %v72
          %v74 = vld [vmem:[%s62 + $0x28] sm:$0xff]
          %75 = vst [vmem:[%s63 + $0x28] sm:$0xff] %v74
          %v76 = vld [vmem:[%s62 + $0x30] sm:$0xff]
          %77 = vst [vmem:[%s63 + $0x30] sm:$0xff] %v76
          %v78 = vld [vmem:[%s62 + $0x38] sm:$0xff]
          %79 = vst [vmem:[%s63 + $0x38] sm:$0xff] %v78
          %v80 = vld [vmem:[%s62 + $0x40] sm:$0xff]
          %81 = vst [vmem:[%s63 + $0x40] sm:$0xff] %v80
          %v82 = vld [vmem:[%s62 + $0x48] sm:$0xff]
          %83 = vst [vmem:[%s63 + $0x48] sm:$0xff] %v82
          %v84 = vld [vmem:[%s62 + $0x50] sm:$0xff]
          %85 = vst [vmem:[%s63 + $0x50] sm:$0xff] %v84
          %v86 = vld [vmem:[%s62 + $0x58] sm:$0xff]
          %87 = vst [vmem:[%s63 + $0x58] sm:$0xff] %v86
          %v88 = vld [vmem:[%s62 + $0x60] sm:$0xff]
          %89 = vst [vmem:[%s63 + $0x60] sm:$0xff] %v88
          %v90 = vld [vmem:[%s62 + $0x68] sm:$0xff]
          %91 = vst [vmem:[%s63 + $0x68] sm:$0xff] %v90
          %v92 = vld [vmem:[%s62 + $0x70] sm:$0xff]
          %93 = vst [vmem:[%s63 + $0x70] sm:$0xff] %v92
          %v94 = vld [vmem:[%s62 + $0x78] sm:$0xff]
          %95 = vst [vmem:[%s63 + $0x78] sm:$0xff] %v94
          %v96 = vld [vmem:[%s62 + $0x80] sm:$0xff]
          %97 = vst [vmem:[%s63 + $0x80] sm:$0xff] %v96
          %v98 = vld [vmem:[%s62 + $0x88] sm:$0xff]
          %99 = vst [vmem:[%s63 + $0x88] sm:$0xff] %v98
          %v100 = vld [vmem:[%s62 + $0x90] sm:$0xff]
          %101 = vst [vmem:[%s63 + $0x90] sm:$0xff] %v100
          %v102 = vld [vmem:[%s62 + $0x98] sm:$0xff]
          %103 = vst [vmem:[%s63 + $0x98] sm:$0xff] %v102
          %v104 = vld [vmem:[%s62 + $0xa0] sm:$0xff]
          %105 = vst [vmem:[%s63 + $0xa0] sm:$0xff] %v104
          %v106 = vld [vmem:[%s62 + $0xa8] sm:$0xff]
          %107 = vst [vmem:[%s63 + $0xa8] sm:$0xff] %v106
          %v108 = vld [vmem:[%s62 + $0xb0] sm:$0xff]
          %109 = vst [vmem:[%s63 + $0xb0] sm:$0xff] %v108
          %v110 = vld [vmem:[%s62 + $0xb8] sm:$0xff]
          %111 = vst [vmem:[%s63 + $0xb8] sm:$0xff] %v110
          %v112 = vld [vmem:[%s62 + $0xc0] sm:$0xff]
          %113 = vst [vmem:[%s63 + $0xc0] sm:$0xff] %v112
          %v114 = vld [vmem:[%s62 + $0xc8] sm:$0xff]
          %115 = vst [vmem:[%s63 + $0xc8] sm:$0xff] %v114
          %v116 = vld [vmem:[%s62 + $0xd0] sm:$0xff]
          %117 = vst [vmem:[%s63 + $0xd0] sm:$0xff] %v116
          %v118 = vld [vmem:[%s62 + $0xd8] sm:$0xff]
          %119 = vst [vmem:[%s63 + $0xd8] sm:$0xff] %v118
          %v120 = vld [vmem:[%s62 + $0xe0] sm:$0xff]
          %121 = vst [vmem:[%s63 + $0xe0] sm:$0xff] %v120
          %v122 = vld [vmem:[%s62 + $0xe8] sm:$0xff]
          %123 = vst [vmem:[%s63 + $0xe8] sm:$0xff] %v122
          %v124 = vld [vmem:[%s62 + $0xf0] sm:$0xff]
          %125 = vst [vmem:[%s63 + $0xf0] sm:$0xff] %v124
          %v126 = vld [vmem:[%s62 + $0xf8] sm:$0xff]
          %127 = vst [vmem:[%s63 + $0xf8] sm:$0xff] %v126
          %v128 = vld [vmem:[%s62 + $0x100] sm:$0xff]
          %129 = vst [vmem:[%s63 + $0x100] sm:$0xff] %v128
          %v130 = vld [vmem:[%s62 + $0x108] sm:$0xff]
          %131 = vst [vmem:[%s63 + $0x108] sm:$0xff] %v130
          %v132 = vld [vmem:[%s62 + $0x110] sm:$0xff]
          %133 = vst [vmem:[%s63 + $0x110] sm:$0xff] %v132
          %v134 = vld [vmem:[%s62 + $0x118] sm:$0xff]
          %135 = vst [vmem:[%s63 + $0x118] sm:$0xff] %v134
          %v136 = vld [vmem:[%s62 + $0x120] sm:$0xff]
          %137 = vst [vmem:[%s63 + $0x120] sm:$0xff] %v136
          %v138 = vld [vmem:[%s62 + $0x128] sm:$0xff]
          %139 = vst [vmem:[%s63 + $0x128] sm:$0xff] %v138
          %v140 = vld [vmem:[%s62 + $0x130] sm:$0xff]
          %141 = vst [vmem:[%s63 + $0x130] sm:$0xff] %v140
          %v142 = vld [vmem:[%s62 + $0x138] sm:$0xff]
          %143 = vst [vmem:[%s63 + $0x138] sm:$0xff] %v142
          %v144 = vld [vmem:[%s62 + $0x140] sm:$0xff]
          %145 = vst [vmem:[%s63 + $0x140] sm:$0xff] %v144
          %v146 = vld [vmem:[%s62 + $0x148] sm:$0xff]
          %147 = vst [vmem:[%s63 + $0x148] sm:$0xff] %v146
          %v148 = vld [vmem:[%s62 + $0x150] sm:$0xff]
          %149 = vst [vmem:[%s63 + $0x150] sm:$0xff] %v148
          %v150 = vld [vmem:[%s62 + $0x158] sm:$0xff]
          %151 = vst [vmem:[%s63 + $0x158] sm:$0xff] %v150
          %v152 = vld [vmem:[%s62 + $0x160] sm:$0xff]
          %153 = vst [vmem:[%s63 + $0x160] sm:$0xff] %v152
          %v154 = vld [vmem:[%s62 + $0x168] sm:$0xff]
          %155 = vst [vmem:[%s63 + $0x168] sm:$0xff] %v154
          %v156 = vld [vmem:[%s62 + $0x170] sm:$0xff]
          %157 = vst [vmem:[%s63 + $0x170] sm:$0xff] %v156
          %v158 = vld [vmem:[%s62 + $0x178] sm:$0xff]
          %159 = vst [vmem:[%s63 + $0x178] sm:$0xff] %v158
          %v160 = vld [vmem:[%s62 + $0x180] sm:$0xff]
          %161 = vst [vmem:[%s63 + $0x180] sm:$0xff] %v160
          %v162 = vld [vmem:[%s62 + $0x188] sm:$0xff]
          %163 = vst [vmem:[%s63 + $0x188] sm:$0xff] %v162
          %v164 = vld [vmem:[%s62 + $0x190] sm:$0xff]
          %165 = vst [vmem:[%s63 + $0x190] sm:$0xff] %v164
          %v166 = vld [vmem:[%s62 + $0x198] sm:$0xff]
          %167 = vst [vmem:[%s63 + $0x198] sm:$0xff] %v166
          %v168 = vld [vmem:[%s62 + $0x1a0] sm:$0xff]
          %169 = vst [vmem:[%s63 + $0x1a0] sm:$0xff] %v168
          %v170 = vld [vmem:[%s62 + $0x1a8] sm:$0xff]
          %171 = vst [vmem:[%s63 + $0x1a8] sm:$0xff] %v170
          %v172 = vld [vmem:[%s62 + $0x1b0] sm:$0xff]
          %173 = vst [vmem:[%s63 + $0x1b0] sm:$0xff] %v172
          %v174 = vld [vmem:[%s62 + $0x1b8] sm:$0xff]
          %175 = vst [vmem:[%s63 + $0x1b8] sm:$0xff] %v174
          %v176 = vld [vmem:[%s62 + $0x1c0] sm:$0xff]
          %177 = vst [vmem:[%s63 + $0x1c0] sm:$0xff] %v176
          %v178 = vld [vmem:[%s62 + $0x1c8] sm:$0xff]
          %179 = vst [vmem:[%s63 + $0x1c8] sm:$0xff] %v178
          %v180 = vld [vmem:[%s62 + $0x1d0] sm:$0xff]
          %181 = vst [vmem:[%s63 + $0x1d0] sm:$0xff] %v180
          %v182 = vld [vmem:[%s62 + $0x1d8] sm:$0xff]
          %183 = vst [vmem:[%s63 + $0x1d8] sm:$0xff] %v182
          %v184 = vld [vmem:[%s62 + $0x1e0] sm:$0xff]
          %185 = vst [vmem:[%s63 + $0x1e0] sm:$0xff] %v184
          %v186 = vld [vmem:[%s62 + $0x1e8] sm:$0xff]
          %187 = vst [vmem:[%s63 + $0x1e8] sm:$0xff] %v186
          %v188 = vld [vmem:[%s62 + $0x1f0] sm:$0xff]
          %189 = vst [vmem:[%s63 + $0x1f0] sm:$0xff] %v188
          %v190 = vld [vmem:[%s62 + $0x1f8] sm:$0xff]
          %191 = vst [vmem:[%s63 + $0x1f8] sm:$0xff] %v190
          %v192 = vld [vmem:[%s62 + $0x200] sm:$0xff]
          %193 = vst [vmem:[%s63 + $0x200] sm:$0xff] %v192
          %v194 = vld [vmem:[%s62 + $0x208] sm:$0xff]
          %195 = vst [vmem:[%s63 + $0x208] sm:$0xff] %v194
          %v196 = vld [vmem:[%s62 + $0x210] sm:$0xff]
          %197 = vst [vmem:[%s63 + $0x210] sm:$0xff] %v196
          %v198 = vld [vmem:[%s62 + $0x218] sm:$0xff]
          %199 = vst [vmem:[%s63 + $0x218] sm:$0xff] %v198
          %v200 = vld [vmem:[%s62 + $0x220] sm:$0xff]
          %201 = vst [vmem:[%s63 + $0x220] sm:$0xff] %v200
          %v202 = vld [vmem:[%s62 + $0x228] sm:$0xff]
          %203 = vst [vmem:[%s63 + $0x228] sm:$0xff] %v202
          %v204 = vld [vmem:[%s62 + $0x230] sm:$0xff]
          %205 = vst [vmem:[%s63 + $0x230] sm:$0xff] %v204
          %v206 = vld [vmem:[%s62 + $0x238] sm:$0xff]
          %207 = vst [vmem:[%s63 + $0x238] sm:$0xff] %v206
          %v208 = vld [vmem:[%s62 + $0x240] sm:$0xff]
          %209 = vst [vmem:[%s63 + $0x240] sm:$0xff] %v208
          %v210 = vld [vmem:[%s62 + $0x248] sm:$0xff]
          %211 = vst [vmem:[%s63 + $0x248] sm:$0xff] %v210
          %v212 = vld [vmem:[%s62 + $0x250] sm:$0xff]
          %213 = vst [vmem:[%s63 + $0x250] sm:$0xff] %v212
          %v214 = vld [vmem:[%s62 + $0x258] sm:$0xff]
          %215 = vst [vmem:[%s63 + $0x258] sm:$0xff] %v214
          %v216 = vld [vmem:[%s62 + $0x260] sm:$0xff]
          %217 = vst [vmem:[%s63 + $0x260] sm:$0xff] %v216
          %v218 = vld [vmem:[%s62 + $0x268] sm:$0xff]
          %219 = vst [vmem:[%s63 + $0x268] sm:$0xff] %v218
          %v220 = vld [vmem:[%s62 + $0x270] sm:$0xff]
          %221 = vst [vmem:[%s63 + $0x270] sm:$0xff] %v220
          %v222 = vld [vmem:[%s62 + $0x278] sm:$0xff]
          %223 = vst [vmem:[%s63 + $0x278] sm:$0xff] %v222
          %v224 = vld [vmem:[%s62 + $0x280] sm:$0xff]
          %225 = vst [vmem:[%s63 + $0x280] sm:$0xff] %v224
          %v226 = vld [vmem:[%s62 + $0x288] sm:$0xff]
          %227 = vst [vmem:[%s63 + $0x288] sm:$0xff] %v226
          %v228 = vld [vmem:[%s62 + $0x290] sm:$0xff]
          %229 = vst [vmem:[%s63 + $0x290] sm:$0xff] %v228
          %v230 = vld [vmem:[%s62 + $0x298] sm:$0xff]
          %231 = vst [vmem:[%s63 + $0x298] sm:$0xff] %v230
          %v232 = vld [vmem:[%s62 + $0x2a0] sm:$0xff]
          %233 = vst [vmem:[%s63 + $0x2a0] sm:$0xff] %v232
          %v234 = vld [vmem:[%s62 + $0x2a8] sm:$0xff]
          %235 = vst [vmem:[%s63 + $0x2a8] sm:$0xff] %v234
          %v236 = vld [vmem:[%s62 + $0x2b0] sm:$0xff]
          %237 = vst [vmem:[%s63 + $0x2b0] sm:$0xff] %v236
          %v238 = vld [vmem:[%s62 + $0x2b8] sm:$0xff]
          %239 = vst [vmem:[%s63 + $0x2b8] sm:$0xff] %v238
          %v240 = vld [vmem:[%s62 + $0x2c0] sm:$0xff]
          %241 = vst [vmem:[%s63 + $0x2c0] sm:$0xff] %v240
          %v242 = vld [vmem:[%s62 + $0x2c8] sm:$0xff]
          %243 = vst [vmem:[%s63 + $0x2c8] sm:$0xff] %v242
          %v244 = vld [vmem:[%s62 + $0x2d0] sm:$0xff]
          %245 = vst [vmem:[%s63 + $0x2d0] sm:$0xff] %v244
          %v246 = vld [vmem:[%s62 + $0x2d8] sm:$0xff]
          %247 = vst [vmem:[%s63 + $0x2d8] sm:$0xff] %v246
          %v248 = vld [vmem:[%s62 + $0x2e0] sm:$0xff]
          %249 = vst [vmem:[%s63 + $0x2e0] sm:$0xff] %v248
          %v250 = vld [vmem:[%s62 + $0x2e8] sm:$0xff]
          %251 = vst [vmem:[%s63 + $0x2e8] sm:$0xff] %v250
          %v252 = vld [vmem:[%s62 + $0x2f0] sm:$0xff]
          %253 = vst [vmem:[%s63 + $0x2f0] sm:$0xff] %v252
          %v254 = vld [vmem:[%s62 + $0x2f8] sm:$0xff]
          %255 = vst [vmem:[%s63 + $0x2f8] sm:$0xff] %v254
          %v256 = vld [vmem:[%s62 + $0x300] sm:$0xff]
          %257 = vst [vmem:[%s63 + $0x300] sm:$0xff] %v256
          %v258 = vld [vmem:[%s62 + $0x308] sm:$0xff]
          %259 = vst [vmem:[%s63 + $0x308] sm:$0xff] %v258
          %v260 = vld [vmem:[%s62 + $0x310] sm:$0xff]
          %261 = vst [vmem:[%s63 + $0x310] sm:$0xff] %v260
          %v262 = vld [vmem:[%s62 + $0x318] sm:$0xff]
          %263 = vst [vmem:[%s63 + $0x318] sm:$0xff] %v262
          %v264 = vld [vmem:[%s62 + $0x320] sm:$0xff]
          %265 = vst [vmem:[%s63 + $0x320] sm:$0xff] %v264
          %v266 = vld [vmem:[%s62 + $0x328] sm:$0xff]
          %267 = vst [vmem:[%s63 + $0x328] sm:$0xff] %v266
          %v268 = vld [vmem:[%s62 + $0x330] sm:$0xff]
          %269 = vst [vmem:[%s63 + $0x330] sm:$0xff] %v268
          %v270 = vld [vmem:[%s62 + $0x338] sm:$0xff]
          %271 = vst [vmem:[%s63 + $0x338] sm:$0xff] %v270
          %v272 = vld [vmem:[%s62 + $0x340] sm:$0xff]
          %273 = vst [vmem:[%s63 + $0x340] sm:$0xff] %v272
          %v274 = vld [vmem:[%s62 + $0x348] sm:$0xff]
          %275 = vst [vmem:[%s63 + $0x348] sm:$0xff] %v274
          %v276 = vld [vmem:[%s62 + $0x350] sm:$0xff]
          %277 = vst [vmem:[%s63 + $0x350] sm:$0xff] %v276
          %v278 = vld [vmem:[%s62 + $0x358] sm:$0xff]
          %279 = vst [vmem:[%s63 + $0x358] sm:$0xff] %v278
          %v280 = vld [vmem:[%s62 + $0x360] sm:$0xff]
          %281 = vst [vmem:[%s63 + $0x360] sm:$0xff] %v280
          %v282 = vld [vmem:[%s62 + $0x368] sm:$0xff]
          %283 = vst [vmem:[%s63 + $0x368] sm:$0xff] %v282
          %v284 = vld [vmem:[%s62 + $0x370] sm:$0xff]
          %285 = vst [vmem:[%s63 + $0x370] sm:$0xff] %v284
          %v286 = vld [vmem:[%s62 + $0x378] sm:$0xff]
          %287 = vst [vmem:[%s63 + $0x378] sm:$0xff] %v286
          %v288 = vld [vmem:[%s62 + $0x380] sm:$0xff]
          %289 = vst [vmem:[%s63 + $0x380] sm:$0xff] %v288
          %v290 = vld [vmem:[%s62 + $0x388] sm:$0xff]
          %291 = vst [vmem:[%s63 + $0x388] sm:$0xff] %v290
          %v292 = vld [vmem:[%s62 + $0x390] sm:$0xff]
          %293 = vst [vmem:[%s63 + $0x390] sm:$0xff] %v292
          %v294 = vld [vmem:[%s62 + $0x398] sm:$0xff]
          %295 = vst [vmem:[%s63 + $0x398] sm:$0xff] %v294
          %v296 = vld [vmem:[%s62 + $0x3a0] sm:$0xff]
          %297 = vst [vmem:[%s63 + $0x3a0] sm:$0xff] %v296
          %v298 = vld [vmem:[%s62 + $0x3a8] sm:$0xff]
          %299 = vst [vmem:[%s63 + $0x3a8] sm:$0xff] %v298
          %v300 = vld [vmem:[%s62 + $0x3b0] sm:$0xff]
          %301 = vst [vmem:[%s63 + $0x3b0] sm:$0xff] %v300
          %v302 = vld [vmem:[%s62 + $0x3b8] sm:$0xff]
          %303 = vst [vmem:[%s63 + $0x3b8] sm:$0xff] %v302
          %v304 = vld [vmem:[%s62 + $0x3c0] sm:$0xff]
          %305 = vst [vmem:[%s63 + $0x3c0] sm:$0xff] %v304
          %v306 = vld [vmem:[%s62 + $0x3c8] sm:$0xff]
          %307 = vst [vmem:[%s63 + $0x3c8] sm:$0xff] %v306
          %v308 = vld [vmem:[%s62 + $0x3d0] sm:$0xff]
          %309 = vst [vmem:[%s63 + $0x3d0] sm:$0xff] %v308
          %v310 = vld [vmem:[%s62 + $0x3d8] sm:$0xff]
          %311 = vst [vmem:[%s63 + $0x3d8] sm:$0xff] %v310
          %v312 = vld [vmem:[%s62 + $0x3e0] sm:$0xff]
          %313 = vst [vmem:[%s63 + $0x3e0] sm:$0xff] %v312
          %v314 = vld [vmem:[%s62 + $0x3e8] sm:$0xff]
          %315 = vst [vmem:[%s63 + $0x3e8] sm:$0xff] %v314
          %v316 = vld [vmem:[%s62 + $0x3f0] sm:$0xff]
          %317 = vst [vmem:[%s63 + $0x3f0] sm:$0xff] %v316
          %v318 = vld [vmem:[%s62 + $0x3f8] sm:$0xff]
          %319 = vst [vmem:[%s63 + $0x3f8] sm:$0xff] %v318
          %v320 = vld [vmem:[%s62 + $0x400] sm:$0xff]
          %321 = vst [vmem:[%s63 + $0x400] sm:$0xff] %v320
          %v322 = vld [vmem:[%s62 + $0x408] sm:$0xff]
          %323 = vst [vmem:[%s63 + $0x408] sm:$0xff] %v322
          %v324 = vld [vmem:[%s62 + $0x410] sm:$0xff]
          %325 = vst [vmem:[%s63 + $0x410] sm:$0xff] %v324
          %v326 = vld [vmem:[%s62 + $0x418] sm:$0xff]
          %327 = vst [vmem:[%s63 + $0x418] sm:$0xff] %v326
          %v328 = vld [vmem:[%s62 + $0x420] sm:$0xff]
          %329 = vst [vmem:[%s63 + $0x420] sm:$0xff] %v328
          %v330 = vld [vmem:[%s62 + $0x428] sm:$0xff]
          %331 = vst [vmem:[%s63 + $0x428] sm:$0xff] %v330
          %v332 = vld [vmem:[%s62 + $0x430] sm:$0xff]
          %333 = vst [vmem:[%s63 + $0x430] sm:$0xff] %v332
          %v334 = vld [vmem:[%s62 + $0x438] sm:$0xff]
          %335 = vst [vmem:[%s63 + $0x438] sm:$0xff] %v334
          %v336 = vld [vmem:[%s62 + $0x440] sm:$0xff]
          %337 = vst [vmem:[%s63 + $0x440] sm:$0xff] %v336
          %v338 = vld [vmem:[%s62 + $0x448] sm:$0xff]
          %339 = vst [vmem:[%s63 + $0x448] sm:$0xff] %v338
          %v340 = vld [vmem:[%s62 + $0x450] sm:$0xff]
          %341 = vst [vmem:[%s63 + $0x450] sm:$0xff] %v340
          %v342 = vld [vmem:[%s62 + $0x458] sm:$0xff]
          %343 = vst [vmem:[%s63 + $0x458] sm:$0xff] %v342
          %v344 = vld [vmem:[%s62 + $0x460] sm:$0xff]
          %345 = vst [vmem:[%s63 + $0x460] sm:$0xff] %v344
          %v346 = vld [vmem:[%s62 + $0x468] sm:$0xff]
          %347 = vst [vmem:[%s63 + $0x468] sm:$0xff] %v346
          %v348 = vld [vmem:[%s62 + $0x470] sm:$0xff]
          %349 = vst [vmem:[%s63 + $0x470] sm:$0xff] %v348
          %v350 = vld [vmem:[%s62 + $0x478] sm:$0xff]
          %351 = vst [vmem:[%s63 + $0x478] sm:$0xff] %v350
        $region57: #{segmented_3dcnn_forward.1} parent=51 // loop_footer
          %s61 = sadd.s32 1, %s57
        $region58: #{segmented_3dcnn_forward.1} parent=51 // loop_footer_branch
          %56 = sbr.rel target = $region54
        $region59: #{segmented_3dcnn_forward.1} parent=51 // loop_exit
          _
      $region52: #{segmented_3dcnn_forward.1} parent=36 // pred_fallthru
        _
      %p352 = pneg %p52
      // Predicated region
      $region60: #{segmented_3dcnn_forward.1} parent=36 // pred_check
        _
      $region61: #{segmented_3dcnn_forward.1} parent=36 // pred_check_branch
        %354 = sbr.rel (%p52) target = $region63
      $region62: #{segmented_3dcnn_forward.1} parent=36 // pred_region
        %s355 = sand.u32 1152, 7
      $region63: #{segmented_3dcnn_forward.1} parent=36 // pred_fallthru
        _
    $region37: #{segmented_3dcnn_forward.1} parent=1 // pred_fallthru
      _
    // Predicated region
    $region38: #{segmented_3dcnn_forward.1} parent=1 // pred_check
      %p37 = pneg %p33
    $region39: #{segmented_3dcnn_forward.1} parent=1 // pred_check_branch
      %39 = sbr.rel (%p37) target = $region41
    $region40: #{segmented_3dcnn_forward.1} parent=1 // pred_region
      %s40 = sshllo.u32 0, 1152
      loop: start=0, step=1, limit=1
      $region42: #{segmented_3dcnn_forward.1} parent=40 // loop_pre_header
        _
      $region43: #{segmented_3dcnn_forward.1} parent=40 // loop_header
        %s42 = sphi 0, %s46
        %p43 = scmp.ge.s32.totalorder %s42, 1
        %s47 = sphi %s3, %s3
        %s48 = sphi [#allocation4], [#allocation4]
      $region44: #{segmented_3dcnn_forward.1} parent=40 // loop_header_branch
        %45 = sbr.rel (%p43) target = $region48
      $region45: #{segmented_3dcnn_forward.1} parent=40 // loop_body
        %v49 = vld [vmem:[%s47] sm:%s40]
        %50 = vst [vmem:[%s48] sm:%s40] %v49
      $region46: #{segmented_3dcnn_forward.1} parent=40 // loop_footer
        %s46 = sadd.s32 1, %s42
      $region47: #{segmented_3dcnn_forward.1} parent=40 // loop_footer_branch
        %41 = sbr.rel target = $region43
      $region48: #{segmented_3dcnn_forward.1} parent=40 // loop_exit
        _
    $region41: #{segmented_3dcnn_forward.1} parent=1 // pred_fallthru
      _
    // Predicated region
    $region64: #{segmented_3dcnn_forward.1} parent=1 // pred_check
      _
    $region65: #{segmented_3dcnn_forward.1} parent=1 // pred_check_branch
      %358 = sbr.rel (0) target = $region67
    $region66: #{segmented_3dcnn_forward.1} parent=1 // pred_region
      %359 = vsyncadd [#allocation5], 18432
    $region67: #{segmented_3dcnn_forward.1} parent=1 // pred_fallthru
      _
    %v360 = vld [vmem:[%s0] sm:$0xf]
    %v361 = vld [vmem:[%s0 + $0x4] sm:$0xf]
    %v362 = vld [vmem:[%s0 + $0x8] sm:$0xf]
    %v363 = vld [vmem:[%s0 + $0xc] sm:$0xf]
    %v364 = vld [vmem:[%s0 + $0x10] sm:$0xf]
    %v365 = vld [vmem:[%s0 + $0x14] sm:$0xf]
    %v366 = vld [vmem:[%s0 + $0x18] sm:$0xf]
    %v367 = vld [vmem:[%s0 + $0x1c] sm:$0xf]
    %v368 = vld [vmem:[%s0 + $0x20] sm:$0xf]
    %v369 = vld [vmem:[%s0 + $0x24] sm:$0xf]
    %v370 = vld [vmem:[%s0 + $0x28] sm:$0xf]
    %v371 = vld [vmem:[%s0 + $0x2c] sm:$0xf]
    %v372 = vld [vmem:[%s0 + $0x30] sm:$0xf]
    %v373 = vld [vmem:[%s0 + $0x34] sm:$0xf]
    %v374 = vld [vmem:[%s0 + $0x38] sm:$0xf]
    %v375 = vld [vmem:[%s0 + $0x3c] sm:$0xf]
    %v376 = vld [vmem:[%s0 + $0x40] sm:$0xf]
    %v377 = vld [vmem:[%s0 + $0x44] sm:$0xf]
    %v378 = vld [vmem:[%s0 + $0x48] sm:$0xf]
    %v379 = vld [vmem:[%s0 + $0x4c] sm:$0xf]
    %v380 = vld [vmem:[%s0 + $0x50] sm:$0xf]
    %v381 = vld [vmem:[%s0 + $0x54] sm:$0xf]
    %v382 = vld [vmem:[%s0 + $0x58] sm:$0xf]
    %v383 = vld [vmem:[%s0 + $0x5c] sm:$0xf]
    %v384 = vld [vmem:[%s0 + $0x60] sm:$0xf]
    %v385 = vld [vmem:[%s0 + $0x64] sm:$0xf]
    %v386 = vld [vmem:[%s0 + $0x68] sm:$0xf]
    %v387 = vld [vmem:[%s0 + $0x6c] sm:$0xf]
    %v388 = vld [vmem:[%s0 + $0x70] sm:$0xf]
    %v389 = vld [vmem:[%s0 + $0x74] sm:$0xf]
    %v390 = vld [vmem:[%s0 + $0x78] sm:$0xf]
    %v391 = vld [vmem:[%s0 + $0x7c] sm:$0xf]
    %v392 = vld [vmem:[%s0 + $0x80] sm:$0xf]
    %v393 = vld [vmem:[%s0 + $0x84] sm:$0xf]
    %v394 = vld [vmem:[%s0 + $0x88] sm:$0xf]
    %v395 = vld [vmem:[%s0 + $0x8c] sm:$0xf]
    %v396 = vld [vmem:[%s0 + $0x90] sm:$0xf]
    %v397 = vld [vmem:[%s0 + $0x94] sm:$0xf]
    %v398 = vld [vmem:[%s0 + $0x98] sm:$0xf]
    %v399 = vld [vmem:[%s0 + $0x9c] sm:$0xf]
    %v400 = vld [vmem:[%s0 + $0xa0] sm:$0xf]
    %v401 = vld [vmem:[%s0 + $0xa4] sm:$0xf]
    %v402 = vld [vmem:[%s0 + $0xa8] sm:$0xf]
    %v403 = vld [vmem:[%s0 + $0xac] sm:$0xf]
    %v404 = vld [vmem:[%s0 + $0xb0] sm:$0xf]
    %v405 = vld [vmem:[%s0 + $0xb4] sm:$0xf]
    %v406 = vld [vmem:[%s0 + $0xb8] sm:$0xf]
    %v407 = vld [vmem:[%s0 + $0xbc] sm:$0xf]
    %v408 = vld [vmem:[%s0 + $0xc0] sm:$0xf]
    %v409 = vld [vmem:[%s0 + $0xc4] sm:$0xf]
    %v410 = vld [vmem:[%s0 + $0xc8] sm:$0xf]
    %v411 = vld [vmem:[%s0 + $0xcc] sm:$0xf]
    %v412 = vld [vmem:[%s0 + $0xd0] sm:$0xf]
    %v413 = vld [vmem:[%s0 + $0xd4] sm:$0xf]
    %v414 = vld [vmem:[%s1] sm:$0xf]
    %v415 = vld [vmem:[%s1 + $0x4] sm:$0xf]
    %v416 = vld [vmem:[%s1 + $0x8] sm:$0xf]
    %v417 = vld [vmem:[%s1 + $0xc] sm:$0xf]
    %v418 = vld [vmem:[%s1 + $0x10] sm:$0xf]
    %v419 = vld [vmem:[%s1 + $0x14] sm:$0xf]
    %v420 = vld [vmem:[%s1 + $0x18] sm:$0xf]
    %v421 = vld [vmem:[%s1 + $0x1c] sm:$0xf]
    %v422 = vld [vmem:[%s1 + $0x20] sm:$0xf]
    %v423 = vld [vmem:[%s1 + $0x24] sm:$0xf]
    %v424 = vld [vmem:[%s1 + $0x28] sm:$0xf]
    %v425 = vld [vmem:[%s1 + $0x2c] sm:$0xf]
    %v426 = vld [vmem:[%s1 + $0x30] sm:$0xf]
    %v427 = vld [vmem:[%s1 + $0x34] sm:$0xf]
    %v428 = vld [vmem:[%s1 + $0x38] sm:$0xf]
    %v429 = vld [vmem:[%s1 + $0x3c] sm:$0xf]
    %v484 = vunpack.c.l.b16 %v360
    %v485 = vunpack.c.l.b16 %v361
    %v486 = vunpack.c.l.b16 %v362
    %v487 = vunpack.c.l.b16 %v363
    %v488 = vunpack.c.l.b16 %v364
    %v489 = vunpack.c.l.b16 %v365
    %v490 = vunpack.c.l.b16 %v366
    %v491 = vunpack.c.l.b16 %v367
    %v492 = vunpack.c.l.b16 %v368
    %v493 = vunpack.c.l.b16 %v369
    %v494 = vunpack.c.l.b16 %v370
    %v495 = vunpack.c.l.b16 %v371
    %v496 = vunpack.c.l.b16 %v372
    %v497 = vunpack.c.l.b16 %v373
    %v498 = vunpack.c.l.b16 %v374
    %v499 = vunpack.c.l.b16 %v375
    %v500 = vunpack.c.l.b16 %v376
    %v501 = vunpack.c.l.b16 %v377
    %v502 = vunpack.c.l.b16 %v378
    %v503 = vunpack.c.l.b16 %v379
    %v504 = vunpack.c.l.b16 %v380
    %v505 = vunpack.c.l.b16 %v381
    %v506 = vunpack.c.l.b16 %v382
    %v507 = vunpack.c.l.b16 %v383
    %v508 = vunpack.c.l.b16 %v384
    %v509 = vunpack.c.l.b16 %v385
    %v510 = vunpack.c.l.b16 %v386
    %v511 = vunpack.c.l.b16 %v387
    %v512 = vunpack.c.l.b16 %v388
    %v513 = vunpack.c.l.b16 %v389
    %v514 = vunpack.c.l.b16 %v390
    %v515 = vunpack.c.l.b16 %v391
    %v516 = vunpack.c.l.b16 %v392
    %v517 = vunpack.c.l.b16 %v393
    %v518 = vunpack.c.l.b16 %v394
    %v519 = vunpack.c.l.b16 %v395
    %v520 = vunpack.c.l.b16 %v396
    %v521 = vunpack.c.l.b16 %v397
    %v522 = vunpack.c.l.b16 %v398
    %v523 = vunpack.c.l.b16 %v399
    %v524 = vunpack.c.l.b16 %v400
    %v525 = vunpack.c.l.b16 %v401
    %v526 = vunpack.c.l.b16 %v402
    %v527 = vunpack.c.l.b16 %v403
    %v528 = vunpack.c.l.b16 %v404
    %v529 = vunpack.c.l.b16 %v405
    %v530 = vunpack.c.l.b16 %v406
    %v531 = vunpack.c.l.b16 %v407
    %v532 = vunpack.c.l.b16 %v408
    %v533 = vunpack.c.l.b16 %v409
    %v534 = vunpack.c.l.b16 %v410
    %v535 = vunpack.c.l.b16 %v411
    %v536 = vunpack.c.l.b16 %v412
    %v537 = vunpack.c.l.b16 %v413
    %v538 = vpack.c.b16 %v485, %v484
    %v539 = vpack.c.b16 %v487, %v486
    %v540 = vpack.c.b16 %v489, %v488
    %v541 = vpack.c.b16 %v491, %v490
    %v542 = vpack.c.b16 %v493, %v492
    %v543 = vpack.c.b16 %v495, %v494
    %v544 = vpack.c.b16 %v497, %v496
    %v545 = vpack.c.b16 %v499, %v498
    %v546 = vpack.c.b16 %v501, %v500
    %v547 = vpack.c.b16 %v503, %v502
    %v548 = vpack.c.b16 %v505, %v504
    %v549 = vpack.c.b16 %v507, %v506
    %v550 = vpack.c.b16 %v509, %v508
    %v551 = vpack.c.b16 %v511, %v510
    %v552 = vpack.c.b16 %v513, %v512
    %v553 = vpack.c.b16 %v515, %v514
    %v554 = vpack.c.b16 %v517, %v516
    %v555 = vpack.c.b16 %v519, %v518
    %v556 = vpack.c.b16 %v521, %v520
    %v557 = vpack.c.b16 %v523, %v522
    %v558 = vpack.c.b16 %v525, %v524
    %v559 = vpack.c.b16 %v527, %v526
    %v560 = vpack.c.b16 %v529, %v528
    %v561 = vpack.c.b16 %v531, %v530
    %v562 = vpack.c.b16 %v533, %v532
    %v563 = vpack.c.b16 %v535, %v534
    %v564 = vpack.c.b16 %v537, %v536
    %v608 = vunpack.c.l.b16 %v414
    %v609 = vunpack.c.l.b16 %v415
    %v610 = vunpack.c.l.b16 %v416
    %v611 = vunpack.c.l.b16 %v417
    %v612 = vunpack.c.l.b16 %v418
    %v613 = vunpack.c.l.b16 %v419
    %v614 = vunpack.c.l.b16 %v420
    %v615 = vunpack.c.l.b16 %v421
    %v616 = vunpack.c.l.b16 %v422
    %v617 = vunpack.c.l.b16 %v423
    %v618 = vunpack.c.l.b16 %v424
    %v619 = vunpack.c.l.b16 %v425
    %v620 = vunpack.c.l.b16 %v426
    %v621 = vunpack.c.l.b16 %v427
    %v622 = vunpack.c.l.b16 %v428
    %v623 = vunpack.c.l.b16 %v429
    %v624 = vpack.c.b16 %v609, %v608
    %v625 = vpack.c.b16 %v611, %v610
    %v626 = vpack.c.b16 %v613, %v612
    %v627 = vpack.c.b16 %v615, %v614
    %v628 = vpack.c.b16 %v617, %v616
    %v629 = vpack.c.b16 %v619, %v618
    %v630 = vpack.c.b16 %v621, %v620
    %v631 = vpack.c.b16 %v623, %v622
    %640 = vmatprep.subr.bf16.mxu0 0
    %641 = vmatpush1.bf16.msra.mxu0 %v624
    %642 = vmatprep.subr.bf16.mxu0 0
    %643 = vmatpush1.bf16.msra.mxu0 %v625
    %644 = vmatprep.subr.bf16.mxu0 0
    %645 = vmatpush1.bf16.msra.mxu0 %v626
    %646 = vmatprep.subr.bf16.mxu0 0
    %647 = vmatpush1.bf16.msra.mxu0 %v627
    %648 = vmatprep.subr.bf16.mxu0 0
    %649 = vmatpush1.bf16.msra.mxu0 %v628
    %650 = vmatprep.subr.bf16.mxu0 0
    %651 = vmatpush1.bf16.msra.mxu0 %v629
    %652 = vmatprep.subr.bf16.mxu0 0
    %653 = vmatpush1.bf16.msra.mxu0 %v630
    %654 = vmatprep.subr.bf16.mxu0 0
    %655 = vmatpush1.bf16.msra.mxu0 %v631
    %656 = vmatprep.subr.bf16.mxu0 0
    %657 = vmatpush1.bf16.msra.mxu0 0
    %658 = vmatprep.subr.bf16.mxu0 0
    %659 = vmatpush1.bf16.msra.mxu0 0
    %660 = vmatprep.subr.bf16.mxu0 0
    %661 = vmatpush1.bf16.msra.mxu0 0
    %662 = vmatprep.subr.bf16.mxu0 0
    %663 = vmatpush1.bf16.msra.mxu0 0
    %664 = vmatprep.subr.bf16.mxu0 0
    %665 = vmatpush1.bf16.msra.mxu0 0
    %666 = vmatprep.subr.bf16.mxu0 0
    %667 = vmatpush1.bf16.msra.mxu0 0
    %668 = vmatprep.subr.bf16.mxu0 0
    %669 = vmatpush1.bf16.msra.mxu0 0
    %670 = vmatprep.subr.bf16.mxu0 0
    %671 = vmatpush1.bf16.msra.mxu0 0
    %672 = vmatprep.mubr.bf16.mxu0 0
    %673 = vmatmul.mubr.bf16.gmra.mrb[0].mxu0 %v538
    %v674 = vpop.f32.mrb[0].mxu0
    %v675 = vadd.f32 0.0, %v674
    %v676 = vpop.f32.mrb[0].mxu0
    %v677 = vpop.f32.mrb[0].mxu0
    %v678 = vadd.f32 0.0, %v677
    %v679 = vpop.f32.mrb[0].mxu0
    %680 = vmatprep.mubr.bf16.mxu0 0
    %681 = vmatmul.mubr.bf16.gmra.mrb[0].mxu0 %v539
    %v682 = vpop.f32.mrb[0].mxu0
    %v683 = vadd.f32 0.0, %v682
    %v684 = vpop.f32.mrb[0].mxu0
    %v685 = vpop.f32.mrb[0].mxu0
    %v686 = vadd.f32 0.0, %v685
    %v687 = vpop.f32.mrb[0].mxu0
    %688 = vmatprep.mubr.bf16.mxu0 0
    %689 = vmatmul.mubr.bf16.gmra.mrb[0].mxu0 %v540
    %v690 = vpop.f32.mrb[0].mxu0
    %v691 = vadd.f32 0.0, %v690
    %v692 = vpop.f32.mrb[0].mxu0
    %v693 = vpop.f32.mrb[0].mxu0
    %v694 = vadd.f32 0.0, %v693
    %v695 = vpop.f32.mrb[0].mxu0
    %696 = vmatprep.mubr.bf16.mxu0 0
    %697 = vmatmul.mubr.bf16.gmra.mrb[0].mxu0 %v541
    %v698 = vpop.f32.mrb[0].mxu0
    %v699 = vadd.f32 0.0, %v698
    %v700 = vpop.f32.mrb[0].mxu0
    %v701 = vpop.f32.mrb[0].mxu0
    %v702 = vadd.f32 0.0, %v701
    %v703 = vpop.f32.mrb[0].mxu0
    %704 = vmatprep.mubr.bf16.mxu0 0
    %705 = vmatmul.mubr.bf16.gmra.mrb[0].mxu0 %v542
    %v706 = vpop.f32.mrb[0].mxu0
    %v707 = vadd.f32 0.0, %v706
    %v708 = vpop.f32.mrb[0].mxu0
    %v709 = vpop.f32.mrb[0].mxu0
    %v710 = vadd.f32 0.0, %v709
    %v711 = vpop.f32.mrb[0].mxu0
    %712 = vmatprep.mubr.bf16.mxu0 0
    %713 = vmatmul.mubr.bf16.gmra.mrb[0].mxu0 %v543
    %v714 = vpop.f32.mrb[0].mxu0
    %v715 = vadd.f32 0.0, %v714
    %v716 = vpop.f32.mrb[0].mxu0
    %v717 = vpop.f32.mrb[0].mxu0
    %v718 = vadd.f32 0.0, %v717
    %v719 = vpop.f32.mrb[0].mxu0
    %720 = vmatprep.mubr.bf16.mxu0 0
    %721 = vmatmul.mubr.bf16.gmra.mrb[0].mxu0 %v544
    %v722 = vpop.f32.mrb[0].mxu0
    %v723 = vadd.f32 0.0, %v722
    %v724 = vpop.f32.mrb[0].mxu0
    %v725 = vpop.f32.mrb[0].mxu0
    %v726 = vadd.f32 0.0, %v725
    %v727 = vpop.f32.mrb[0].mxu0
    %728 = vmatprep.mubr.bf16.mxu0 0
    %729 = vmatmul.mubr.bf16.gmra.mrb[0].mxu0 %v545
    %v730 = vpop.f32.mrb[0].mxu0
    %v731 = vadd.f32 0.0, %v730
    %v732 = vpop.f32.mrb[0].mxu0
    %v733 = vpop.f32.mrb[0].mxu0
    %v734 = vadd.f32 0.0, %v733
    %v735 = vpop.f32.mrb[0].mxu0
    %736 = vmatprep.mubr.bf16.mxu0 0
    %737 = vmatmul.mubr.bf16.gmra.mrb[0].mxu0 %v546
    %v738 = vpop.f32.mrb[0].mxu0
    %v739 = vadd.f32 0.0, %v738
    %v740 = vpop.f32.mrb[0].mxu0
    %v741 = vpop.f32.mrb[0].mxu0
    %v742 = vadd.f32 0.0, %v741
    %v743 = vpop.f32.mrb[0].mxu0
    %744 = vmatprep.mubr.bf16.mxu0 0
    %745 = vmatmul.mubr.bf16.gmra.mrb[0].mxu0 %v547
    %v746 = vpop.f32.mrb[0].mxu0
    %v747 = vadd.f32 0.0, %v746
    %v748 = vpop.f32.mrb[0].mxu0
    %v749 = vpop.f32.mrb[0].mxu0
    %v750 = vadd.f32 0.0, %v749
    %v751 = vpop.f32.mrb[0].mxu0
    %752 = vmatprep.mubr.bf16.mxu0 0
    %753 = vmatmul.mubr.bf16.gmra.mrb[0].mxu0 %v548
    %v754 = vpop.f32.mrb[0].mxu0
    %v755 = vadd.f32 0.0, %v754
    %v756 = vpop.f32.mrb[0].mxu0
    %v757 = vpop.f32.mrb[0].mxu0
    %v758 = vadd.f32 0.0, %v757
    %v759 = vpop.f32.mrb[0].mxu0
    %760 = vmatprep.mubr.bf16.mxu0 0
    %761 = vmatmul.mubr.bf16.gmra.mrb[0].mxu0 %v549
    %v762 = vpop.f32.mrb[0].mxu0
    %v763 = vadd.f32 0.0, %v762
    %v764 = vpop.f32.mrb[0].mxu0
    %v765 = vpop.f32.mrb[0].mxu0
    %v766 = vadd.f32 0.0, %v765
    %v767 = vpop.f32.mrb[0].mxu0
    %768 = vmatprep.mubr.bf16.mxu0 0
    %769 = vmatmul.mubr.bf16.gmra.mrb[0].mxu0 %v550
    %v770 = vpop.f32.mrb[0].mxu0
    %v771 = vadd.f32 0.0, %v770
    %v772 = vpop.f32.mrb[0].mxu0
    %v773 = vpop.f32.mrb[0].mxu0
    %v774 = vadd.f32 0.0, %v773
    %v775 = vpop.f32.mrb[0].mxu0
    %776 = vmatprep.mubr.bf16.mxu0 0
    %777 = vmatmul.mubr.bf16.gmra.mrb[0].mxu0 %v551
    %v778 = vpop.f32.mrb[0].mxu0
    %v779 = vadd.f32 0.0, %v778
    %v780 = vpop.f32.mrb[0].mxu0
    %v781 = vpop.f32.mrb[0].mxu0
    %v782 = vadd.f32 0.0, %v781
    %v783 = vpop.f32.mrb[0].mxu0
    %784 = vmatprep.mubr.bf16.mxu0 0
    %785 = vmatmul.mubr.bf16.gmra.mrb[0].mxu0 %v552
    %v786 = vpop.f32.mrb[0].mxu0
    %v787 = vadd.f32 0.0, %v786
    %v788 = vpop.f32.mrb[0].mxu0
    %v789 = vpop.f32.mrb[0].mxu0
    %v790 = vadd.f32 0.0, %v789
    %v791 = vpop.f32.mrb[0].mxu0
    %792 = vmatprep.mubr.bf16.mxu0 0
    %793 = vmatmul.mubr.bf16.gmra.mrb[0].mxu0 %v553
    %v794 = vpop.f32.mrb[0].mxu0
    %v795 = vadd.f32 0.0, %v794
    %v796 = vpop.f32.mrb[0].mxu0
    %v797 = vpop.f32.mrb[0].mxu0
    %v798 = vadd.f32 0.0, %v797
    %v799 = vpop.f32.mrb[0].mxu0
    %800 = vmatprep.mubr.bf16.mxu0 0
    %801 = vmatmul.mubr.bf16.gmra.mrb[0].mxu0 %v554
    %v802 = vpop.f32.mrb[0].mxu0
    %v803 = vadd.f32 0.0, %v802
    %v804 = vpop.f32.mrb[0].mxu0
    %v805 = vpop.f32.mrb[0].mxu0
    %v806 = vadd.f32 0.0, %v805
    %v807 = vpop.f32.mrb[0].mxu0
    %808 = vmatprep.mubr.bf16.mxu0 0
    %809 = vmatmul.mubr.bf16.gmra.mrb[0].mxu0 %v555
    %v810 = vpop.f32.mrb[0].mxu0
    %v811 = vadd.f32 0.0, %v810
    %v812 = vpop.f32.mrb[0].mxu0
    %v813 = vpop.f32.mrb[0].mxu0
    %v814 = vadd.f32 0.0, %v813
    %v815 = vpop.f32.mrb[0].mxu0
    %816 = vmatprep.mubr.bf16.mxu0 0
    %817 = vmatmul.mubr.bf16.gmra.mrb[0].mxu0 %v556
    %v818 = vpop.f32.mrb[0].mxu0
    %v819 = vadd.f32 0.0, %v818
    %v820 = vpop.f32.mrb[0].mxu0
    %v821 = vpop.f32.mrb[0].mxu0
    %v822 = vadd.f32 0.0, %v821
    %v823 = vpop.f32.mrb[0].mxu0
    %824 = vmatprep.mubr.bf16.mxu0 0
    %825 = vmatmul.mubr.bf16.gmra.mrb[0].mxu0 %v557
    %v826 = vpop.f32.mrb[0].mxu0
    %v827 = vadd.f32 0.0, %v826
    %v828 = vpop.f32.mrb[0].mxu0
    %v829 = vpop.f32.mrb[0].mxu0
    %v830 = vadd.f32 0.0, %v829
    %v831 = vpop.f32.mrb[0].mxu0
    %832 = vmatprep.mubr.bf16.mxu0 0
    %833 = vmatmul.mubr.bf16.gmra.mrb[0].mxu0 %v558
    %v834 = vpop.f32.mrb[0].mxu0
    %v835 = vadd.f32 0.0, %v834
    %v836 = vpop.f32.mrb[0].mxu0
    %v837 = vpop.f32.mrb[0].mxu0
    %v838 = vadd.f32 0.0, %v837
    %v839 = vpop.f32.mrb[0].mxu0
    %840 = vmatprep.mubr.bf16.mxu0 0
    %841 = vmatmul.mubr.bf16.gmra.mrb[0].mxu0 %v559
    %v842 = vpop.f32.mrb[0].mxu0
    %v843 = vadd.f32 0.0, %v842
    %v844 = vpop.f32.mrb[0].mxu0
    %v845 = vpop.f32.mrb[0].mxu0
    %v846 = vadd.f32 0.0, %v845
    %v847 = vpop.f32.mrb[0].mxu0
    %848 = vmatprep.mubr.bf16.mxu0 0
    %849 = vmatmul.mubr.bf16.gmra.mrb[0].mxu0 %v560
    %v850 = vpop.f32.mrb[0].mxu0
    %v851 = vadd.f32 0.0, %v850
    %v852 = vpop.f32.mrb[0].mxu0
    %v853 = vpop.f32.mrb[0].mxu0
    %v854 = vadd.f32 0.0, %v853
    %v855 = vpop.f32.mrb[0].mxu0
    %856 = vmatprep.mubr.bf16.mxu0 0
    %857 = vmatmul.mubr.bf16.gmra.mrb[0].mxu0 %v561
    %v858 = vpop.f32.mrb[0].mxu0
    %v859 = vadd.f32 0.0, %v858
    %v860 = vpop.f32.mrb[0].mxu0
    %v861 = vpop.f32.mrb[0].mxu0
    %v862 = vadd.f32 0.0, %v861
    %v863 = vpop.f32.mrb[0].mxu0
    %864 = vmatprep.mubr.bf16.mxu0 0
    %865 = vmatmul.mubr.bf16.gmra.mrb[0].mxu0 %v562
    %v866 = vpop.f32.mrb[0].mxu0
    %v867 = vadd.f32 0.0, %v866
    %v868 = vpop.f32.mrb[0].mxu0
    %v869 = vpop.f32.mrb[0].mxu0
    %v870 = vadd.f32 0.0, %v869
    %v871 = vpop.f32.mrb[0].mxu0
    %872 = vmatprep.mubr.bf16.mxu0 0
    %873 = vmatmul.mubr.bf16.gmra.mrb[0].mxu0 %v563
    %v874 = vpop.f32.mrb[0].mxu0
    %v875 = vadd.f32 0.0, %v874
    %v876 = vpop.f32.mrb[0].mxu0
    %v877 = vpop.f32.mrb[0].mxu0
    %v878 = vadd.f32 0.0, %v877
    %v879 = vpop.f32.mrb[0].mxu0
    %880 = vmatprep.mubr.bf16.mxu0 0
    %881 = vmatmul.mubr.bf16.gmra.mrb[0].mxu0 %v564
    %v882 = vpop.f32.mrb[0].mxu0
    %v883 = vadd.f32 0.0, %v882
    %v884 = vpop.f32.mrb[0].mxu0
    %v885 = vpop.f32.mrb[0].mxu0
    %v886 = vadd.f32 0.0, %v885
    %v887 = vpop.f32.mrb[0].mxu0
    %888 = vdwg.mxu0
    %889 = vst [vmem:[#allocation2] sm:$0xff] %v675
    %890 = vst [vmem:[#allocation2 + $0x8] sm:$0xff] %v678
    %891 = vst [vmem:[#allocation2 + $0x10] sm:$0xff] %v683
    %892 = vst [vmem:[#allocation2 + $0x18] sm:$0xff] %v686
    %893 = vst [vmem:[#allocation2 + $0x20] sm:$0xff] %v691
    %894 = vst [vmem:[#allocation2 + $0x28] sm:$0xff] %v694
    %895 = vst [vmem:[#allocation2 + $0x30] sm:$0xff] %v699
    %896 = vst [vmem:[#allocation2 + $0x38] sm:$0xff] %v702
    %897 = vst [vmem:[#allocation2 + $0x40] sm:$0xff] %v707
    %898 = vst [vmem:[#allocation2 + $0x48] sm:$0xff] %v710
    %899 = vst [vmem:[#allocation2 + $0x50] sm:$0xff] %v715
    %900 = vst [vmem:[#allocation2 + $0x58] sm:$0xff] %v718
    %901 = vst [vmem:[#allocation2 + $0x60] sm:$0xff] %v723
    %902 = vst [vmem:[#allocation2 + $0x68] sm:$0xff] %v726
    %903 = vst [vmem:[#allocation2 + $0x70] sm:$0xff] %v731
    %904 = vst [vmem:[#allocation2 + $0x78] sm:$0xff] %v734
    %905 = vst [vmem:[#allocation2 + $0x80] sm:$0xff] %v739
    %906 = vst [vmem:[#allocation2 + $0x88] sm:$0xff] %v742
    %907 = vst [vmem:[#allocation2 + $0x90] sm:$0xff] %v747
    %908 = vst [vmem:[#allocation2 + $0x98] sm:$0xff] %v750
    %909 = vst [vmem:[#allocation2 + $0xa0] sm:$0xff] %v755
    %910 = vst [vmem:[#allocation2 + $0xa8] sm:$0xff] %v758
    %911 = vst [vmem:[#allocation2 + $0xb0] sm:$0xff] %v763
    %912 = vst [vmem:[#allocation2 + $0xb8] sm:$0xff] %v766
    %913 = vst [vmem:[#allocation2 + $0xc0] sm:$0xff] %v771
    %914 = vst [vmem:[#allocation2 + $0xc8] sm:$0xff] %v774
    %915 = vst [vmem:[#allocation2 + $0xd0] sm:$0xff] %v779
    %916 = vst [vmem:[#allocation2 + $0xd8] sm:$0xff] %v782
    %917 = vst [vmem:[#allocation2 + $0xe0] sm:$0xff] %v787
    %918 = vst [vmem:[#allocation2 + $0xe8] sm:$0xff] %v790
    %919 = vst [vmem:[#allocation2 + $0xf0] sm:$0xff] %v795
    %920 = vst [vmem:[#allocation2 + $0xf8] sm:$0xff] %v798
    %921 = vst [vmem:[#allocation2 + $0x100] sm:$0xff] %v803
    %922 = vst [vmem:[#allocation2 + $0x108] sm:$0xff] %v806
    %923 = vst [vmem:[#allocation2 + $0x110] sm:$0xff] %v811
    %924 = vst [vmem:[#allocation2 + $0x118] sm:$0xff] %v814
    %925 = vst [vmem:[#allocation2 + $0x120] sm:$0xff] %v819
    %926 = vst [vmem:[#allocation2 + $0x128] sm:$0xff] %v822
    %927 = vst [vmem:[#allocation2 + $0x130] sm:$0xff] %v827
    %928 = vst [vmem:[#allocation2 + $0x138] sm:$0xff] %v830
    %929 = vst [vmem:[#allocation2 + $0x140] sm:$0xff] %v835
    %930 = vst [vmem:[#allocation2 + $0x148] sm:$0xff] %v838
    %931 = vst [vmem:[#allocation2 + $0x150] sm:$0xff] %v843
    %932 = vst [vmem:[#allocation2 + $0x158] sm:$0xff] %v846
    %933 = vst [vmem:[#allocation2 + $0x160] sm:$0xff] %v851
    %934 = vst [vmem:[#allocation2 + $0x168] sm:$0xff] %v854
    %935 = vst [vmem:[#allocation2 + $0x170] sm:$0xff] %v859
    %936 = vst [vmem:[#allocation2 + $0x178] sm:$0xff] %v862
    %937 = vst [vmem:[#allocation2 + $0x180] sm:$0xff] %v867
    %938 = vst [vmem:[#allocation2 + $0x188] sm:$0xff] %v870
    %939 = vst [vmem:[#allocation2 + $0x190] sm:$0xff] %v875
    %940 = vst [vmem:[#allocation2 + $0x198] sm:$0xff] %v878
    %941 = vst [vmem:[#allocation2 + $0x1a0] sm:$0xff] %v883
    %942 = vst [vmem:[#allocation2 + $0x1a8] sm:$0xff] %v886
    %v943 = vld [vmem:[#allocation2] sm:$0xff]
    %v944 = vld [vmem:[#allocation2 + $0x8] sm:$0xff]
    %v945 = vld [vmem:[#allocation2 + $0x10] sm:$0xff]
    %v946 = vld [vmem:[#allocation2 + $0x18] sm:$0xff]
    %v947 = vld [vmem:[#allocation2 + $0x20] sm:$0xff]
    %v948 = vld [vmem:[#allocation2 + $0x28] sm:$0xff]
    %v949 = vld [vmem:[#allocation2 + $0x30] sm:$0xff]
    %v950 = vld [vmem:[#allocation2 + $0x38] sm:$0xff]
    %v951 = vld [vmem:[#allocation2 + $0x40] sm:$0xff]
    %v952 = vld [vmem:[#allocation2 + $0x48] sm:$0xff]
    %v953 = vld [vmem:[#allocation2 + $0x50] sm:$0xff]
    %v954 = vld [vmem:[#allocation2 + $0x58] sm:$0xff]
    %v955 = vld [vmem:[#allocation2 + $0x60] sm:$0xff]
    %v956 = vld [vmem:[#allocation2 + $0x68] sm:$0xff]
    %v957 = vld [vmem:[#allocation2 + $0x70] sm:$0xff]
    %v958 = vld [vmem:[#allocation2 + $0x78] sm:$0xff]
    %v959 = vld [vmem:[#allocation2 + $0x80] sm:$0xff]
    %v960 = vld [vmem:[#allocation2 + $0x88] sm:$0xff]
    %v961 = vld [vmem:[#allocation2 + $0x90] sm:$0xff]
    %v962 = vld [vmem:[#allocation2 + $0x98] sm:$0xff]
    %v963 = vld [vmem:[#allocation2 + $0xa0] sm:$0xff]
    %v964 = vld [vmem:[#allocation2 + $0xa8] sm:$0xff]
    %v965 = vld [vmem:[#allocation2 + $0xb0] sm:$0xff]
    %v966 = vld [vmem:[#allocation2 + $0xb8] sm:$0xff]
    %v967 = vld [vmem:[#allocation2 + $0xc0] sm:$0xff]
    %v968 = vld [vmem:[#allocation2 + $0xc8] sm:$0xff]
    %v969 = vld [vmem:[#allocation2 + $0xd0] sm:$0xff]
    %v970 = vld [vmem:[#allocation2 + $0xd8] sm:$0xff]
    %v971 = vld [vmem:[#allocation2 + $0xe0] sm:$0xff]
    %v972 = vld [vmem:[#allocation2 + $0xe8] sm:$0xff]
    %v973 = vld [vmem:[#allocation2 + $0xf0] sm:$0xff]
    %v974 = vld [vmem:[#allocation2 + $0xf8] sm:$0xff]
    %v975 = vld [vmem:[#allocation2 + $0x100] sm:$0xff]
    %v976 = vld [vmem:[#allocation2 + $0x108] sm:$0xff]
    %v977 = vld [vmem:[#allocation2 + $0x110] sm:$0xff]
    %v978 = vld [vmem:[#allocation2 + $0x118] sm:$0xff]
    %v979 = vld [vmem:[#allocation2 + $0x120] sm:$0xff]
    %v980 = vld [vmem:[#allocation2 + $0x128] sm:$0xff]
    %v981 = vld [vmem:[#allocation2 + $0x130] sm:$0xff]
    %v982 = vld [vmem:[#allocation2 + $0x138] sm:$0xff]
    %v983 = vld [vmem:[#allocation2 + $0x140] sm:$0xff]
    %v984 = vld [vmem:[#allocation2 + $0x148] sm:$0xff]
    %v985 = vld [vmem:[#allocation2 + $0x150] sm:$0xff]
    %v986 = vld [vmem:[#allocation2 + $0x158] sm:$0xff]
    %v987 = vld [vmem:[#allocation2 + $0x160] sm:$0xff]
    %v988 = vld [vmem:[#allocation2 + $0x168] sm:$0xff]
    %v989 = vld [vmem:[#allocation2 + $0x170] sm:$0xff]
    %v990 = vld [vmem:[#allocation2 + $0x178] sm:$0xff]
    %v991 = vld [vmem:[#allocation2 + $0x180] sm:$0xff]
    %v992 = vld [vmem:[#allocation2 + $0x188] sm:$0xff]
    %v993 = vld [vmem:[#allocation2 + $0x190] sm:$0xff]
    %v994 = vld [vmem:[#allocation2 + $0x198] sm:$0xff]
    %v995 = vld [vmem:[#allocation2 + $0x1a0] sm:$0xff]
    %v996 = vld [vmem:[#allocation2 + $0x1a8] sm:$0xff]
    %v997 = vrot.slane %v943, 4
    %v998 = vmax.f32 %v943, %v997
    %v999 = vrot.slane %v998, 2
    %v1000 = vmax.f32 %v998, %v999
    %v1001 = vrot.slane %v1000, 1
    %v1002 = vmax.f32 %v1000, %v1001
    %v1003 = vrot.slane %v944, 4
    %v1004 = vmax.f32 %v944, %v1003
    %v1005 = vrot.slane %v1004, 2
    %v1006 = vmax.f32 %v1004, %v1005
    %v1007 = vrot.slane %v1006, 1
    %v1008 = vmax.f32 %v1006, %v1007
    %v1009 = vrot.slane %v945, 4
    %v1010 = vmax.f32 %v945, %v1009
    %v1011 = vrot.slane %v1010, 2
    %v1012 = vmax.f32 %v1010, %v1011
    %v1013 = vrot.slane %v1012, 1
    %v1014 = vmax.f32 %v1012, %v1013
    %v1015 = vrot.slane %v946, 4
    %v1016 = vmax.f32 %v946, %v1015
    %v1017 = vrot.slane %v1016, 2
    %v1018 = vmax.f32 %v1016, %v1017
    %v1019 = vrot.slane %v1018, 1
    %v1020 = vmax.f32 %v1018, %v1019
    %v1021 = vrot.slane %v947, 4
    %v1022 = vmax.f32 %v947, %v1021
    %v1023 = vrot.slane %v1022, 2
    %v1024 = vmax.f32 %v1022, %v1023
    %v1025 = vrot.slane %v1024, 1
    %v1026 = vmax.f32 %v1024, %v1025
    %v1027 = vrot.slane %v948, 4
    %v1028 = vmax.f32 %v948, %v1027
    %v1029 = vrot.slane %v1028, 2
    %v1030 = vmax.f32 %v1028, %v1029
    %v1031 = vrot.slane %v1030, 1
    %v1032 = vmax.f32 %v1030, %v1031
    %v1033 = vrot.slane %v949, 4
    %v1034 = vmax.f32 %v949, %v1033
    %v1035 = vrot.slane %v1034, 2
    %v1036 = vmax.f32 %v1034, %v1035
    %v1037 = vrot.slane %v1036, 1
    %v1038 = vmax.f32 %v1036, %v1037
    %v1039 = vrot.slane %v950, 4
    %v1040 = vmax.f32 %v950, %v1039
    %v1041 = vrot.slane %v1040, 2
    %v1042 = vmax.f32 %v1040, %v1041
    %v1043 = vrot.slane %v1042, 1
    %v1044 = vmax.f32 %v1042, %v1043
    %v1045 = vrot.slane %v951, 4
    %v1046 = vmax.f32 %v951, %v1045
    %v1047 = vrot.slane %v1046, 2
    %v1048 = vmax.f32 %v1046, %v1047
    %v1049 = vrot.slane %v1048, 1
    %v1050 = vmax.f32 %v1048, %v1049
    %v1051 = vrot.slane %v952, 4
    %v1052 = vmax.f32 %v952, %v1051
    %v1053 = vrot.slane %v1052, 2
    %v1054 = vmax.f32 %v1052, %v1053
    %v1055 = vrot.slane %v1054, 1
    %v1056 = vmax.f32 %v1054, %v1055
    %v1057 = vrot.slane %v953, 4
    %v1058 = vmax.f32 %v953, %v1057
    %v1059 = vrot.slane %v1058, 2
    %v1060 = vmax.f32 %v1058, %v1059
    %v1061 = vrot.slane %v1060, 1
    %v1062 = vmax.f32 %v1060, %v1061
    %v1063 = vrot.slane %v954, 4
    %v1064 = vmax.f32 %v954, %v1063
    %v1065 = vrot.slane %v1064, 2
    %v1066 = vmax.f32 %v1064, %v1065
    %v1067 = vrot.slane %v1066, 1
    %v1068 = vmax.f32 %v1066, %v1067
    %v1069 = vrot.slane %v955, 4
    %v1070 = vmax.f32 %v955, %v1069
    %v1071 = vrot.slane %v1070, 2
    %v1072 = vmax.f32 %v1070, %v1071
    %v1073 = vrot.slane %v1072, 1
    %v1074 = vmax.f32 %v1072, %v1073
    %v1075 = vrot.slane %v956, 4
    %v1076 = vmax.f32 %v956, %v1075
    %v1077 = vrot.slane %v1076, 2
    %v1078 = vmax.f32 %v1076, %v1077
    %v1079 = vrot.slane %v1078, 1
    %v1080 = vmax.f32 %v1078, %v1079
    %v1081 = vrot.slane %v957, 4
    %v1082 = vmax.f32 %v957, %v1081
    %v1083 = vrot.slane %v1082, 2
    %v1084 = vmax.f32 %v1082, %v1083
    %v1085 = vrot.slane %v1084, 1
    %v1086 = vmax.f32 %v1084, %v1085
    %v1087 = vrot.slane %v958, 4
    %v1088 = vmax.f32 %v958, %v1087
    %v1089 = vrot.slane %v1088, 2
    %v1090 = vmax.f32 %v1088, %v1089
    %v1091 = vrot.slane %v1090, 1
    %v1092 = vmax.f32 %v1090, %v1091
    %v1093 = vrot.slane %v959, 4
    %v1094 = vmax.f32 %v959, %v1093
    %v1095 = vrot.slane %v1094, 2
    %v1096 = vmax.f32 %v1094, %v1095
    %v1097 = vrot.slane %v1096, 1
    %v1098 = vmax.f32 %v1096, %v1097
    %v1099 = vrot.slane %v960, 4
    %v1100 = vmax.f32 %v960, %v1099
    %v1101 = vrot.slane %v1100, 2
    %v1102 = vmax.f32 %v1100, %v1101
    %v1103 = vrot.slane %v1102, 1
    %v1104 = vmax.f32 %v1102, %v1103
    %v1105 = vrot.slane %v961, 4
    %v1106 = vmax.f32 %v961, %v1105
    %v1107 = vrot.slane %v1106, 2
    %v1108 = vmax.f32 %v1106, %v1107
    %v1109 = vrot.slane %v1108, 1
    %v1110 = vmax.f32 %v1108, %v1109
    %v1111 = vrot.slane %v962, 4
    %v1112 = vmax.f32 %v962, %v1111
    %v1113 = vrot.slane %v1112, 2
    %v1114 = vmax.f32 %v1112, %v1113
    %v1115 = vrot.slane %v1114, 1
    %v1116 = vmax.f32 %v1114, %v1115
    %v1117 = vrot.slane %v963, 4
    %v1118 = vmax.f32 %v963, %v1117
    %v1119 = vrot.slane %v1118, 2
    %v1120 = vmax.f32 %v1118, %v1119
    %v1121 = vrot.slane %v1120, 1
    %v1122 = vmax.f32 %v1120, %v1121
    %v1123 = vrot.slane %v964, 4
    %v1124 = vmax.f32 %v964, %v1123
    %v1125 = vrot.slane %v1124, 2
    %v1126 = vmax.f32 %v1124, %v1125
    %v1127 = vrot.slane %v1126, 1
    %v1128 = vmax.f32 %v1126, %v1127
    %v1129 = vrot.slane %v965, 4
    %v1130 = vmax.f32 %v965, %v1129
    %v1131 = vrot.slane %v1130, 2
    %v1132 = vmax.f32 %v1130, %v1131
    %v1133 = vrot.slane %v1132, 1
    %v1134 = vmax.f32 %v1132, %v1133
    %v1135 = vrot.slane %v966, 4
    %v1136 = vmax.f32 %v966, %v1135
    %v1137 = vrot.slane %v1136, 2
    %v1138 = vmax.f32 %v1136, %v1137
    %v1139 = vrot.slane %v1138, 1
    %v1140 = vmax.f32 %v1138, %v1139
    %v1141 = vrot.slane %v967, 4
    %v1142 = vmax.f32 %v967, %v1141
    %v1143 = vrot.slane %v1142, 2
    %v1144 = vmax.f32 %v1142, %v1143
    %v1145 = vrot.slane %v1144, 1
    %v1146 = vmax.f32 %v1144, %v1145
    %v1147 = vrot.slane %v968, 4
    %v1148 = vmax.f32 %v968, %v1147
    %v1149 = vrot.slane %v1148, 2
    %v1150 = vmax.f32 %v1148, %v1149
    %v1151 = vrot.slane %v1150, 1
    %v1152 = vmax.f32 %v1150, %v1151
    %v1153 = vrot.slane %v969, 4
    %v1154 = vmax.f32 %v969, %v1153
    %v1155 = vrot.slane %v1154, 2
    %v1156 = vmax.f32 %v1154, %v1155
    %v1157 = vrot.slane %v1156, 1
    %v1158 = vmax.f32 %v1156, %v1157
    %v1159 = vrot.slane %v970, 4
    %v1160 = vmax.f32 %v970, %v1159
    %v1161 = vrot.slane %v1160, 2
    %v1162 = vmax.f32 %v1160, %v1161
    %v1163 = vrot.slane %v1162, 1
    %v1164 = vmax.f32 %v1162, %v1163
    %v1165 = vrot.slane %v971, 4
    %v1166 = vmax.f32 %v971, %v1165
    %v1167 = vrot.slane %v1166, 2
    %v1168 = vmax.f32 %v1166, %v1167
    %v1169 = vrot.slane %v1168, 1
    %v1170 = vmax.f32 %v1168, %v1169
    %v1171 = vrot.slane %v972, 4
    %v1172 = vmax.f32 %v972, %v1171
    %v1173 = vrot.slane %v1172, 2
    %v1174 = vmax.f32 %v1172, %v1173
    %v1175 = vrot.slane %v1174, 1
    %v1176 = vmax.f32 %v1174, %v1175
    %v1177 = vrot.slane %v973, 4
    %v1178 = vmax.f32 %v973, %v1177
    %v1179 = vrot.slane %v1178, 2
    %v1180 = vmax.f32 %v1178, %v1179
    %v1181 = vrot.slane %v1180, 1
    %v1182 = vmax.f32 %v1180, %v1181
    %v1183 = vrot.slane %v974, 4
    %v1184 = vmax.f32 %v974, %v1183
    %v1185 = vrot.slane %v1184, 2
    %v1186 = vmax.f32 %v1184, %v1185
    %v1187 = vrot.slane %v1186, 1
    %v1188 = vmax.f32 %v1186, %v1187
    %v1189 = vrot.slane %v975, 4
    %v1190 = vmax.f32 %v975, %v1189
    %v1191 = vrot.slane %v1190, 2
    %v1192 = vmax.f32 %v1190, %v1191
    %v1193 = vrot.slane %v1192, 1
    %v1194 = vmax.f32 %v1192, %v1193
    %v1195 = vrot.slane %v976, 4
    %v1196 = vmax.f32 %v976, %v1195
    %v1197 = vrot.slane %v1196, 2
    %v1198 = vmax.f32 %v1196, %v1197
    %v1199 = vrot.slane %v1198, 1
    %v1200 = vmax.f32 %v1198, %v1199
    %v1201 = vrot.slane %v977, 4
    %v1202 = vmax.f32 %v977, %v1201
    %v1203 = vrot.slane %v1202, 2
    %v1204 = vmax.f32 %v1202, %v1203
    %v1205 = vrot.slane %v1204, 1
    %v1206 = vmax.f32 %v1204, %v1205
    %v1207 = vrot.slane %v978, 4
    %v1208 = vmax.f32 %v978, %v1207
    %v1209 = vrot.slane %v1208, 2
    %v1210 = vmax.f32 %v1208, %v1209
    %v1211 = vrot.slane %v1210, 1
    %v1212 = vmax.f32 %v1210, %v1211
    %v1213 = vrot.slane %v979, 4
    %v1214 = vmax.f32 %v979, %v1213
    %v1215 = vrot.slane %v1214, 2
    %v1216 = vmax.f32 %v1214, %v1215
    %v1217 = vrot.slane %v1216, 1
    %v1218 = vmax.f32 %v1216, %v1217
    %v1219 = vrot.slane %v980, 4
    %v1220 = vmax.f32 %v980, %v1219
    %v1221 = vrot.slane %v1220, 2
    %v1222 = vmax.f32 %v1220, %v1221
    %v1223 = vrot.slane %v1222, 1
    %v1224 = vmax.f32 %v1222, %v1223
    %v1225 = vrot.slane %v981, 4
    %v1226 = vmax.f32 %v981, %v1225
    %v1227 = vrot.slane %v1226, 2
    %v1228 = vmax.f32 %v1226, %v1227
    %v1229 = vrot.slane %v1228, 1
    %v1230 = vmax.f32 %v1228, %v1229
    %v1231 = vrot.slane %v982, 4
    %v1232 = vmax.f32 %v982, %v1231
    %v1233 = vrot.slane %v1232, 2
    %v1234 = vmax.f32 %v1232, %v1233
    %v1235 = vrot.slane %v1234, 1
    %v1236 = vmax.f32 %v1234, %v1235
    %v1237 = vrot.slane %v983, 4
    %v1238 = vmax.f32 %v983, %v1237
    %v1239 = vrot.slane %v1238, 2
    %v1240 = vmax.f32 %v1238, %v1239
    %v1241 = vrot.slane %v1240, 1
    %v1242 = vmax.f32 %v1240, %v1241
    %v1243 = vrot.slane %v984, 4
    %v1244 = vmax.f32 %v984, %v1243
    %v1245 = vrot.slane %v1244, 2
    %v1246 = vmax.f32 %v1244, %v1245
    %v1247 = vrot.slane %v1246, 1
    %v1248 = vmax.f32 %v1246, %v1247
    %v1249 = vrot.slane %v985, 4
    %v1250 = vmax.f32 %v985, %v1249
    %v1251 = vrot.slane %v1250, 2
    %v1252 = vmax.f32 %v1250, %v1251
    %v1253 = vrot.slane %v1252, 1
    %v1254 = vmax.f32 %v1252, %v1253
    %v1255 = vrot.slane %v986, 4
    %v1256 = vmax.f32 %v986, %v1255
    %v1257 = vrot.slane %v1256, 2
    %v1258 = vmax.f32 %v1256, %v1257
    %v1259 = vrot.slane %v1258, 1
    %v1260 = vmax.f32 %v1258, %v1259
    %v1261 = vrot.slane %v987, 4
    %v1262 = vmax.f32 %v987, %v1261
    %v1263 = vrot.slane %v1262, 2
    %v1264 = vmax.f32 %v1262, %v1263
    %v1265 = vrot.slane %v1264, 1
    %v1266 = vmax.f32 %v1264, %v1265
    %v1267 = vrot.slane %v988, 4
    %v1268 = vmax.f32 %v988, %v1267
    %v1269 = vrot.slane %v1268, 2
    %v1270 = vmax.f32 %v1268, %v1269
    %v1271 = vrot.slane %v1270, 1
    %v1272 = vmax.f32 %v1270, %v1271
    %v1273 = vrot.slane %v989, 4
    %v1274 = vmax.f32 %v989, %v1273
    %v1275 = vrot.slane %v1274, 2
    %v1276 = vmax.f32 %v1274, %v1275
    %v1277 = vrot.slane %v1276, 1
    %v1278 = vmax.f32 %v1276, %v1277
    %v1279 = vrot.slane %v990, 4
    %v1280 = vmax.f32 %v990, %v1279
    %v1281 = vrot.slane %v1280, 2
    %v1282 = vmax.f32 %v1280, %v1281
    %v1283 = vrot.slane %v1282, 1
    %v1284 = vmax.f32 %v1282, %v1283
    %v1285 = vrot.slane %v991, 4
    %v1286 = vmax.f32 %v991, %v1285
    %v1287 = vrot.slane %v1286, 2
    %v1288 = vmax.f32 %v1286, %v1287
    %v1289 = vrot.slane %v1288, 1
    %v1290 = vmax.f32 %v1288, %v1289
    %v1291 = vrot.slane %v992, 4
    %v1292 = vmax.f32 %v992, %v1291
    %v1293 = vrot.slane %v1292, 2
    %v1294 = vmax.f32 %v1292, %v1293
    %v1295 = vrot.slane %v1294, 1
    %v1296 = vmax.f32 %v1294, %v1295
    %v1297 = vrot.slane %v993, 4
    %v1298 = vmax.f32 %v993, %v1297
    %v1299 = vrot.slane %v1298, 2
    %v1300 = vmax.f32 %v1298, %v1299
    %v1301 = vrot.slane %v1300, 1
    %v1302 = vmax.f32 %v1300, %v1301
    %v1303 = vrot.slane %v994, 4
    %v1304 = vmax.f32 %v994, %v1303
    %v1305 = vrot.slane %v1304, 2
    %v1306 = vmax.f32 %v1304, %v1305
    %v1307 = vrot.slane %v1306, 1
    %v1308 = vmax.f32 %v1306, %v1307
    %v1309 = vrot.slane %v995, 4
    %v1310 = vmax.f32 %v995, %v1309
    %v1311 = vrot.slane %v1310, 2
    %v1312 = vmax.f32 %v1310, %v1311
    %v1313 = vrot.slane %v1312, 1
    %v1314 = vmax.f32 %v1312, %v1313
    %v1315 = vrot.slane %v996, 4
    %v1316 = vmax.f32 %v996, %v1315
    %v1317 = vrot.slane %v1316, 2
    %v1318 = vmax.f32 %v1316, %v1317
    %v1319 = vrot.slane %v1318, 1
    %v1320 = vmax.f32 %v1318, %v1319
    %v1321 = vld [vmem:[%s2] sm:$0x1]
    %v1323 = vlaneseq
    %v1324 = vshrl.u32 %v1323, 7
    %v1325 = vsub.s32 0, %v1324
    %v1326 = vrot.slane %v1321, %v1325
    %v1328 = vadd.f32 %v1002, %v1326
    %v1329 = vadd.f32 %v1008, %v1326
    %v1330 = vadd.f32 %v1014, %v1326
    %v1331 = vadd.f32 %v1020, %v1326
    %v1332 = vadd.f32 %v1026, %v1326
    %v1333 = vadd.f32 %v1032, %v1326
    %v1334 = vadd.f32 %v1038, %v1326
    %v1335 = vadd.f32 %v1044, %v1326
    %v1336 = vadd.f32 %v1050, %v1326
    %v1337 = vadd.f32 %v1056, %v1326
    %v1338 = vadd.f32 %v1062, %v1326
    %v1339 = vadd.f32 %v1068, %v1326
    %v1340 = vadd.f32 %v1074, %v1326
    %v1341 = vadd.f32 %v1080, %v1326
    %v1342 = vadd.f32 %v1086, %v1326
    %v1343 = vadd.f32 %v1092, %v1326
    %v1344 = vadd.f32 %v1098, %v1326
    %v1345 = vadd.f32 %v1104, %v1326
    %v1346 = vadd.f32 %v1110, %v1326
    %v1347 = vadd.f32 %v1116, %v1326
    %v1348 = vadd.f32 %v1122, %v1326
    %v1349 = vadd.f32 %v1128, %v1326
    %v1350 = vadd.f32 %v1134, %v1326
    %v1351 = vadd.f32 %v1140, %v1326
    %v1352 = vadd.f32 %v1146, %v1326
    %v1353 = vadd.f32 %v1152, %v1326
    %v1354 = vadd.f32 %v1158, %v1326
    %v1355 = vadd.f32 %v1164, %v1326
    %v1356 = vadd.f32 %v1170, %v1326
    %v1357 = vadd.f32 %v1176, %v1326
    %v1358 = vadd.f32 %v1182, %v1326
    %v1359 = vadd.f32 %v1188, %v1326
    %v1360 = vadd.f32 %v1194, %v1326
    %v1361 = vadd.f32 %v1200, %v1326
    %v1362 = vadd.f32 %v1206, %v1326
    %v1363 = vadd.f32 %v1212, %v1326
    %v1364 = vadd.f32 %v1218, %v1326
    %v1365 = vadd.f32 %v1224, %v1326
    %v1366 = vadd.f32 %v1230, %v1326
    %v1367 = vadd.f32 %v1236, %v1326
    %v1368 = vadd.f32 %v1242, %v1326
    %v1369 = vadd.f32 %v1248, %v1326
    %v1370 = vadd.f32 %v1254, %v1326
    %v1371 = vadd.f32 %v1260, %v1326
    %v1372 = vadd.f32 %v1266, %v1326
    %v1373 = vadd.f32 %v1272, %v1326
    %v1374 = vadd.f32 %v1278, %v1326
    %v1375 = vadd.f32 %v1284, %v1326
    %v1376 = vadd.f32 %v1290, %v1326
    %v1377 = vadd.f32 %v1296, %v1326
    %v1378 = vadd.f32 %v1302, %v1326
    %v1379 = vadd.f32 %v1308, %v1326
    %v1380 = vadd.f32 %v1314, %v1326
    %v1381 = vadd.f32 %v1320, %v1326
    %vm1382 = vcmp.gt.f32.partialorder %v1328, 0.0
    %vm1383 = vcmp.gt.f32.partialorder %v1329, 0.0
    %vm1384 = vcmp.gt.f32.partialorder %v1330, 0.0
    %vm1385 = vcmp.gt.f32.partialorder %v1331, 0.0
    %vm1386 = vcmp.gt.f32.partialorder %v1332, 0.0
    %vm1387 = vcmp.gt.f32.partialorder %v1333, 0.0
    %vm1388 = vcmp.gt.f32.partialorder %v1334, 0.0
    %vm1389 = vcmp.gt.f32.partialorder %v1335, 0.0
    %vm1390 = vcmp.gt.f32.partialorder %v1336, 0.0
    %vm1391 = vcmp.gt.f32.partialorder %v1337, 0.0
    %vm1392 = vcmp.gt.f32.partialorder %v1338, 0.0
    %vm1393 = vcmp.gt.f32.partialorder %v1339, 0.0
    %vm1394 = vcmp.gt.f32.partialorder %v1340, 0.0
    %vm1395 = vcmp.gt.f32.partialorder %v1341, 0.0
    %vm1396 = vcmp.gt.f32.partialorder %v1342, 0.0
    %vm1397 = vcmp.gt.f32.partialorder %v1343, 0.0
    %vm1398 = vcmp.gt.f32.partialorder %v1344, 0.0
    %vm1399 = vcmp.gt.f32.partialorder %v1345, 0.0
    %vm1400 = vcmp.gt.f32.partialorder %v1346, 0.0
    %vm1401 = vcmp.gt.f32.partialorder %v1347, 0.0
    %vm1402 = vcmp.gt.f32.partialorder %v1348, 0.0
    %vm1403 = vcmp.gt.f32.partialorder %v1349, 0.0
    %vm1404 = vcmp.gt.f32.partialorder %v1350, 0.0
    %vm1405 = vcmp.gt.f32.partialorder %v1351, 0.0
    %vm1406 = vcmp.gt.f32.partialorder %v1352, 0.0
    %vm1407 = vcmp.gt.f32.partialorder %v1353, 0.0
    %vm1408 = vcmp.gt.f32.partialorder %v1354, 0.0
    %vm1409 = vcmp.gt.f32.partialorder %v1355, 0.0
    %vm1410 = vcmp.gt.f32.partialorder %v1356, 0.0
    %vm1411 = vcmp.gt.f32.partialorder %v1357, 0.0
    %vm1412 = vcmp.gt.f32.partialorder %v1358, 0.0
    %vm1413 = vcmp.gt.f32.partialorder %v1359, 0.0
    %vm1414 = vcmp.gt.f32.partialorder %v1360, 0.0
    %vm1415 = vcmp.gt.f32.partialorder %v1361, 0.0
    %vm1416 = vcmp.gt.f32.partialorder %v1362, 0.0
    %vm1417 = vcmp.gt.f32.partialorder %v1363, 0.0
    %vm1418 = vcmp.gt.f32.partialorder %v1364, 0.0
    %vm1419 = vcmp.gt.f32.partialorder %v1365, 0.0
    %vm1420 = vcmp.gt.f32.partialorder %v1366, 0.0
    %vm1421 = vcmp.gt.f32.partialorder %v1367, 0.0
    %vm1422 = vcmp.gt.f32.partialorder %v1368, 0.0
    %vm1423 = vcmp.gt.f32.partialorder %v1369, 0.0
    %vm1424 = vcmp.gt.f32.partialorder %v1370, 0.0
    %vm1425 = vcmp.gt.f32.partialorder %v1371, 0.0
    %vm1426 = vcmp.gt.f32.partialorder %v1372, 0.0
    %vm1427 = vcmp.gt.f32.partialorder %v1373, 0.0
    %vm1428 = vcmp.gt.f32.partialorder %v1374, 0.0
    %vm1429 = vcmp.gt.f32.partialorder %v1375, 0.0
    %vm1430 = vcmp.gt.f32.partialorder %v1376, 0.0
    %vm1431 = vcmp.gt.f32.partialorder %v1377, 0.0
    %vm1432 = vcmp.gt.f32.partialorder %v1378, 0.0
    %vm1433 = vcmp.gt.f32.partialorder %v1379, 0.0
    %vm1434 = vcmp.gt.f32.partialorder %v1380, 0.0
    %vm1435 = vcmp.gt.f32.partialorder %v1381, 0.0
    %v1436 = vmul.f32 %v1328, 0.01
    %v1437 = vmul.f32 %v1329, 0.01
    %v1438 = vmul.f32 %v1330, 0.01
    %v1439 = vmul.f32 %v1331, 0.01
    %v1440 = vmul.f32 %v1332, 0.01
    %v1441 = vmul.f32 %v1333, 0.01
    %v1442 = vmul.f32 %v1334, 0.01
    %v1443 = vmul.f32 %v1335, 0.01
    %v1444 = vmul.f32 %v1336, 0.01
    %v1445 = vmul.f32 %v1337, 0.01
    %v1446 = vmul.f32 %v1338, 0.01
    %v1447 = vmul.f32 %v1339, 0.01
    %v1448 = vmul.f32 %v1340, 0.01
    %v1449 = vmul.f32 %v1341, 0.01
    %v1450 = vmul.f32 %v1342, 0.01
    %v1451 = vmul.f32 %v1343, 0.01
    %v1452 = vmul.f32 %v1344, 0.01
    %v1453 = vmul.f32 %v1345, 0.01
    %v1454 = vmul.f32 %v1346, 0.01
    %v1455 = vmul.f32 %v1347, 0.01
    %v1456 = vmul.f32 %v1348, 0.01
    %v1457 = vmul.f32 %v1349, 0.01
    %v1458 = vmul.f32 %v1350, 0.01
    %v1459 = vmul.f32 %v1351, 0.01
    %v1460 = vmul.f32 %v1352, 0.01
    %v1461 = vmul.f32 %v1353, 0.01
    %v1462 = vmul.f32 %v1354, 0.01
    %v1463 = vmul.f32 %v1355, 0.01
    %v1464 = vmul.f32 %v1356, 0.01
    %v1465 = vmul.f32 %v1357, 0.01
    %v1466 = vmul.f32 %v1358, 0.01
    %v1467 = vmul.f32 %v1359, 0.01
    %v1468 = vmul.f32 %v1360, 0.01
    %v1469 = vmul.f32 %v1361, 0.01
    %v1470 = vmul.f32 %v1362, 0.01
    %v1471 = vmul.f32 %v1363, 0.01
    %v1472 = vmul.f32 %v1364, 0.01
    %v1473 = vmul.f32 %v1365, 0.01
    %v1474 = vmul.f32 %v1366, 0.01
    %v1475 = vmul.f32 %v1367, 0.01
    %v1476 = vmul.f32 %v1368, 0.01
    %v1477 = vmul.f32 %v1369, 0.01
    %v1478 = vmul.f32 %v1370, 0.01
    %v1479 = vmul.f32 %v1371, 0.01
    %v1480 = vmul.f32 %v1372, 0.01
    %v1481 = vmul.f32 %v1373, 0.01
    %v1482 = vmul.f32 %v1374, 0.01
    %v1483 = vmul.f32 %v1375, 0.01
    %v1484 = vmul.f32 %v1376, 0.01
    %v1485 = vmul.f32 %v1377, 0.01
    %v1486 = vmul.f32 %v1378, 0.01
    %v1487 = vmul.f32 %v1379, 0.01
    %v1488 = vmul.f32 %v1380, 0.01
    %v1489 = vmul.f32 %v1381, 0.01
    %v1490 = vsel %vm1382, %v1328, %v1436
    %v1491 = vsel %vm1383, %v1329, %v1437
    %v1492 = vsel %vm1384, %v1330, %v1438
    %v1493 = vsel %vm1385, %v1331, %v1439
    %v1494 = vsel %vm1386, %v1332, %v1440
    %v1495 = vsel %vm1387, %v1333, %v1441
    %v1496 = vsel %vm1388, %v1334, %v1442
    %v1497 = vsel %vm1389, %v1335, %v1443
    %v1498 = vsel %vm1390, %v1336, %v1444
    %v1499 = vsel %vm1391, %v1337, %v1445
    %v1500 = vsel %vm1392, %v1338, %v1446
    %v1501 = vsel %vm1393, %v1339, %v1447
    %v1502 = vsel %vm1394, %v1340, %v1448
    %v1503 = vsel %vm1395, %v1341, %v1449
    %v1504 = vsel %vm1396, %v1342, %v1450
    %v1505 = vsel %vm1397, %v1343, %v1451
    %v1506 = vsel %vm1398, %v1344, %v1452
    %v1507 = vsel %vm1399, %v1345, %v1453
    %v1508 = vsel %vm1400, %v1346, %v1454
    %v1509 = vsel %vm1401, %v1347, %v1455
    %v1510 = vsel %vm1402, %v1348, %v1456
    %v1511 = vsel %vm1403, %v1349, %v1457
    %v1512 = vsel %vm1404, %v1350, %v1458
    %v1513 = vsel %vm1405, %v1351, %v1459
    %v1514 = vsel %vm1406, %v1352, %v1460
    %v1515 = vsel %vm1407, %v1353, %v1461
    %v1516 = vsel %vm1408, %v1354, %v1462
    %v1517 = vsel %vm1409, %v1355, %v1463
    %v1518 = vsel %vm1410, %v1356, %v1464
    %v1519 = vsel %vm1411, %v1357, %v1465
    %v1520 = vsel %vm1412, %v1358, %v1466
    %v1521 = vsel %vm1413, %v1359, %v1467
    %v1522 = vsel %vm1414, %v1360, %v1468
    %v1523 = vsel %vm1415, %v1361, %v1469
    %v1524 = vsel %vm1416, %v1362, %v1470
    %v1525 = vsel %vm1417, %v1363, %v1471
    %v1526 = vsel %vm1418, %v1364, %v1472
    %v1527 = vsel %vm1419, %v1365, %v1473
    %v1528 = vsel %vm1420, %v1366, %v1474
    %v1529 = vsel %vm1421, %v1367, %v1475
    %v1530 = vsel %vm1422, %v1368, %v1476
    %v1531 = vsel %vm1423, %v1369, %v1477
    %v1532 = vsel %vm1424, %v1370, %v1478
    %v1533 = vsel %vm1425, %v1371, %v1479
    %v1534 = vsel %vm1426, %v1372, %v1480
    %v1535 = vsel %vm1427, %v1373, %v1481
    %v1536 = vsel %vm1428, %v1374, %v1482
    %v1537 = vsel %vm1429, %v1375, %v1483
    %v1538 = vsel %vm1430, %v1376, %v1484
    %v1539 = vsel %vm1431, %v1377, %v1485
    %v1540 = vsel %vm1432, %v1378, %v1486
    %v1541 = vsel %vm1433, %v1379, %v1487
    %v1542 = vsel %vm1434, %v1380, %v1488
    %v1543 = vsel %vm1435, %v1381, %v1489
    %v1544 = vpack.c.bf16 %v1490, %v1490
    %v1545 = vpack.c.bf16 %v1491, %v1491
    %v1546 = vpack.c.bf16 %v1492, %v1492
    %v1551 = vunpack.c.l.s4 1983009808
    %v1552 = vunpack.c.0.s8 %v1551
    %v1553 = vlaneseq
    %v1554 = vshrl.u32 %v1553, 7
    %v1555 = vsub.s32 %v1552, %v1554
    %v1556 = vrot.slane %v1544, %v1555
    %v1558 = vunpack.c.l.s4 1983009808
    %v1559 = vunpack.c.0.s8 %v1558
    %v1560 = vlaneseq
    %v1561 = vshrl.u32 %v1560, 7
    %v1562 = vsub.s32 %v1559, %v1561
    %v1563 = vrot.slane %v1545, %v1562
    %v1565 = vunpack.c.l.s4 1983009808
    %v1566 = vunpack.c.0.s8 %v1565
    %v1567 = vlaneseq
    %v1568 = vshrl.u32 %v1567, 7
    %v1569 = vsub.s32 %v1566, %v1568
    %v1570 = vrot.slane %v1546, %v1569
    %v1572 = vunpack.c.l.s4 1983009808
    %v1573 = vunpack.c.0.s8 %v1572
    %v1574 = vlaneseq
    %v1575 = vshrl.u32 %v1574, 7
    %v1576 = vsub.s32 %v1573, %v1575
    %v1577 = vrot.slane %v1556, %v1576
    %v1579 = vunpack.c.l.s4 1983009808
    %v1580 = vunpack.c.0.s8 %v1579
    %v1581 = vlaneseq
    %v1582 = vshrl.u32 %v1581, 7
    %v1583 = vsub.s32 %v1580, %v1582
    %v1584 = vrot.slane %v1563, %v1583
    %v1586 = vunpack.c.l.s4 1983009808
    %v1587 = vunpack.c.0.s8 %v1586
    %v1588 = vlaneseq
    %v1589 = vshrl.u32 %v1588, 7
    %v1590 = vsub.s32 %v1587, %v1589
    %v1591 = vrot.slane %v1570, %v1590
    %v1592 = vunpack.c.l.b16 %v1577
    %v1593 = vunpack.c.l.b16 %v1584
    %v1594 = vunpack.c.l.b16 %v1591
    %v1595 = vrot.slane %v1593, 7
    %vm1596 = vcmask 1041409
    %v1597 = vsel %vm1596, %v1595, %v1592
    %v1598 = vrot.slane %v1594, 6
    %vm1599 = vcmask 1042434
    %v1600 = vsel %vm1599, %v1598, %v1597
    %v1601 = vpack.c.b16 %v1600, %v1600
    %v1603 = vunpack.c.l.s4 1983009808
    %v1604 = vunpack.c.0.s8 %v1603
    %v1605 = vlaneseq
    %v1606 = vshrl.u32 %v1605, 7
    %v1607 = vsub.s32 %v1604, %v1606
    %v1608 = vrot.slane %v1601, %v1607
    %vm1610 = vcmask 1041408
    %vm1611 = vsmask.f32 1280
    %vm1612 = vmand %vm1610, %vm1611
    %v1613 = vld [vmem:[#allocation3] sm:$0x3]
    %v1614 = vsel %vm1612, %v1608, %v1613
    %1615 = vst [vmem:[#allocation3] sm:$0x3] %v1614
    %v1616 = vpack.c.bf16 %v1493, %v1493
    %v1617 = vpack.c.bf16 %v1494, %v1494
    %v1618 = vpack.c.bf16 %v1495, %v1495
    %v1623 = vunpack.c.l.s4 1983009808
    %v1624 = vunpack.c.0.s8 %v1623
    %v1625 = vlaneseq
    %v1626 = vshrl.u32 %v1625, 7
    %v1627 = vsub.s32 %v1624, %v1626
    %v1628 = vrot.slane %v1616, %v1627
    %v1630 = vunpack.c.l.s4 1983009808
    %v1631 = vunpack.c.0.s8 %v1630
    %v1632 = vlaneseq
    %v1633 = vshrl.u32 %v1632, 7
    %v1634 = vsub.s32 %v1631, %v1633
    %v1635 = vrot.slane %v1617, %v1634
    %v1637 = vunpack.c.l.s4 1983009808
    %v1638 = vunpack.c.0.s8 %v1637
    %v1639 = vlaneseq
    %v1640 = vshrl.u32 %v1639, 7
    %v1641 = vsub.s32 %v1638, %v1640
    %v1642 = vrot.slane %v1618, %v1641
    %v1644 = vunpack.c.l.s4 1983009808
    %v1645 = vunpack.c.0.s8 %v1644
    %v1646 = vlaneseq
    %v1647 = vshrl.u32 %v1646, 7
    %v1648 = vsub.s32 %v1645, %v1647
    %v1649 = vrot.slane %v1628, %v1648
    %v1651 = vunpack.c.l.s4 1983009808
    %v1652 = vunpack.c.0.s8 %v1651
    %v1653 = vlaneseq
    %v1654 = vshrl.u32 %v1653, 7
    %v1655 = vsub.s32 %v1652, %v1654
    %v1656 = vrot.slane %v1635, %v1655
    %v1658 = vunpack.c.l.s4 1983009808
    %v1659 = vunpack.c.0.s8 %v1658
    %v1660 = vlaneseq
    %v1661 = vshrl.u32 %v1660, 7
    %v1662 = vsub.s32 %v1659, %v1661
    %v1663 = vrot.slane %v1642, %v1662
    %v1664 = vunpack.c.l.b16 %v1649
    %v1665 = vunpack.c.l.b16 %v1656
    %v1666 = vunpack.c.l.b16 %v1663
    %v1667 = vrot.slane %v1665, 7
    %v1668 = vsel %vm1596, %v1667, %v1664
    %v1669 = vrot.slane %v1666, 6
    %v1670 = vsel %vm1599, %v1669, %v1668
    %v1671 = vpack.c.b16 %v1670, %v1670
    %v1673 = vunpack.c.l.s4 1983009808
    %v1674 = vunpack.c.0.s8 %v1673
    %v1675 = vlaneseq
    %v1676 = vshrl.u32 %v1675, 7
    %v1677 = vsub.s32 %v1674, %v1676
    %v1678 = vrot.slane %v1671, %v1677
    %v1680 = vld [vmem:[#allocation3 + $0x2] sm:$0x3]
    %v1681 = vsel %vm1612, %v1678, %v1680
    %1682 = vst [vmem:[#allocation3 + $0x2] sm:$0x3] %v1681
    %v1683 = vpack.c.bf16 %v1496, %v1496
    %v1684 = vpack.c.bf16 %v1497, %v1497
    %v1685 = vpack.c.bf16 %v1498, %v1498
    %v1690 = vunpack.c.l.s4 1983009808
    %v1691 = vunpack.c.0.s8 %v1690
    %v1692 = vlaneseq
    %v1693 = vshrl.u32 %v1692, 7
    %v1694 = vsub.s32 %v1691, %v1693
    %v1695 = vrot.slane %v1683, %v1694
    %v1697 = vunpack.c.l.s4 1983009808
    %v1698 = vunpack.c.0.s8 %v1697
    %v1699 = vlaneseq
    %v1700 = vshrl.u32 %v1699, 7
    %v1701 = vsub.s32 %v1698, %v1700
    %v1702 = vrot.slane %v1684, %v1701
    %v1704 = vunpack.c.l.s4 1983009808
    %v1705 = vunpack.c.0.s8 %v1704
    %v1706 = vlaneseq
    %v1707 = vshrl.u32 %v1706, 7
    %v1708 = vsub.s32 %v1705, %v1707
    %v1709 = vrot.slane %v1685, %v1708
    %v1711 = vunpack.c.l.s4 1983009808
    %v1712 = vunpack.c.0.s8 %v1711
    %v1713 = vlaneseq
    %v1714 = vshrl.u32 %v1713, 7
    %v1715 = vsub.s32 %v1712, %v1714
    %v1716 = vrot.slane %v1695, %v1715
    %v1718 = vunpack.c.l.s4 1983009808
    %v1719 = vunpack.c.0.s8 %v1718
    %v1720 = vlaneseq
    %v1721 = vshrl.u32 %v1720, 7
    %v1722 = vsub.s32 %v1719, %v1721
    %v1723 = vrot.slane %v1702, %v1722
    %v1725 = vunpack.c.l.s4 1983009808
    %v1726 = vunpack.c.0.s8 %v1725
    %v1727 = vlaneseq
    %v1728 = vshrl.u32 %v1727, 7
    %v1729 = vsub.s32 %v1726, %v1728
    %v1730 = vrot.slane %v1709, %v1729
    %v1731 = vunpack.c.l.b16 %v1716
    %v1732 = vunpack.c.l.b16 %v1723
    %v1733 = vunpack.c.l.b16 %v1730
    %v1734 = vrot.slane %v1732, 7
    %v1735 = vsel %vm1596, %v1734, %v1731
    %v1736 = vrot.slane %v1733, 6
    %v1737 = vsel %vm1599, %v1736, %v1735
    %v1738 = vpack.c.b16 %v1737, %v1737
    %v1740 = vunpack.c.l.s4 1983009808
    %v1741 = vunpack.c.0.s8 %v1740
    %v1742 = vlaneseq
    %v1743 = vshrl.u32 %v1742, 7
    %v1744 = vsub.s32 %v1741, %v1743
    %v1745 = vrot.slane %v1738, %v1744
    %v1747 = vld [vmem:[#allocation3 + $0x4] sm:$0x3]
    %v1748 = vsel %vm1612, %v1745, %v1747
    %1749 = vst [vmem:[#allocation3 + $0x4] sm:$0x3] %v1748
    %v1750 = vpack.c.bf16 %v1499, %v1499
    %v1751 = vpack.c.bf16 %v1500, %v1500
    %v1752 = vpack.c.bf16 %v1501, %v1501
    %v1757 = vunpack.c.l.s4 1983009808
    %v1758 = vunpack.c.0.s8 %v1757
    %v1759 = vlaneseq
    %v1760 = vshrl.u32 %v1759, 7
    %v1761 = vsub.s32 %v1758, %v1760
    %v1762 = vrot.slane %v1750, %v1761
    %v1764 = vunpack.c.l.s4 1983009808
    %v1765 = vunpack.c.0.s8 %v1764
    %v1766 = vlaneseq
    %v1767 = vshrl.u32 %v1766, 7
    %v1768 = vsub.s32 %v1765, %v1767
    %v1769 = vrot.slane %v1751, %v1768
    %v1771 = vunpack.c.l.s4 1983009808
    %v1772 = vunpack.c.0.s8 %v1771
    %v1773 = vlaneseq
    %v1774 = vshrl.u32 %v1773, 7
    %v1775 = vsub.s32 %v1772, %v1774
    %v1776 = vrot.slane %v1752, %v1775
    %v1778 = vunpack.c.l.s4 1983009808
    %v1779 = vunpack.c.0.s8 %v1778
    %v1780 = vlaneseq
    %v1781 = vshrl.u32 %v1780, 7
    %v1782 = vsub.s32 %v1779, %v1781
    %v1783 = vrot.slane %v1762, %v1782
    %v1785 = vunpack.c.l.s4 1983009808
    %v1786 = vunpack.c.0.s8 %v1785
    %v1787 = vlaneseq
    %v1788 = vshrl.u32 %v1787, 7
    %v1789 = vsub.s32 %v1786, %v1788
    %v1790 = vrot.slane %v1769, %v1789
    %v1792 = vunpack.c.l.s4 1983009808
    %v1793 = vunpack.c.0.s8 %v1792
    %v1794 = vlaneseq
    %v1795 = vshrl.u32 %v1794, 7
    %v1796 = vsub.s32 %v1793, %v1795
    %v1797 = vrot.slane %v1776, %v1796
    %v1798 = vunpack.c.l.b16 %v1783
    %v1799 = vunpack.c.l.b16 %v1790
    %v1800 = vunpack.c.l.b16 %v1797
    %v1801 = vrot.slane %v1799, 7
    %v1802 = vsel %vm1596, %v1801, %v1798
    %v1803 = vrot.slane %v1800, 6
    %v1804 = vsel %vm1599, %v1803, %v1802
    %v1805 = vpack.c.b16 %v1804, %v1804
    %v1807 = vunpack.c.l.s4 1983009808
    %v1808 = vunpack.c.0.s8 %v1807
    %v1809 = vlaneseq
    %v1810 = vshrl.u32 %v1809, 7
    %v1811 = vsub.s32 %v1808, %v1810
    %v1812 = vrot.slane %v1805, %v1811
    %v1814 = vld [vmem:[#allocation3 + $0x6] sm:$0x3]
    %v1815 = vsel %vm1612, %v1812, %v1814
    %1816 = vst [vmem:[#allocation3 + $0x6] sm:$0x3] %v1815
    %v1817 = vpack.c.bf16 %v1502, %v1502
    %v1818 = vpack.c.bf16 %v1503, %v1503
    %v1819 = vpack.c.bf16 %v1504, %v1504
    %v1824 = vunpack.c.l.s4 1983009808
    %v1825 = vunpack.c.0.s8 %v1824
    %v1826 = vlaneseq
    %v1827 = vshrl.u32 %v1826, 7
    %v1828 = vsub.s32 %v1825, %v1827
    %v1829 = vrot.slane %v1817, %v1828
    %v1831 = vunpack.c.l.s4 1983009808
    %v1832 = vunpack.c.0.s8 %v1831
    %v1833 = vlaneseq
    %v1834 = vshrl.u32 %v1833, 7
    %v1835 = vsub.s32 %v1832, %v1834
    %v1836 = vrot.slane %v1818, %v1835
    %v1838 = vunpack.c.l.s4 1983009808
    %v1839 = vunpack.c.0.s8 %v1838
    %v1840 = vlaneseq
    %v1841 = vshrl.u32 %v1840, 7
    %v1842 = vsub.s32 %v1839, %v1841
    %v1843 = vrot.slane %v1819, %v1842
    %v1845 = vunpack.c.l.s4 1983009808
    %v1846 = vunpack.c.0.s8 %v1845
    %v1847 = vlaneseq
    %v1848 = vshrl.u32 %v1847, 7
    %v1849 = vsub.s32 %v1846, %v1848
    %v1850 = vrot.slane %v1829, %v1849
    %v1852 = vunpack.c.l.s4 1983009808
    %v1853 = vunpack.c.0.s8 %v1852
    %v1854 = vlaneseq
    %v1855 = vshrl.u32 %v1854, 7
    %v1856 = vsub.s32 %v1853, %v1855
    %v1857 = vrot.slane %v1836, %v1856
    %v1859 = vunpack.c.l.s4 1983009808
    %v1860 = vunpack.c.0.s8 %v1859
    %v1861 = vlaneseq
    %v1862 = vshrl.u32 %v1861, 7
    %v1863 = vsub.s32 %v1860, %v1862
    %v1864 = vrot.slane %v1843, %v1863
    %v1865 = vunpack.c.l.b16 %v1850
    %v1866 = vunpack.c.l.b16 %v1857
    %v1867 = vunpack.c.l.b16 %v1864
    %v1868 = vrot.slane %v1866, 7
    %v1869 = vsel %vm1596, %v1868, %v1865
    %v1870 = vrot.slane %v1867, 6
    %v1871 = vsel %vm1599, %v1870, %v1869
    %v1872 = vpack.c.b16 %v1871, %v1871
    %v1874 = vunpack.c.l.s4 1983009808
    %v1875 = vunpack.c.0.s8 %v1874
    %v1876 = vlaneseq
    %v1877 = vshrl.u32 %v1876, 7
    %v1878 = vsub.s32 %v1875, %v1877
    %v1879 = vrot.slane %v1872, %v1878
    %v1881 = vld [vmem:[#allocation3 + $0x8] sm:$0x3]
    %v1882 = vsel %vm1612, %v1879, %v1881
    %1883 = vst [vmem:[#allocation3 + $0x8] sm:$0x3] %v1882
    %v1884 = vpack.c.bf16 %v1505, %v1505
    %v1885 = vpack.c.bf16 %v1506, %v1506
    %v1886 = vpack.c.bf16 %v1507, %v1507
    %v1891 = vunpack.c.l.s4 1983009808
    %v1892 = vunpack.c.0.s8 %v1891
    %v1893 = vlaneseq
    %v1894 = vshrl.u32 %v1893, 7
    %v1895 = vsub.s32 %v1892, %v1894
    %v1896 = vrot.slane %v1884, %v1895
    %v1898 = vunpack.c.l.s4 1983009808
    %v1899 = vunpack.c.0.s8 %v1898
    %v1900 = vlaneseq
    %v1901 = vshrl.u32 %v1900, 7
    %v1902 = vsub.s32 %v1899, %v1901
    %v1903 = vrot.slane %v1885, %v1902
    %v1905 = vunpack.c.l.s4 1983009808
    %v1906 = vunpack.c.0.s8 %v1905
    %v1907 = vlaneseq
    %v1908 = vshrl.u32 %v1907, 7
    %v1909 = vsub.s32 %v1906, %v1908
    %v1910 = vrot.slane %v1886, %v1909
    %v1912 = vunpack.c.l.s4 1983009808
    %v1913 = vunpack.c.0.s8 %v1912
    %v1914 = vlaneseq
    %v1915 = vshrl.u32 %v1914, 7
    %v1916 = vsub.s32 %v1913, %v1915
    %v1917 = vrot.slane %v1896, %v1916
    %v1919 = vunpack.c.l.s4 1983009808
    %v1920 = vunpack.c.0.s8 %v1919
    %v1921 = vlaneseq
    %v1922 = vshrl.u32 %v1921, 7
    %v1923 = vsub.s32 %v1920, %v1922
    %v1924 = vrot.slane %v1903, %v1923
    %v1926 = vunpack.c.l.s4 1983009808
    %v1927 = vunpack.c.0.s8 %v1926
    %v1928 = vlaneseq
    %v1929 = vshrl.u32 %v1928, 7
    %v1930 = vsub.s32 %v1927, %v1929
    %v1931 = vrot.slane %v1910, %v1930
    %v1932 = vunpack.c.l.b16 %v1917
    %v1933 = vunpack.c.l.b16 %v1924
    %v1934 = vunpack.c.l.b16 %v1931
    %v1935 = vrot.slane %v1933, 7
    %v1936 = vsel %vm1596, %v1935, %v1932
    %v1937 = vrot.slane %v1934, 6
    %v1938 = vsel %vm1599, %v1937, %v1936
    %v1939 = vpack.c.b16 %v1938, %v1938
    %v1941 = vunpack.c.l.s4 1983009808
    %v1942 = vunpack.c.0.s8 %v1941
    %v1943 = vlaneseq
    %v1944 = vshrl.u32 %v1943, 7
    %v1945 = vsub.s32 %v1942, %v1944
    %v1946 = vrot.slane %v1939, %v1945
    %v1948 = vld [vmem:[#allocation3 + $0xa] sm:$0x3]
    %v1949 = vsel %vm1612, %v1946, %v1948
    %1950 = vst [vmem:[#allocation3 + $0xa] sm:$0x3] %v1949
    %v1951 = vpack.c.bf16 %v1508, %v1508
    %v1952 = vpack.c.bf16 %v1509, %v1509
    %v1953 = vpack.c.bf16 %v1510, %v1510
    %v1958 = vunpack.c.l.s4 1983009808
    %v1959 = vunpack.c.0.s8 %v1958
    %v1960 = vlaneseq
    %v1961 = vshrl.u32 %v1960, 7
    %v1962 = vsub.s32 %v1959, %v1961
    %v1963 = vrot.slane %v1951, %v1962
    %v1965 = vunpack.c.l.s4 1983009808
    %v1966 = vunpack.c.0.s8 %v1965
    %v1967 = vlaneseq
    %v1968 = vshrl.u32 %v1967, 7
    %v1969 = vsub.s32 %v1966, %v1968
    %v1970 = vrot.slane %v1952, %v1969
    %v1972 = vunpack.c.l.s4 1983009808
    %v1973 = vunpack.c.0.s8 %v1972
    %v1974 = vlaneseq
    %v1975 = vshrl.u32 %v1974, 7
    %v1976 = vsub.s32 %v1973, %v1975
    %v1977 = vrot.slane %v1953, %v1976
    %v1979 = vunpack.c.l.s4 1983009808
    %v1980 = vunpack.c.0.s8 %v1979
    %v1981 = vlaneseq
    %v1982 = vshrl.u32 %v1981, 7
    %v1983 = vsub.s32 %v1980, %v1982
    %v1984 = vrot.slane %v1963, %v1983
    %v1986 = vunpack.c.l.s4 1983009808
    %v1987 = vunpack.c.0.s8 %v1986
    %v1988 = vlaneseq
    %v1989 = vshrl.u32 %v1988, 7
    %v1990 = vsub.s32 %v1987, %v1989
    %v1991 = vrot.slane %v1970, %v1990
    %v1993 = vunpack.c.l.s4 1983009808
    %v1994 = vunpack.c.0.s8 %v1993
    %v1995 = vlaneseq
    %v1996 = vshrl.u32 %v1995, 7
    %v1997 = vsub.s32 %v1994, %v1996
    %v1998 = vrot.slane %v1977, %v1997
    %v1999 = vunpack.c.l.b16 %v1984
    %v2000 = vunpack.c.l.b16 %v1991
    %v2001 = vunpack.c.l.b16 %v1998
    %v2002 = vrot.slane %v2000, 7
    %v2003 = vsel %vm1596, %v2002, %v1999
    %v2004 = vrot.slane %v2001, 6
    %v2005 = vsel %vm1599, %v2004, %v2003
    %v2006 = vpack.c.b16 %v2005, %v2005
    %v2008 = vunpack.c.l.s4 1983009808
    %v2009 = vunpack.c.0.s8 %v2008
    %v2010 = vlaneseq
    %v2011 = vshrl.u32 %v2010, 7
    %v2012 = vsub.s32 %v2009, %v2011
    %v2013 = vrot.slane %v2006, %v2012
    %v2015 = vld [vmem:[#allocation3 + $0xc] sm:$0x3]
    %v2016 = vsel %vm1612, %v2013, %v2015
    %2017 = vst [vmem:[#allocation3 + $0xc] sm:$0x3] %v2016
    %v2018 = vpack.c.bf16 %v1511, %v1511
    %v2019 = vpack.c.bf16 %v1512, %v1512
    %v2020 = vpack.c.bf16 %v1513, %v1513
    %v2025 = vunpack.c.l.s4 1983009808
    %v2026 = vunpack.c.0.s8 %v2025
    %v2027 = vlaneseq
    %v2028 = vshrl.u32 %v2027, 7
    %v2029 = vsub.s32 %v2026, %v2028
    %v2030 = vrot.slane %v2018, %v2029
    %v2032 = vunpack.c.l.s4 1983009808
    %v2033 = vunpack.c.0.s8 %v2032
    %v2034 = vlaneseq
    %v2035 = vshrl.u32 %v2034, 7
    %v2036 = vsub.s32 %v2033, %v2035
    %v2037 = vrot.slane %v2019, %v2036
    %v2039 = vunpack.c.l.s4 1983009808
    %v2040 = vunpack.c.0.s8 %v2039
    %v2041 = vlaneseq
    %v2042 = vshrl.u32 %v2041, 7
    %v2043 = vsub.s32 %v2040, %v2042
    %v2044 = vrot.slane %v2020, %v2043
    %v2046 = vunpack.c.l.s4 1983009808
    %v2047 = vunpack.c.0.s8 %v2046
    %v2048 = vlaneseq
    %v2049 = vshrl.u32 %v2048, 7
    %v2050 = vsub.s32 %v2047, %v2049
    %v2051 = vrot.slane %v2030, %v2050
    %v2053 = vunpack.c.l.s4 1983009808
    %v2054 = vunpack.c.0.s8 %v2053
    %v2055 = vlaneseq
    %v2056 = vshrl.u32 %v2055, 7
    %v2057 = vsub.s32 %v2054, %v2056
    %v2058 = vrot.slane %v2037, %v2057
    %v2060 = vunpack.c.l.s4 1983009808
    %v2061 = vunpack.c.0.s8 %v2060
    %v2062 = vlaneseq
    %v2063 = vshrl.u32 %v2062, 7
    %v2064 = vsub.s32 %v2061, %v2063
    %v2065 = vrot.slane %v2044, %v2064
    %v2066 = vunpack.c.l.b16 %v2051
    %v2067 = vunpack.c.l.b16 %v2058
    %v2068 = vunpack.c.l.b16 %v2065
    %v2069 = vrot.slane %v2067, 7
    %v2070 = vsel %vm1596, %v2069, %v2066
    %v2071 = vrot.slane %v2068, 6
    %v2072 = vsel %vm1599, %v2071, %v2070
    %v2073 = vpack.c.b16 %v2072, %v2072
    %v2075 = vunpack.c.l.s4 1983009808
    %v2076 = vunpack.c.0.s8 %v2075
    %v2077 = vlaneseq
    %v2078 = vshrl.u32 %v2077, 7
    %v2079 = vsub.s32 %v2076, %v2078
    %v2080 = vrot.slane %v2073, %v2079
    %v2082 = vld [vmem:[#allocation3 + $0xe] sm:$0x3]
    %v2083 = vsel %vm1612, %v2080, %v2082
    %2084 = vst [vmem:[#allocation3 + $0xe] sm:$0x3] %v2083
    %v2085 = vpack.c.bf16 %v1514, %v1514
    %v2086 = vpack.c.bf16 %v1515, %v1515
    %v2087 = vpack.c.bf16 %v1516, %v1516
    %v2092 = vunpack.c.l.s4 1983009808
    %v2093 = vunpack.c.0.s8 %v2092
    %v2094 = vlaneseq
    %v2095 = vshrl.u32 %v2094, 7
    %v2096 = vsub.s32 %v2093, %v2095
    %v2097 = vrot.slane %v2085, %v2096
    %v2099 = vunpack.c.l.s4 1983009808
    %v2100 = vunpack.c.0.s8 %v2099
    %v2101 = vlaneseq
    %v2102 = vshrl.u32 %v2101, 7
    %v2103 = vsub.s32 %v2100, %v2102
    %v2104 = vrot.slane %v2086, %v2103
    %v2106 = vunpack.c.l.s4 1983009808
    %v2107 = vunpack.c.0.s8 %v2106
    %v2108 = vlaneseq
    %v2109 = vshrl.u32 %v2108, 7
    %v2110 = vsub.s32 %v2107, %v2109
    %v2111 = vrot.slane %v2087, %v2110
    %v2113 = vunpack.c.l.s4 1983009808
    %v2114 = vunpack.c.0.s8 %v2113
    %v2115 = vlaneseq
    %v2116 = vshrl.u32 %v2115, 7
    %v2117 = vsub.s32 %v2114, %v2116
    %v2118 = vrot.slane %v2097, %v2117
    %v2120 = vunpack.c.l.s4 1983009808
    %v2121 = vunpack.c.0.s8 %v2120
    %v2122 = vlaneseq
    %v2123 = vshrl.u32 %v2122, 7
    %v2124 = vsub.s32 %v2121, %v2123
    %v2125 = vrot.slane %v2104, %v2124
    %v2127 = vunpack.c.l.s4 1983009808
    %v2128 = vunpack.c.0.s8 %v2127
    %v2129 = vlaneseq
    %v2130 = vshrl.u32 %v2129, 7
    %v2131 = vsub.s32 %v2128, %v2130
    %v2132 = vrot.slane %v2111, %v2131
    %v2133 = vunpack.c.l.b16 %v2118
    %v2134 = vunpack.c.l.b16 %v2125
    %v2135 = vunpack.c.l.b16 %v2132
    %v2136 = vrot.slane %v2134, 7
    %v2137 = vsel %vm1596, %v2136, %v2133
    %v2138 = vrot.slane %v2135, 6
    %v2139 = vsel %vm1599, %v2138, %v2137
    %v2140 = vpack.c.b16 %v2139, %v2139
    %v2142 = vunpack.c.l.s4 1983009808
    %v2143 = vunpack.c.0.s8 %v2142
    %v2144 = vlaneseq
    %v2145 = vshrl.u32 %v2144, 7
    %v2146 = vsub.s32 %v2143, %v2145
    %v2147 = vrot.slane %v2140, %v2146
    %v2149 = vld [vmem:[#allocation3 + $0x10] sm:$0x3]
    %v2150 = vsel %vm1612, %v2147, %v2149
    %2151 = vst [vmem:[#allocation3 + $0x10] sm:$0x3] %v2150
    %v2152 = vpack.c.bf16 %v1517, %v1517
    %v2153 = vpack.c.bf16 %v1518, %v1518
    %v2154 = vpack.c.bf16 %v1519, %v1519
    %v2159 = vunpack.c.l.s4 1983009808
    %v2160 = vunpack.c.0.s8 %v2159
    %v2161 = vlaneseq
    %v2162 = vshrl.u32 %v2161, 7
    %v2163 = vsub.s32 %v2160, %v2162
    %v2164 = vrot.slane %v2152, %v2163
    %v2166 = vunpack.c.l.s4 1983009808
    %v2167 = vunpack.c.0.s8 %v2166
    %v2168 = vlaneseq
    %v2169 = vshrl.u32 %v2168, 7
    %v2170 = vsub.s32 %v2167, %v2169
    %v2171 = vrot.slane %v2153, %v2170
    %v2173 = vunpack.c.l.s4 1983009808
    %v2174 = vunpack.c.0.s8 %v2173
    %v2175 = vlaneseq
    %v2176 = vshrl.u32 %v2175, 7
    %v2177 = vsub.s32 %v2174, %v2176
    %v2178 = vrot.slane %v2154, %v2177
    %v2180 = vunpack.c.l.s4 1983009808
    %v2181 = vunpack.c.0.s8 %v2180
    %v2182 = vlaneseq
    %v2183 = vshrl.u32 %v2182, 7
    %v2184 = vsub.s32 %v2181, %v2183
    %v2185 = vrot.slane %v2164, %v2184
    %v2187 = vunpack.c.l.s4 1983009808
    %v2188 = vunpack.c.0.s8 %v2187
    %v2189 = vlaneseq
    %v2190 = vshrl.u32 %v2189, 7
    %v2191 = vsub.s32 %v2188, %v2190
    %v2192 = vrot.slane %v2171, %v2191
    %v2194 = vunpack.c.l.s4 1983009808
    %v2195 = vunpack.c.0.s8 %v2194
    %v2196 = vlaneseq
    %v2197 = vshrl.u32 %v2196, 7
    %v2198 = vsub.s32 %v2195, %v2197
    %v2199 = vrot.slane %v2178, %v2198
    %v2200 = vunpack.c.l.b16 %v2185
    %v2201 = vunpack.c.l.b16 %v2192
    %v2202 = vunpack.c.l.b16 %v2199
    %v2203 = vrot.slane %v2201, 7
    %v2204 = vsel %vm1596, %v2203, %v2200
    %v2205 = vrot.slane %v2202, 6
    %v2206 = vsel %vm1599, %v2205, %v2204
    %v2207 = vpack.c.b16 %v2206, %v2206
    %v2209 = vunpack.c.l.s4 1983009808
    %v2210 = vunpack.c.0.s8 %v2209
    %v2211 = vlaneseq
    %v2212 = vshrl.u32 %v2211, 7
    %v2213 = vsub.s32 %v2210, %v2212
    %v2214 = vrot.slane %v2207, %v2213
    %v2216 = vld [vmem:[#allocation3 + $0x12] sm:$0x3]
    %v2217 = vsel %vm1612, %v2214, %v2216
    %2218 = vst [vmem:[#allocation3 + $0x12] sm:$0x3] %v2217
    %v2219 = vpack.c.bf16 %v1520, %v1520
    %v2220 = vpack.c.bf16 %v1521, %v1521
    %v2221 = vpack.c.bf16 %v1522, %v1522
    %v2226 = vunpack.c.l.s4 1983009808
    %v2227 = vunpack.c.0.s8 %v2226
    %v2228 = vlaneseq
    %v2229 = vshrl.u32 %v2228, 7
    %v2230 = vsub.s32 %v2227, %v2229
    %v2231 = vrot.slane %v2219, %v2230
    %v2233 = vunpack.c.l.s4 1983009808
    %v2234 = vunpack.c.0.s8 %v2233
    %v2235 = vlaneseq
    %v2236 = vshrl.u32 %v2235, 7
    %v2237 = vsub.s32 %v2234, %v2236
    %v2238 = vrot.slane %v2220, %v2237
    %v2240 = vunpack.c.l.s4 1983009808
    %v2241 = vunpack.c.0.s8 %v2240
    %v2242 = vlaneseq
    %v2243 = vshrl.u32 %v2242, 7
    %v2244 = vsub.s32 %v2241, %v2243
    %v2245 = vrot.slane %v2221, %v2244
    %v2247 = vunpack.c.l.s4 1983009808
    %v2248 = vunpack.c.0.s8 %v2247
    %v2249 = vlaneseq
    %v2250 = vshrl.u32 %v2249, 7
    %v2251 = vsub.s32 %v2248, %v2250
    %v2252 = vrot.slane %v2231, %v2251
    %v2254 = vunpack.c.l.s4 1983009808
    %v2255 = vunpack.c.0.s8 %v2254
    %v2256 = vlaneseq
    %v2257 = vshrl.u32 %v2256, 7
    %v2258 = vsub.s32 %v2255, %v2257
    %v2259 = vrot.slane %v2238, %v2258
    %v2261 = vunpack.c.l.s4 1983009808
    %v2262 = vunpack.c.0.s8 %v2261
    %v2263 = vlaneseq
    %v2264 = vshrl.u32 %v2263, 7
    %v2265 = vsub.s32 %v2262, %v2264
    %v2266 = vrot.slane %v2245, %v2265
    %v2267 = vunpack.c.l.b16 %v2252
    %v2268 = vunpack.c.l.b16 %v2259
    %v2269 = vunpack.c.l.b16 %v2266
    %v2270 = vrot.slane %v2268, 7
    %v2271 = vsel %vm1596, %v2270, %v2267
    %v2272 = vrot.slane %v2269, 6
    %v2273 = vsel %vm1599, %v2272, %v2271
    %v2274 = vpack.c.b16 %v2273, %v2273
    %v2276 = vunpack.c.l.s4 1983009808
    %v2277 = vunpack.c.0.s8 %v2276
    %v2278 = vlaneseq
    %v2279 = vshrl.u32 %v2278, 7
    %v2280 = vsub.s32 %v2277, %v2279
    %v2281 = vrot.slane %v2274, %v2280
    %v2283 = vld [vmem:[#allocation3 + $0x14] sm:$0x3]
    %v2284 = vsel %vm1612, %v2281, %v2283
    %2285 = vst [vmem:[#allocation3 + $0x14] sm:$0x3] %v2284
    %v2286 = vpack.c.bf16 %v1523, %v1523
    %v2287 = vpack.c.bf16 %v1524, %v1524
    %v2288 = vpack.c.bf16 %v1525, %v1525
    %v2293 = vunpack.c.l.s4 1983009808
    %v2294 = vunpack.c.0.s8 %v2293
    %v2295 = vlaneseq
    %v2296 = vshrl.u32 %v2295, 7
    %v2297 = vsub.s32 %v2294, %v2296
    %v2298 = vrot.slane %v2286, %v2297
    %v2300 = vunpack.c.l.s4 1983009808
    %v2301 = vunpack.c.0.s8 %v2300
    %v2302 = vlaneseq
    %v2303 = vshrl.u32 %v2302, 7
    %v2304 = vsub.s32 %v2301, %v2303
    %v2305 = vrot.slane %v2287, %v2304
    %v2307 = vunpack.c.l.s4 1983009808
    %v2308 = vunpack.c.0.s8 %v2307
    %v2309 = vlaneseq
    %v2310 = vshrl.u32 %v2309, 7
    %v2311 = vsub.s32 %v2308, %v2310
    %v2312 = vrot.slane %v2288, %v2311
    %v2314 = vunpack.c.l.s4 1983009808
    %v2315 = vunpack.c.0.s8 %v2314
    %v2316 = vlaneseq
    %v2317 = vshrl.u32 %v2316, 7
    %v2318 = vsub.s32 %v2315, %v2317
    %v2319 = vrot.slane %v2298, %v2318
    %v2321 = vunpack.c.l.s4 1983009808
    %v2322 = vunpack.c.0.s8 %v2321
    %v2323 = vlaneseq
    %v2324 = vshrl.u32 %v2323, 7
    %v2325 = vsub.s32 %v2322, %v2324
    %v2326 = vrot.slane %v2305, %v2325
    %v2328 = vunpack.c.l.s4 1983009808
    %v2329 = vunpack.c.0.s8 %v2328
    %v2330 = vlaneseq
    %v2331 = vshrl.u32 %v2330, 7
    %v2332 = vsub.s32 %v2329, %v2331
    %v2333 = vrot.slane %v2312, %v2332
    %v2334 = vunpack.c.l.b16 %v2319
    %v2335 = vunpack.c.l.b16 %v2326
    %v2336 = vunpack.c.l.b16 %v2333
    %v2337 = vrot.slane %v2335, 7
    %v2338 = vsel %vm1596, %v2337, %v2334
    %v2339 = vrot.slane %v2336, 6
    %v2340 = vsel %vm1599, %v2339, %v2338
    %v2341 = vpack.c.b16 %v2340, %v2340
    %v2343 = vunpack.c.l.s4 1983009808
    %v2344 = vunpack.c.0.s8 %v2343
    %v2345 = vlaneseq
    %v2346 = vshrl.u32 %v2345, 7
    %v2347 = vsub.s32 %v2344, %v2346
    %v2348 = vrot.slane %v2341, %v2347
    %v2350 = vld [vmem:[#allocation3 + $0x16] sm:$0x3]
    %v2351 = vsel %vm1612, %v2348, %v2350
    %2352 = vst [vmem:[#allocation3 + $0x16] sm:$0x3] %v2351
    %v2353 = vpack.c.bf16 %v1526, %v1526
    %v2354 = vpack.c.bf16 %v1527, %v1527
    %v2355 = vpack.c.bf16 %v1528, %v1528
    %v2360 = vunpack.c.l.s4 1983009808
    %v2361 = vunpack.c.0.s8 %v2360
    %v2362 = vlaneseq
    %v2363 = vshrl.u32 %v2362, 7
    %v2364 = vsub.s32 %v2361, %v2363
    %v2365 = vrot.slane %v2353, %v2364
    %v2367 = vunpack.c.l.s4 1983009808
    %v2368 = vunpack.c.0.s8 %v2367
    %v2369 = vlaneseq
    %v2370 = vshrl.u32 %v2369, 7
    %v2371 = vsub.s32 %v2368, %v2370
    %v2372 = vrot.slane %v2354, %v2371
    %v2374 = vunpack.c.l.s4 1983009808
    %v2375 = vunpack.c.0.s8 %v2374
    %v2376 = vlaneseq
    %v2377 = vshrl.u32 %v2376, 7
    %v2378 = vsub.s32 %v2375, %v2377
    %v2379 = vrot.slane %v2355, %v2378
    %v2381 = vunpack.c.l.s4 1983009808
    %v2382 = vunpack.c.0.s8 %v2381
    %v2383 = vlaneseq
    %v2384 = vshrl.u32 %v2383, 7
    %v2385 = vsub.s32 %v2382, %v2384
    %v2386 = vrot.slane %v2365, %v2385
    %v2388 = vunpack.c.l.s4 1983009808
    %v2389 = vunpack.c.0.s8 %v2388
    %v2390 = vlaneseq
    %v2391 = vshrl.u32 %v2390, 7
    %v2392 = vsub.s32 %v2389, %v2391
    %v2393 = vrot.slane %v2372, %v2392
    %v2395 = vunpack.c.l.s4 1983009808
    %v2396 = vunpack.c.0.s8 %v2395
    %v2397 = vlaneseq
    %v2398 = vshrl.u32 %v2397, 7
    %v2399 = vsub.s32 %v2396, %v2398
    %v2400 = vrot.slane %v2379, %v2399
    %v2401 = vunpack.c.l.b16 %v2386
    %v2402 = vunpack.c.l.b16 %v2393
    %v2403 = vunpack.c.l.b16 %v2400
    %v2404 = vrot.slane %v2402, 7
    %v2405 = vsel %vm1596, %v2404, %v2401
    %v2406 = vrot.slane %v2403, 6
    %v2407 = vsel %vm1599, %v2406, %v2405
    %v2408 = vpack.c.b16 %v2407, %v2407
    %v2410 = vunpack.c.l.s4 1983009808
    %v2411 = vunpack.c.0.s8 %v2410
    %v2412 = vlaneseq
    %v2413 = vshrl.u32 %v2412, 7
    %v2414 = vsub.s32 %v2411, %v2413
    %v2415 = vrot.slane %v2408, %v2414
    %v2417 = vld [vmem:[#allocation3 + $0x18] sm:$0x3]
    %v2418 = vsel %vm1612, %v2415, %v2417
    %2419 = vst [vmem:[#allocation3 + $0x18] sm:$0x3] %v2418
    %v2420 = vpack.c.bf16 %v1529, %v1529
    %v2421 = vpack.c.bf16 %v1530, %v1530
    %v2422 = vpack.c.bf16 %v1531, %v1531
    %v2427 = vunpack.c.l.s4 1983009808
    %v2428 = vunpack.c.0.s8 %v2427
    %v2429 = vlaneseq
    %v2430 = vshrl.u32 %v2429, 7
    %v2431 = vsub.s32 %v2428, %v2430
    %v2432 = vrot.slane %v2420, %v2431
    %v2434 = vunpack.c.l.s4 1983009808
    %v2435 = vunpack.c.0.s8 %v2434
    %v2436 = vlaneseq
    %v2437 = vshrl.u32 %v2436, 7
    %v2438 = vsub.s32 %v2435, %v2437
    %v2439 = vrot.slane %v2421, %v2438
    %v2441 = vunpack.c.l.s4 1983009808
    %v2442 = vunpack.c.0.s8 %v2441
    %v2443 = vlaneseq
    %v2444 = vshrl.u32 %v2443, 7
    %v2445 = vsub.s32 %v2442, %v2444
    %v2446 = vrot.slane %v2422, %v2445
    %v2448 = vunpack.c.l.s4 1983009808
    %v2449 = vunpack.c.0.s8 %v2448
    %v2450 = vlaneseq
    %v2451 = vshrl.u32 %v2450, 7
    %v2452 = vsub.s32 %v2449, %v2451
    %v2453 = vrot.slane %v2432, %v2452
    %v2455 = vunpack.c.l.s4 1983009808
    %v2456 = vunpack.c.0.s8 %v2455
    %v2457 = vlaneseq
    %v2458 = vshrl.u32 %v2457, 7
    %v2459 = vsub.s32 %v2456, %v2458
    %v2460 = vrot.slane %v2439, %v2459
    %v2462 = vunpack.c.l.s4 1983009808
    %v2463 = vunpack.c.0.s8 %v2462
    %v2464 = vlaneseq
    %v2465 = vshrl.u32 %v2464, 7
    %v2466 = vsub.s32 %v2463, %v2465
    %v2467 = vrot.slane %v2446, %v2466
    %v2468 = vunpack.c.l.b16 %v2453
    %v2469 = vunpack.c.l.b16 %v2460
    %v2470 = vunpack.c.l.b16 %v2467
    %v2471 = vrot.slane %v2469, 7
    %v2472 = vsel %vm1596, %v2471, %v2468
    %v2473 = vrot.slane %v2470, 6
    %v2474 = vsel %vm1599, %v2473, %v2472
    %v2475 = vpack.c.b16 %v2474, %v2474
    %v2477 = vunpack.c.l.s4 1983009808
    %v2478 = vunpack.c.0.s8 %v2477
    %v2479 = vlaneseq
    %v2480 = vshrl.u32 %v2479, 7
    %v2481 = vsub.s32 %v2478, %v2480
    %v2482 = vrot.slane %v2475, %v2481
    %v2484 = vld [vmem:[#allocation3 + $0x1a] sm:$0x3]
    %v2485 = vsel %vm1612, %v2482, %v2484
    %2486 = vst [vmem:[#allocation3 + $0x1a] sm:$0x3] %v2485
    %v2487 = vpack.c.bf16 %v1532, %v1532
    %v2488 = vpack.c.bf16 %v1533, %v1533
    %v2489 = vpack.c.bf16 %v1534, %v1534
    %v2494 = vunpack.c.l.s4 1983009808
    %v2495 = vunpack.c.0.s8 %v2494
    %v2496 = vlaneseq
    %v2497 = vshrl.u32 %v2496, 7
    %v2498 = vsub.s32 %v2495, %v2497
    %v2499 = vrot.slane %v2487, %v2498
    %v2501 = vunpack.c.l.s4 1983009808
    %v2502 = vunpack.c.0.s8 %v2501
    %v2503 = vlaneseq
    %v2504 = vshrl.u32 %v2503, 7
    %v2505 = vsub.s32 %v2502, %v2504
    %v2506 = vrot.slane %v2488, %v2505
    %v2508 = vunpack.c.l.s4 1983009808
    %v2509 = vunpack.c.0.s8 %v2508
    %v2510 = vlaneseq
    %v2511 = vshrl.u32 %v2510, 7
    %v2512 = vsub.s32 %v2509, %v2511
    %v2513 = vrot.slane %v2489, %v2512
    %v2515 = vunpack.c.l.s4 1983009808
    %v2516 = vunpack.c.0.s8 %v2515
    %v2517 = vlaneseq
    %v2518 = vshrl.u32 %v2517, 7
    %v2519 = vsub.s32 %v2516, %v2518
    %v2520 = vrot.slane %v2499, %v2519
    %v2522 = vunpack.c.l.s4 1983009808
    %v2523 = vunpack.c.0.s8 %v2522
    %v2524 = vlaneseq
    %v2525 = vshrl.u32 %v2524, 7
    %v2526 = vsub.s32 %v2523, %v2525
    %v2527 = vrot.slane %v2506, %v2526
    %v2529 = vunpack.c.l.s4 1983009808
    %v2530 = vunpack.c.0.s8 %v2529
    %v2531 = vlaneseq
    %v2532 = vshrl.u32 %v2531, 7
    %v2533 = vsub.s32 %v2530, %v2532
    %v2534 = vrot.slane %v2513, %v2533
    %v2535 = vunpack.c.l.b16 %v2520
    %v2536 = vunpack.c.l.b16 %v2527
    %v2537 = vunpack.c.l.b16 %v2534
    %v2538 = vrot.slane %v2536, 7
    %v2539 = vsel %vm1596, %v2538, %v2535
    %v2540 = vrot.slane %v2537, 6
    %v2541 = vsel %vm1599, %v2540, %v2539
    %v2542 = vpack.c.b16 %v2541, %v2541
    %v2544 = vunpack.c.l.s4 1983009808
    %v2545 = vunpack.c.0.s8 %v2544
    %v2546 = vlaneseq
    %v2547 = vshrl.u32 %v2546, 7
    %v2548 = vsub.s32 %v2545, %v2547
    %v2549 = vrot.slane %v2542, %v2548
    %v2551 = vld [vmem:[#allocation3 + $0x1c] sm:$0x3]
    %v2552 = vsel %vm1612, %v2549, %v2551
    %2553 = vst [vmem:[#allocation3 + $0x1c] sm:$0x3] %v2552
    %v2554 = vpack.c.bf16 %v1535, %v1535
    %v2555 = vpack.c.bf16 %v1536, %v1536
    %v2556 = vpack.c.bf16 %v1537, %v1537
    %v2561 = vunpack.c.l.s4 1983009808
    %v2562 = vunpack.c.0.s8 %v2561
    %v2563 = vlaneseq
    %v2564 = vshrl.u32 %v2563, 7
    %v2565 = vsub.s32 %v2562, %v2564
    %v2566 = vrot.slane %v2554, %v2565
    %v2568 = vunpack.c.l.s4 1983009808
    %v2569 = vunpack.c.0.s8 %v2568
    %v2570 = vlaneseq
    %v2571 = vshrl.u32 %v2570, 7
    %v2572 = vsub.s32 %v2569, %v2571
    %v2573 = vrot.slane %v2555, %v2572
    %v2575 = vunpack.c.l.s4 1983009808
    %v2576 = vunpack.c.0.s8 %v2575
    %v2577 = vlaneseq
    %v2578 = vshrl.u32 %v2577, 7
    %v2579 = vsub.s32 %v2576, %v2578
    %v2580 = vrot.slane %v2556, %v2579
    %v2582 = vunpack.c.l.s4 1983009808
    %v2583 = vunpack.c.0.s8 %v2582
    %v2584 = vlaneseq
    %v2585 = vshrl.u32 %v2584, 7
    %v2586 = vsub.s32 %v2583, %v2585
    %v2587 = vrot.slane %v2566, %v2586
    %v2589 = vunpack.c.l.s4 1983009808
    %v2590 = vunpack.c.0.s8 %v2589
    %v2591 = vlaneseq
    %v2592 = vshrl.u32 %v2591, 7
    %v2593 = vsub.s32 %v2590, %v2592
    %v2594 = vrot.slane %v2573, %v2593
    %v2596 = vunpack.c.l.s4 1983009808
    %v2597 = vunpack.c.0.s8 %v2596
    %v2598 = vlaneseq
    %v2599 = vshrl.u32 %v2598, 7
    %v2600 = vsub.s32 %v2597, %v2599
    %v2601 = vrot.slane %v2580, %v2600
    %v2602 = vunpack.c.l.b16 %v2587
    %v2603 = vunpack.c.l.b16 %v2594
    %v2604 = vunpack.c.l.b16 %v2601
    %v2605 = vrot.slane %v2603, 7
    %v2606 = vsel %vm1596, %v2605, %v2602
    %v2607 = vrot.slane %v2604, 6
    %v2608 = vsel %vm1599, %v2607, %v2606
    %v2609 = vpack.c.b16 %v2608, %v2608
    %v2611 = vunpack.c.l.s4 1983009808
    %v2612 = vunpack.c.0.s8 %v2611
    %v2613 = vlaneseq
    %v2614 = vshrl.u32 %v2613, 7
    %v2615 = vsub.s32 %v2612, %v2614
    %v2616 = vrot.slane %v2609, %v2615
    %v2618 = vld [vmem:[#allocation3 + $0x1e] sm:$0x3]
    %v2619 = vsel %vm1612, %v2616, %v2618
    %2620 = vst [vmem:[#allocation3 + $0x1e] sm:$0x3] %v2619
    %v2621 = vpack.c.bf16 %v1538, %v1538
    %v2622 = vpack.c.bf16 %v1539, %v1539
    %v2623 = vpack.c.bf16 %v1540, %v1540
    %v2628 = vunpack.c.l.s4 1983009808
    %v2629 = vunpack.c.0.s8 %v2628
    %v2630 = vlaneseq
    %v2631 = vshrl.u32 %v2630, 7
    %v2632 = vsub.s32 %v2629, %v2631
    %v2633 = vrot.slane %v2621, %v2632
    %v2635 = vunpack.c.l.s4 1983009808
    %v2636 = vunpack.c.0.s8 %v2635
    %v2637 = vlaneseq
    %v2638 = vshrl.u32 %v2637, 7
    %v2639 = vsub.s32 %v2636, %v2638
    %v2640 = vrot.slane %v2622, %v2639
    %v2642 = vunpack.c.l.s4 1983009808
    %v2643 = vunpack.c.0.s8 %v2642
    %v2644 = vlaneseq
    %v2645 = vshrl.u32 %v2644, 7
    %v2646 = vsub.s32 %v2643, %v2645
    %v2647 = vrot.slane %v2623, %v2646
    %v2649 = vunpack.c.l.s4 1983009808
    %v2650 = vunpack.c.0.s8 %v2649
    %v2651 = vlaneseq
    %v2652 = vshrl.u32 %v2651, 7
    %v2653 = vsub.s32 %v2650, %v2652
    %v2654 = vrot.slane %v2633, %v2653
    %v2656 = vunpack.c.l.s4 1983009808
    %v2657 = vunpack.c.0.s8 %v2656
    %v2658 = vlaneseq
    %v2659 = vshrl.u32 %v2658, 7
    %v2660 = vsub.s32 %v2657, %v2659
    %v2661 = vrot.slane %v2640, %v2660
    %v2663 = vunpack.c.l.s4 1983009808
    %v2664 = vunpack.c.0.s8 %v2663
    %v2665 = vlaneseq
    %v2666 = vshrl.u32 %v2665, 7
    %v2667 = vsub.s32 %v2664, %v2666
    %v2668 = vrot.slane %v2647, %v2667
    %v2669 = vunpack.c.l.b16 %v2654
    %v2670 = vunpack.c.l.b16 %v2661
    %v2671 = vunpack.c.l.b16 %v2668
    %v2672 = vrot.slane %v2670, 7
    %v2673 = vsel %vm1596, %v2672, %v2669
    %v2674 = vrot.slane %v2671, 6
    %v2675 = vsel %vm1599, %v2674, %v2673
    %v2676 = vpack.c.b16 %v2675, %v2675
    %v2678 = vunpack.c.l.s4 1983009808
    %v2679 = vunpack.c.0.s8 %v2678
    %v2680 = vlaneseq
    %v2681 = vshrl.u32 %v2680, 7
    %v2682 = vsub.s32 %v2679, %v2681
    %v2683 = vrot.slane %v2676, %v2682
    %v2685 = vld [vmem:[#allocation3 + $0x20] sm:$0x3]
    %v2686 = vsel %vm1612, %v2683, %v2685
    %2687 = vst [vmem:[#allocation3 + $0x20] sm:$0x3] %v2686
    %v2688 = vpack.c.bf16 %v1541, %v1541
    %v2689 = vpack.c.bf16 %v1542, %v1542
    %v2690 = vpack.c.bf16 %v1543, %v1543
    %v2695 = vunpack.c.l.s4 1983009808
    %v2696 = vunpack.c.0.s8 %v2695
    %v2697 = vlaneseq
    %v2698 = vshrl.u32 %v2697, 7
    %v2699 = vsub.s32 %v2696, %v2698
    %v2700 = vrot.slane %v2688, %v2699
    %v2702 = vunpack.c.l.s4 1983009808
    %v2703 = vunpack.c.0.s8 %v2702
    %v2704 = vlaneseq
    %v2705 = vshrl.u32 %v2704, 7
    %v2706 = vsub.s32 %v2703, %v2705
    %v2707 = vrot.slane %v2689, %v2706
    %v2709 = vunpack.c.l.s4 1983009808
    %v2710 = vunpack.c.0.s8 %v2709
    %v2711 = vlaneseq
    %v2712 = vshrl.u32 %v2711, 7
    %v2713 = vsub.s32 %v2710, %v2712
    %v2714 = vrot.slane %v2690, %v2713
    %v2716 = vunpack.c.l.s4 1983009808
    %v2717 = vunpack.c.0.s8 %v2716
    %v2718 = vlaneseq
    %v2719 = vshrl.u32 %v2718, 7
    %v2720 = vsub.s32 %v2717, %v2719
    %v2721 = vrot.slane %v2700, %v2720
    %v2723 = vunpack.c.l.s4 1983009808
    %v2724 = vunpack.c.0.s8 %v2723
    %v2725 = vlaneseq
    %v2726 = vshrl.u32 %v2725, 7
    %v2727 = vsub.s32 %v2724, %v2726
    %v2728 = vrot.slane %v2707, %v2727
    %v2730 = vunpack.c.l.s4 1983009808
    %v2731 = vunpack.c.0.s8 %v2730
    %v2732 = vlaneseq
    %v2733 = vshrl.u32 %v2732, 7
    %v2734 = vsub.s32 %v2731, %v2733
    %v2735 = vrot.slane %v2714, %v2734
    %v2736 = vunpack.c.l.b16 %v2721
    %v2737 = vunpack.c.l.b16 %v2728
    %v2738 = vunpack.c.l.b16 %v2735
    %v2739 = vrot.slane %v2737, 7
    %v2740 = vsel %vm1596, %v2739, %v2736
    %v2741 = vrot.slane %v2738, 6
    %v2742 = vsel %vm1599, %v2741, %v2740
    %v2743 = vpack.c.b16 %v2742, %v2742
    %v2745 = vunpack.c.l.s4 1983009808
    %v2746 = vunpack.c.0.s8 %v2745
    %v2747 = vlaneseq
    %v2748 = vshrl.u32 %v2747, 7
    %v2749 = vsub.s32 %v2746, %v2748
    %v2750 = vrot.slane %v2743, %v2749
    %v2752 = vld [vmem:[#allocation3 + $0x22] sm:$0x3]
    %v2753 = vsel %vm1612, %v2750, %v2752
    %2754 = vst [vmem:[#allocation3 + $0x22] sm:$0x3] %v2753
    %s2755 = smul.u32 4, 288
    %s2756 = smul.u32 %s2755, 1
    %s2757 = sshll.u32 %s2756, 4
    %2758 = dma.done [#allocation5], %s2757
    %v2759 = vld [vmem:[#allocation3] sm:$0xff]
    %v2760 = vld [vmem:[#allocation3 + $0x8] sm:$0xff]
    %v2761 = vld [vmem:[#allocation3 + $0x10] sm:$0xff]
    %v2762 = vld [vmem:[#allocation3 + $0x18] sm:$0xff]
    %v2763 = vld [vmem:[#allocation3 + $0x20] sm:$0xf]
    %v2764 = vld [vmem:[#allocation4] sm:$0xff]
    %v2765 = vld [vmem:[#allocation4 + $0x8] sm:$0xff]
    %v2766 = vld [vmem:[#allocation4 + $0x10] sm:$0xff]
    %v2767 = vld [vmem:[#allocation4 + $0x18] sm:$0xff]
    %v2768 = vld [vmem:[#allocation4 + $0x20] sm:$0xff]
    %v2769 = vld [vmem:[#allocation4 + $0x28] sm:$0xff]
    %v2770 = vld [vmem:[#allocation4 + $0x30] sm:$0xff]
    %v2771 = vld [vmem:[#allocation4 + $0x38] sm:$0xff]
    %v2772 = vld [vmem:[#allocation4 + $0x40] sm:$0xff]
    %v2773 = vld [vmem:[#allocation4 + $0x48] sm:$0xff]
    %v2774 = vld [vmem:[#allocation4 + $0x50] sm:$0xff]
    %v2775 = vld [vmem:[#allocation4 + $0x58] sm:$0xff]
    %v2776 = vld [vmem:[#allocation4 + $0x60] sm:$0xff]
    %v2777 = vld [vmem:[#allocation4 + $0x68] sm:$0xff]
    %v2778 = vld [vmem:[#allocation4 + $0x70] sm:$0xff]
    %v2779 = vld [vmem:[#allocation4 + $0x78] sm:$0xff]
    %v2780 = vld [vmem:[#allocation4 + $0x80] sm:$0xff]
    %v2781 = vld [vmem:[#allocation4 + $0x88] sm:$0xff]
    %v2782 = vld [vmem:[#allocation4 + $0x90] sm:$0xff]
    %v2783 = vld [vmem:[#allocation4 + $0x98] sm:$0xff]
    %v2784 = vld [vmem:[#allocation4 + $0xa0] sm:$0xff]
    %v2785 = vld [vmem:[#allocation4 + $0xa8] sm:$0xff]
    %v2786 = vld [vmem:[#allocation4 + $0xb0] sm:$0xff]
    %v2787 = vld [vmem:[#allocation4 + $0xb8] sm:$0xff]
    %v2788 = vld [vmem:[#allocation4 + $0xc0] sm:$0xff]
    %v2789 = vld [vmem:[#allocation4 + $0xc8] sm:$0xff]
    %v2790 = vld [vmem:[#allocation4 + $0xd0] sm:$0xff]
    %v2791 = vld [vmem:[#allocation4 + $0xd8] sm:$0xff]
    %v2792 = vld [vmem:[#allocation4 + $0xe0] sm:$0xff]
    %v2793 = vld [vmem:[#allocation4 + $0xe8] sm:$0xff]
    %v2794 = vld [vmem:[#allocation4 + $0xf0] sm:$0xff]
    %v2795 = vld [vmem:[#allocation4 + $0xf8] sm:$0xff]
    %v2796 = vld [vmem:[#allocation4 + $0x100] sm:$0xff]
    %v2797 = vld [vmem:[#allocation4 + $0x108] sm:$0xff]
    %v2798 = vld [vmem:[#allocation4 + $0x110] sm:$0xff]
    %v2799 = vld [vmem:[#allocation4 + $0x118] sm:$0xff]
    %v2800 = vld [vmem:[#allocation4 + $0x120] sm:$0xff]
    %v2801 = vld [vmem:[#allocation4 + $0x128] sm:$0xff]
    %v2802 = vld [vmem:[#allocation4 + $0x130] sm:$0xff]
    %v2803 = vld [vmem:[#allocation4 + $0x138] sm:$0xff]
    %v2804 = vld [vmem:[#allocation4 + $0x140] sm:$0xff]
    %v2805 = vld [vmem:[#allocation4 + $0x148] sm:$0xff]
    %v2806 = vld [vmem:[#allocation4 + $0x150] sm:$0xff]
    %v2807 = vld [vmem:[#allocation4 + $0x158] sm:$0xff]
    %v2808 = vld [vmem:[#allocation4 + $0x160] sm:$0xff]
    %v2809 = vld [vmem:[#allocation4 + $0x168] sm:$0xff]
    %v2810 = vld [vmem:[#allocation4 + $0x170] sm:$0xff]
    %v2811 = vld [vmem:[#allocation4 + $0x178] sm:$0xff]
    %v2812 = vld [vmem:[#allocation4 + $0x180] sm:$0xff]
    %v2813 = vld [vmem:[#allocation4 + $0x188] sm:$0xff]
    %v2814 = vld [vmem:[#allocation4 + $0x190] sm:$0xff]
    %v2815 = vld [vmem:[#allocation4 + $0x198] sm:$0xff]
    %v2816 = vld [vmem:[#allocation4 + $0x1a0] sm:$0xff]
    %v2817 = vld [vmem:[#allocation4 + $0x1a8] sm:$0xff]
    %v2818 = vld [vmem:[#allocation4 + $0x1b0] sm:$0xff]
    %v2819 = vld [vmem:[#allocation4 + $0x1b8] sm:$0xff]
    %v2820 = vld [vmem:[#allocation4 + $0x1c0] sm:$0xff]
    %v2821 = vld [vmem:[#allocation4 + $0x1c8] sm:$0xff]
    %v2822 = vld [vmem:[#allocation4 + $0x1d0] sm:$0xff]
    %v2823 = vld [vmem:[#allocation4 + $0x1d8] sm:$0xff]
    %v2824 = vld [vmem:[#allocation4 + $0x1e0] sm:$0xff]
    %v2825 = vld [vmem:[#allocation4 + $0x1e8] sm:$0xff]
    %v2826 = vld [vmem:[#allocation4 + $0x1f0] sm:$0xff]
    %v2827 = vld [vmem:[#allocation4 + $0x1f8] sm:$0xff]
    %v2828 = vld [vmem:[#allocation4 + $0x200] sm:$0xff]
    %v2829 = vld [vmem:[#allocation4 + $0x208] sm:$0xff]
    %v2830 = vld [vmem:[#allocation4 + $0x210] sm:$0xff]
    %v2831 = vld [vmem:[#allocation4 + $0x218] sm:$0xff]
    %v2832 = vld [vmem:[#allocation4 + $0x220] sm:$0xff]
    %v2833 = vld [vmem:[#allocation4 + $0x228] sm:$0xff]
    %v2834 = vld [vmem:[#allocation4 + $0x230] sm:$0xff]
    %v2835 = vld [vmem:[#allocation4 + $0x238] sm:$0xff]
    %v2836 = vld [vmem:[#allocation4 + $0x240] sm:$0xff]
    %v2837 = vld [vmem:[#allocation4 + $0x248] sm:$0xff]
    %v2838 = vld [vmem:[#allocation4 + $0x250] sm:$0xff]
    %v2839 = vld [vmem:[#allocation4 + $0x258] sm:$0xff]
    %v2840 = vld [vmem:[#allocation4 + $0x260] sm:$0xff]
    %v2841 = vld [vmem:[#allocation4 + $0x268] sm:$0xff]
    %v2842 = vld [vmem:[#allocation4 + $0x270] sm:$0xff]
    %v2843 = vld [vmem:[#allocation4 + $0x278] sm:$0xff]
    %v2844 = vld [vmem:[#allocation4 + $0x280] sm:$0xff]
    %v2845 = vld [vmem:[#allocation4 + $0x288] sm:$0xff]
    %v2846 = vld [vmem:[#allocation4 + $0x290] sm:$0xff]
    %v2847 = vld [vmem:[#allocation4 + $0x298] sm:$0xff]
    %v2848 = vld [vmem:[#allocation4 + $0x2a0] sm:$0xff]
    %v2849 = vld [vmem:[#allocation4 + $0x2a8] sm:$0xff]
    %v2850 = vld [vmem:[#allocation4 + $0x2b0] sm:$0xff]
    %v2851 = vld [vmem:[#allocation4 + $0x2b8] sm:$0xff]
    %v2852 = vld [vmem:[#allocation4 + $0x2c0] sm:$0xff]
    %v2853 = vld [vmem:[#allocation4 + $0x2c8] sm:$0xff]
    %v2854 = vld [vmem:[#allocation4 + $0x2d0] sm:$0xff]
    %v2855 = vld [vmem:[#allocation4 + $0x2d8] sm:$0xff]
    %v2856 = vld [vmem:[#allocation4 + $0x2e0] sm:$0xff]
    %v2857 = vld [vmem:[#allocation4 + $0x2e8] sm:$0xff]
    %v2858 = vld [vmem:[#allocation4 + $0x2f0] sm:$0xff]
    %v2859 = vld [vmem:[#allocation4 + $0x2f8] sm:$0xff]
    %v2860 = vld [vmem:[#allocation4 + $0x300] sm:$0xff]
    %v2861 = vld [vmem:[#allocation4 + $0x308] sm:$0xff]
    %v2862 = vld [vmem:[#allocation4 + $0x310] sm:$0xff]
    %v2863 = vld [vmem:[#allocation4 + $0x318] sm:$0xff]
    %v2864 = vld [vmem:[#allocation4 + $0x320] sm:$0xff]
    %v2865 = vld [vmem:[#allocation4 + $0x328] sm:$0xff]
    %v2866 = vld [vmem:[#allocation4 + $0x330] sm:$0xff]
    %v2867 = vld [vmem:[#allocation4 + $0x338] sm:$0xff]
    %v2868 = vld [vmem:[#allocation4 + $0x340] sm:$0xff]
    %v2869 = vld [vmem:[#allocation4 + $0x348] sm:$0xff]
    %v2870 = vld [vmem:[#allocation4 + $0x350] sm:$0xff]
    %v2871 = vld [vmem:[#allocation4 + $0x358] sm:$0xff]
    %v2872 = vld [vmem:[#allocation4 + $0x360] sm:$0xff]
    %v2873 = vld [vmem:[#allocation4 + $0x368] sm:$0xff]
    %v2874 = vld [vmem:[#allocation4 + $0x370] sm:$0xff]
    %v2875 = vld [vmem:[#allocation4 + $0x378] sm:$0xff]
    %v2876 = vld [vmem:[#allocation4 + $0x380] sm:$0xff]
    %v2877 = vld [vmem:[#allocation4 + $0x388] sm:$0xff]
    %v2878 = vld [vmem:[#allocation4 + $0x390] sm:$0xff]
    %v2879 = vld [vmem:[#allocation4 + $0x398] sm:$0xff]
    %v2880 = vld [vmem:[#allocation4 + $0x3a0] sm:$0xff]
    %v2881 = vld [vmem:[#allocation4 + $0x3a8] sm:$0xff]
    %v2882 = vld [vmem:[#allocation4 + $0x3b0] sm:$0xff]
    %v2883 = vld [vmem:[#allocation4 + $0x3b8] sm:$0xff]
    %v2884 = vld [vmem:[#allocation4 + $0x3c0] sm:$0xff]
    %v2885 = vld [vmem:[#allocation4 + $0x3c8] sm:$0xff]
    %v2886 = vld [vmem:[#allocation4 + $0x3d0] sm:$0xff]
    %v2887 = vld [vmem:[#allocation4 + $0x3d8] sm:$0xff]
    %v2888 = vld [vmem:[#allocation4 + $0x3e0] sm:$0xff]
    %v2889 = vld [vmem:[#allocation4 + $0x3e8] sm:$0xff]
    %v2890 = vld [vmem:[#allocation4 + $0x3f0] sm:$0xff]
    %v2891 = vld [vmem:[#allocation4 + $0x3f8] sm:$0xff]
    %v2892 = vld [vmem:[#allocation4 + $0x400] sm:$0xff]
    %v2893 = vld [vmem:[#allocation4 + $0x408] sm:$0xff]
    %v2894 = vld [vmem:[#allocation4 + $0x410] sm:$0xff]
    %v2895 = vld [vmem:[#allocation4 + $0x418] sm:$0xff]
    %v2896 = vld [vmem:[#allocation4 + $0x420] sm:$0xff]
    %v2897 = vld [vmem:[#allocation4 + $0x428] sm:$0xff]
    %v2898 = vld [vmem:[#allocation4 + $0x430] sm:$0xff]
    %v2899 = vld [vmem:[#allocation4 + $0x438] sm:$0xff]
    %v2900 = vld [vmem:[#allocation4 + $0x440] sm:$0xff]
    %v2901 = vld [vmem:[#allocation4 + $0x448] sm:$0xff]
    %v2902 = vld [vmem:[#allocation4 + $0x450] sm:$0xff]
    %v2903 = vld [vmem:[#allocation4 + $0x458] sm:$0xff]
    %v2904 = vld [vmem:[#allocation4 + $0x460] sm:$0xff]
    %v2905 = vld [vmem:[#allocation4 + $0x468] sm:$0xff]
    %v2906 = vld [vmem:[#allocation4 + $0x470] sm:$0xff]
    %v2907 = vld [vmem:[#allocation4 + $0x478] sm:$0xff]
    %v2908 = vld [vmem:[%s4] sm:$0x1]
    %v2910 = vlaneseq
    %v2911 = vshrl.u32 %v2910, 7
    %v2912 = vsub.s32 0, %v2911
    %v2913 = vrot.slane %v2908, %v2912
    %v2920 = vcombine.high %v2759, %v2759
    %v2922 = vunpack.c.l.s4 1983009808
    %v2923 = vunpack.c.0.s8 %v2922
    %v2924 = vlaneseq
    %v2925 = vshrl.u32 %v2924, 7
    %v2926 = vsub.s32 %v2923, %v2925
    %v2927 = vrot.slane %v2759, %v2926
    %v2929 = vunpack.c.l.s4 1983009808
    %v2930 = vunpack.c.0.s8 %v2929
    %v2931 = vlaneseq
    %v2932 = vshrl.u32 %v2931, 7
    %v2933 = vsub.s32 %v2930, %v2932
    %v2934 = vrot.slane %v2920, %v2933
    %v2935 = vcombine.high %v2927, %v2927
    %v2936 = vcombine.high %v2934, %v2934
    %v2937 = vcombine.high %v2760, %v2760
    %v2939 = vunpack.c.l.s4 1983009808
    %v2940 = vunpack.c.0.s8 %v2939
    %v2941 = vlaneseq
    %v2942 = vshrl.u32 %v2941, 7
    %v2943 = vsub.s32 %v2940, %v2942
    %v2944 = vrot.slane %v2760, %v2943
    %v2946 = vunpack.c.l.s4 1983009808
    %v2947 = vunpack.c.0.s8 %v2946
    %v2948 = vlaneseq
    %v2949 = vshrl.u32 %v2948, 7
    %v2950 = vsub.s32 %v2947, %v2949
    %v2951 = vrot.slane %v2937, %v2950
    %v2952 = vcombine.high %v2944, %v2944
    %v2953 = vcombine.high %v2951, %v2951
    %v2954 = vcombine.high %v2761, %v2761
    %v2956 = vunpack.c.l.s4 1983009808
    %v2957 = vunpack.c.0.s8 %v2956
    %v2958 = vlaneseq
    %v2959 = vshrl.u32 %v2958, 7
    %v2960 = vsub.s32 %v2957, %v2959
    %v2961 = vrot.slane %v2761, %v2960
    %v2963 = vunpack.c.l.s4 1983009808
    %v2964 = vunpack.c.0.s8 %v2963
    %v2965 = vlaneseq
    %v2966 = vshrl.u32 %v2965, 7
    %v2967 = vsub.s32 %v2964, %v2966
    %v2968 = vrot.slane %v2954, %v2967
    %v2969 = vcombine.high %v2961, %v2961
    %v2970 = vcombine.high %v2968, %v2968
    %v2971 = vcombine.high %v2762, %v2762
    %v2973 = vunpack.c.l.s4 1983009808
    %v2974 = vunpack.c.0.s8 %v2973
    %v2975 = vlaneseq
    %v2976 = vshrl.u32 %v2975, 7
    %v2977 = vsub.s32 %v2974, %v2976
    %v2978 = vrot.slane %v2762, %v2977
    %v2980 = vunpack.c.l.s4 1983009808
    %v2981 = vunpack.c.0.s8 %v2980
    %v2982 = vlaneseq
    %v2983 = vshrl.u32 %v2982, 7
    %v2984 = vsub.s32 %v2981, %v2983
    %v2985 = vrot.slane %v2971, %v2984
    %v2986 = vcombine.high %v2978, %v2978
    %v2987 = vcombine.high %v2985, %v2985
    %v2989 = vunpack.c.l.s4 1983009808
    %v2990 = vunpack.c.0.s8 %v2989
    %v2991 = vlaneseq
    %v2992 = vshrl.u32 %v2991, 7
    %v2993 = vsub.s32 %v2990, %v2992
    %v2994 = vrot.slane %v2763, %v2993
    %v2995 = vcombine.high %v2994, %v2994
    %3014 = vmatprep.subr.bf16.mxu0 0
    %3015 = vmatpush1.bf16.msra.mxu0 %v2764
    %3016 = vmatprep.subr.bf16.mxu0 0
    %3017 = vmatpush1.bf16.msra.mxu0 %v2765
    %3018 = vmatprep.subr.bf16.mxu0 0
    %3019 = vmatpush1.bf16.msra.mxu0 %v2766
    %3020 = vmatprep.subr.bf16.mxu0 0
    %3021 = vmatpush1.bf16.msra.mxu0 %v2767
    %3022 = vmatprep.subr.bf16.mxu0 0
    %3023 = vmatpush1.bf16.msra.mxu0 %v2768
    %3024 = vmatprep.subr.bf16.mxu0 0
    %3025 = vmatpush1.bf16.msra.mxu0 %v2769
    %3026 = vmatprep.subr.bf16.mxu0 0
    %3027 = vmatpush1.bf16.msra.mxu0 %v2770
    %3028 = vmatprep.subr.bf16.mxu0 0
    %3029 = vmatpush1.bf16.msra.mxu0 %v2771
    %3030 = vmatprep.subr.bf16.mxu0 0
    %3031 = vmatpush1.bf16.msra.mxu0 %v2772
    %3032 = vmatprep.subr.bf16.mxu0 0
    %3033 = vmatpush1.bf16.msra.mxu0 %v2773
    %3034 = vmatprep.subr.bf16.mxu0 0
    %3035 = vmatpush1.bf16.msra.mxu0 %v2774
    %3036 = vmatprep.subr.bf16.mxu0 0
    %3037 = vmatpush1.bf16.msra.mxu0 %v2775
    %3038 = vmatprep.subr.bf16.mxu0 0
    %3039 = vmatpush1.bf16.msra.mxu0 %v2776
    %3040 = vmatprep.subr.bf16.mxu0 0
    %3041 = vmatpush1.bf16.msra.mxu0 %v2777
    %3042 = vmatprep.subr.bf16.mxu0 0
    %3043 = vmatpush1.bf16.msra.mxu0 %v2778
    %3044 = vmatprep.subr.bf16.mxu0 0
    %3045 = vmatpush1.bf16.msra.mxu0 %v2779
    %3046 = vmatprep.mubr.bf16.mxu0 %v2935
    %3047 = vmatmul.mubr.bf16.gmra.mrb[0].mxu0 %v2927
    %v3048 = vpop.f32.mrb[0].mxu0
    %v3049 = vadd.f32 %v2913, %v3048
    %v3050 = vpop.f32.mrb[0].mxu0
    %v3051 = vpop.f32.mrb[0].mxu0
    %v3052 = vpop.f32.mrb[0].mxu0
    %3053 = vdwg.mxu0
    %3054 = vmatprep.subr.bf16.mxu0 0
    %3055 = vmatpush1.bf16.msra.mxu0 %v2780
    %3056 = vmatprep.subr.bf16.mxu0 0
    %3057 = vmatpush1.bf16.msra.mxu0 %v2781
    %3058 = vmatprep.subr.bf16.mxu0 0
    %3059 = vmatpush1.bf16.msra.mxu0 %v2782
    %3060 = vmatprep.subr.bf16.mxu0 0
    %3061 = vmatpush1.bf16.msra.mxu0 %v2783
    %3062 = vmatprep.subr.bf16.mxu0 0
    %3063 = vmatpush1.bf16.msra.mxu0 %v2784
    %3064 = vmatprep.subr.bf16.mxu0 0
    %3065 = vmatpush1.bf16.msra.mxu0 %v2785
    %3066 = vmatprep.subr.bf16.mxu0 0
    %3067 = vmatpush1.bf16.msra.mxu0 %v2786
    %3068 = vmatprep.subr.bf16.mxu0 0
    %3069 = vmatpush1.bf16.msra.mxu0 %v2787
    %3070 = vmatprep.subr.bf16.mxu0 0
    %3071 = vmatpush1.bf16.msra.mxu0 %v2788
    %3072 = vmatprep.subr.bf16.mxu0 0
    %3073 = vmatpush1.bf16.msra.mxu0 %v2789
    %3074 = vmatprep.subr.bf16.mxu0 0
    %3075 = vmatpush1.bf16.msra.mxu0 %v2790
    %3076 = vmatprep.subr.bf16.mxu0 0
    %3077 = vmatpush1.bf16.msra.mxu0 %v2791
    %3078 = vmatprep.subr.bf16.mxu0 0
    %3079 = vmatpush1.bf16.msra.mxu0 %v2792
    %3080 = vmatprep.subr.bf16.mxu0 0
    %3081 = vmatpush1.bf16.msra.mxu0 %v2793
    %3082 = vmatprep.subr.bf16.mxu0 0
    %3083 = vmatpush1.bf16.msra.mxu0 %v2794
    %3084 = vmatprep.subr.bf16.mxu0 0
    %3085 = vmatpush1.bf16.msra.mxu0 %v2795
    %3086 = vmatprep.mubr.bf16.mxu0 %v2936
    %3087 = vmatmul.mubr.bf16.gmra.mrb[0].mxu0 %v2934
    %v3088 = vpop.f32.mrb[0].mxu0
    %v3089 = vadd.f32 %v3049, %v3088
    %v3090 = vpop.f32.mrb[0].mxu0
    %v3091 = vpop.f32.mrb[0].mxu0
    %v3092 = vpop.f32.mrb[0].mxu0
    %3093 = vdwg.mxu0
    %3094 = vmatprep.subr.bf16.mxu0 0
    %3095 = vmatpush1.bf16.msra.mxu0 %v2796
    %3096 = vmatprep.subr.bf16.mxu0 0
    %3097 = vmatpush1.bf16.msra.mxu0 %v2797
    %3098 = vmatprep.subr.bf16.mxu0 0
    %3099 = vmatpush1.bf16.msra.mxu0 %v2798
    %3100 = vmatprep.subr.bf16.mxu0 0
    %3101 = vmatpush1.bf16.msra.mxu0 %v2799
    %3102 = vmatprep.subr.bf16.mxu0 0
    %3103 = vmatpush1.bf16.msra.mxu0 %v2800
    %3104 = vmatprep.subr.bf16.mxu0 0
    %3105 = vmatpush1.bf16.msra.mxu0 %v2801
    %3106 = vmatprep.subr.bf16.mxu0 0
    %3107 = vmatpush1.bf16.msra.mxu0 %v2802
    %3108 = vmatprep.subr.bf16.mxu0 0
    %3109 = vmatpush1.bf16.msra.mxu0 %v2803
    %3110 = vmatprep.subr.bf16.mxu0 0
    %3111 = vmatpush1.bf16.msra.mxu0 %v2804
    %3112 = vmatprep.subr.bf16.mxu0 0
    %3113 = vmatpush1.bf16.msra.mxu0 %v2805
    %3114 = vmatprep.subr.bf16.mxu0 0
    %3115 = vmatpush1.bf16.msra.mxu0 %v2806
    %3116 = vmatprep.subr.bf16.mxu0 0
    %3117 = vmatpush1.bf16.msra.mxu0 %v2807
    %3118 = vmatprep.subr.bf16.mxu0 0
    %3119 = vmatpush1.bf16.msra.mxu0 %v2808
    %3120 = vmatprep.subr.bf16.mxu0 0
    %3121 = vmatpush1.bf16.msra.mxu0 %v2809
    %3122 = vmatprep.subr.bf16.mxu0 0
    %3123 = vmatpush1.bf16.msra.mxu0 %v2810
    %3124 = vmatprep.subr.bf16.mxu0 0
    %3125 = vmatpush1.bf16.msra.mxu0 %v2811
    %3126 = vmatprep.mubr.bf16.mxu0 %v2952
    %3127 = vmatmul.mubr.bf16.gmra.mrb[0].mxu0 %v2944
    %v3128 = vpop.f32.mrb[0].mxu0
    %v3129 = vadd.f32 %v3089, %v3128
    %v3130 = vpop.f32.mrb[0].mxu0
    %v3131 = vpop.f32.mrb[0].mxu0
    %v3132 = vpop.f32.mrb[0].mxu0
    %3133 = vdwg.mxu0
    %3134 = vmatprep.subr.bf16.mxu0 0
    %3135 = vmatpush1.bf16.msra.mxu0 %v2812
    %3136 = vmatprep.subr.bf16.mxu0 0
    %3137 = vmatpush1.bf16.msra.mxu0 %v2813
    %3138 = vmatprep.subr.bf16.mxu0 0
    %3139 = vmatpush1.bf16.msra.mxu0 %v2814
    %3140 = vmatprep.subr.bf16.mxu0 0
    %3141 = vmatpush1.bf16.msra.mxu0 %v2815
    %3142 = vmatprep.subr.bf16.mxu0 0
    %3143 = vmatpush1.bf16.msra.mxu0 %v2816
    %3144 = vmatprep.subr.bf16.mxu0 0
    %3145 = vmatpush1.bf16.msra.mxu0 %v2817
    %3146 = vmatprep.subr.bf16.mxu0 0
    %3147 = vmatpush1.bf16.msra.mxu0 %v2818
    %3148 = vmatprep.subr.bf16.mxu0 0
    %3149 = vmatpush1.bf16.msra.mxu0 %v2819
    %3150 = vmatprep.subr.bf16.mxu0 0
    %3151 = vmatpush1.bf16.msra.mxu0 %v2820
    %3152 = vmatprep.subr.bf16.mxu0 0
    %3153 = vmatpush1.bf16.msra.mxu0 %v2821
    %3154 = vmatprep.subr.bf16.mxu0 0
    %3155 = vmatpush1.bf16.msra.mxu0 %v2822
    %3156 = vmatprep.subr.bf16.mxu0 0
    %3157 = vmatpush1.bf16.msra.mxu0 %v2823
    %3158 = vmatprep.subr.bf16.mxu0 0
    %3159 = vmatpush1.bf16.msra.mxu0 %v2824
    %3160 = vmatprep.subr.bf16.mxu0 0
    %3161 = vmatpush1.bf16.msra.mxu0 %v2825
    %3162 = vmatprep.subr.bf16.mxu0 0
    %3163 = vmatpush1.bf16.msra.mxu0 %v2826
    %3164 = vmatprep.subr.bf16.mxu0 0
    %3165 = vmatpush1.bf16.msra.mxu0 %v2827
    %3166 = vmatprep.mubr.bf16.mxu0 %v2953
    %3167 = vmatmul.mubr.bf16.gmra.mrb[0].mxu0 %v2951
    %v3168 = vpop.f32.mrb[0].mxu0
    %v3169 = vadd.f32 %v3129, %v3168
    %v3170 = vpop.f32.mrb[0].mxu0
    %v3171 = vpop.f32.mrb[0].mxu0
    %v3172 = vpop.f32.mrb[0].mxu0
    %3173 = vdwg.mxu0
    %3174 = vmatprep.subr.bf16.mxu0 0
    %3175 = vmatpush1.bf16.msra.mxu0 %v2828
    %3176 = vmatprep.subr.bf16.mxu0 0
    %3177 = vmatpush1.bf16.msra.mxu0 %v2829
    %3178 = vmatprep.subr.bf16.mxu0 0
    %3179 = vmatpush1.bf16.msra.mxu0 %v2830
    %3180 = vmatprep.subr.bf16.mxu0 0
    %3181 = vmatpush1.bf16.msra.mxu0 %v2831
    %3182 = vmatprep.subr.bf16.mxu0 0
    %3183 = vmatpush1.bf16.msra.mxu0 %v2832
    %3184 = vmatprep.subr.bf16.mxu0 0
    %3185 = vmatpush1.bf16.msra.mxu0 %v2833
    %3186 = vmatprep.subr.bf16.mxu0 0
    %3187 = vmatpush1.bf16.msra.mxu0 %v2834
    %3188 = vmatprep.subr.bf16.mxu0 0
    %3189 = vmatpush1.bf16.msra.mxu0 %v2835
    %3190 = vmatprep.subr.bf16.mxu0 0
    %3191 = vmatpush1.bf16.msra.mxu0 %v2836
    %3192 = vmatprep.subr.bf16.mxu0 0
    %3193 = vmatpush1.bf16.msra.mxu0 %v2837
    %3194 = vmatprep.subr.bf16.mxu0 0
    %3195 = vmatpush1.bf16.msra.mxu0 %v2838
    %3196 = vmatprep.subr.bf16.mxu0 0
    %3197 = vmatpush1.bf16.msra.mxu0 %v2839
    %3198 = vmatprep.subr.bf16.mxu0 0
    %3199 = vmatpush1.bf16.msra.mxu0 %v2840
    %3200 = vmatprep.subr.bf16.mxu0 0
    %3201 = vmatpush1.bf16.msra.mxu0 %v2841
    %3202 = vmatprep.subr.bf16.mxu0 0
    %3203 = vmatpush1.bf16.msra.mxu0 %v2842
    %3204 = vmatprep.subr.bf16.mxu0 0
    %3205 = vmatpush1.bf16.msra.mxu0 %v2843
    %3206 = vmatprep.mubr.bf16.mxu0 %v2969
    %3207 = vmatmul.mubr.bf16.gmra.mrb[0].mxu0 %v2961
    %v3208 = vpop.f32.mrb[0].mxu0
    %v3209 = vadd.f32 %v3169, %v3208
    %v3210 = vpop.f32.mrb[0].mxu0
    %v3211 = vpop.f32.mrb[0].mxu0
    %v3212 = vpop.f32.mrb[0].mxu0
    %3213 = vdwg.mxu0
    %3214 = vmatprep.subr.bf16.mxu0 0
    %3215 = vmatpush1.bf16.msra.mxu0 %v2844
    %3216 = vmatprep.subr.bf16.mxu0 0
    %3217 = vmatpush1.bf16.msra.mxu0 %v2845
    %3218 = vmatprep.subr.bf16.mxu0 0
    %3219 = vmatpush1.bf16.msra.mxu0 %v2846
    %3220 = vmatprep.subr.bf16.mxu0 0
    %3221 = vmatpush1.bf16.msra.mxu0 %v2847
    %3222 = vmatprep.subr.bf16.mxu0 0
    %3223 = vmatpush1.bf16.msra.mxu0 %v2848
    %3224 = vmatprep.subr.bf16.mxu0 0
    %3225 = vmatpush1.bf16.msra.mxu0 %v2849
    %3226 = vmatprep.subr.bf16.mxu0 0
    %3227 = vmatpush1.bf16.msra.mxu0 %v2850
    %3228 = vmatprep.subr.bf16.mxu0 0
    %3229 = vmatpush1.bf16.msra.mxu0 %v2851
    %3230 = vmatprep.subr.bf16.mxu0 0
    %3231 = vmatpush1.bf16.msra.mxu0 %v2852
    %3232 = vmatprep.subr.bf16.mxu0 0
    %3233 = vmatpush1.bf16.msra.mxu0 %v2853
    %3234 = vmatprep.subr.bf16.mxu0 0
    %3235 = vmatpush1.bf16.msra.mxu0 %v2854
    %3236 = vmatprep.subr.bf16.mxu0 0
    %3237 = vmatpush1.bf16.msra.mxu0 %v2855
    %3238 = vmatprep.subr.bf16.mxu0 0
    %3239 = vmatpush1.bf16.msra.mxu0 %v2856
    %3240 = vmatprep.subr.bf16.mxu0 0
    %3241 = vmatpush1.bf16.msra.mxu0 %v2857
    %3242 = vmatprep.subr.bf16.mxu0 0
    %3243 = vmatpush1.bf16.msra.mxu0 %v2858
    %3244 = vmatprep.subr.bf16.mxu0 0
    %3245 = vmatpush1.bf16.msra.mxu0 %v2859
    %3246 = vmatprep.mubr.bf16.mxu0 %v2970
    %3247 = vmatmul.mubr.bf16.gmra.mrb[0].mxu0 %v2968
    %v3248 = vpop.f32.mrb[0].mxu0
    %v3249 = vadd.f32 %v3209, %v3248
    %v3250 = vpop.f32.mrb[0].mxu0
    %v3251 = vpop.f32.mrb[0].mxu0
    %v3252 = vpop.f32.mrb[0].mxu0
    %3253 = vdwg.mxu0
    %3254 = vmatprep.subr.bf16.mxu0 0
    %3255 = vmatpush1.bf16.msra.mxu0 %v2860
    %3256 = vmatprep.subr.bf16.mxu0 0
    %3257 = vmatpush1.bf16.msra.mxu0 %v2861
    %3258 = vmatprep.subr.bf16.mxu0 0
    %3259 = vmatpush1.bf16.msra.mxu0 %v2862
    %3260 = vmatprep.subr.bf16.mxu0 0
    %3261 = vmatpush1.bf16.msra.mxu0 %v2863
    %3262 = vmatprep.subr.bf16.mxu0 0
    %3263 = vmatpush1.bf16.msra.mxu0 %v2864
    %3264 = vmatprep.subr.bf16.mxu0 0
    %3265 = vmatpush1.bf16.msra.mxu0 %v2865
    %3266 = vmatprep.subr.bf16.mxu0 0
    %3267 = vmatpush1.bf16.msra.mxu0 %v2866
    %3268 = vmatprep.subr.bf16.mxu0 0
    %3269 = vmatpush1.bf16.msra.mxu0 %v2867
    %3270 = vmatprep.subr.bf16.mxu0 0
    %3271 = vmatpush1.bf16.msra.mxu0 %v2868
    %3272 = vmatprep.subr.bf16.mxu0 0
    %3273 = vmatpush1.bf16.msra.mxu0 %v2869
    %3274 = vmatprep.subr.bf16.mxu0 0
    %3275 = vmatpush1.bf16.msra.mxu0 %v2870
    %3276 = vmatprep.subr.bf16.mxu0 0
    %3277 = vmatpush1.bf16.msra.mxu0 %v2871
    %3278 = vmatprep.subr.bf16.mxu0 0
    %3279 = vmatpush1.bf16.msra.mxu0 %v2872
    %3280 = vmatprep.subr.bf16.mxu0 0
    %3281 = vmatpush1.bf16.msra.mxu0 %v2873
    %3282 = vmatprep.subr.bf16.mxu0 0
    %3283 = vmatpush1.bf16.msra.mxu0 %v2874
    %3284 = vmatprep.subr.bf16.mxu0 0
    %3285 = vmatpush1.bf16.msra.mxu0 %v2875
    %3286 = vmatprep.mubr.bf16.mxu0 %v2986
    %3287 = vmatmul.mubr.bf16.gmra.mrb[0].mxu0 %v2978
    %v3288 = vpop.f32.mrb[0].mxu0
    %v3289 = vadd.f32 %v3249, %v3288
    %v3290 = vpop.f32.mrb[0].mxu0
    %v3291 = vpop.f32.mrb[0].mxu0
    %v3292 = vpop.f32.mrb[0].mxu0
    %3293 = vdwg.mxu0
    %3294 = vmatprep.subr.bf16.mxu0 0
    %3295 = vmatpush1.bf16.msra.mxu0 %v2876
    %3296 = vmatprep.subr.bf16.mxu0 0
    %3297 = vmatpush1.bf16.msra.mxu0 %v2877
    %3298 = vmatprep.subr.bf16.mxu0 0
    %3299 = vmatpush1.bf16.msra.mxu0 %v2878
    %3300 = vmatprep.subr.bf16.mxu0 0
    %3301 = vmatpush1.bf16.msra.mxu0 %v2879
    %3302 = vmatprep.subr.bf16.mxu0 0
    %3303 = vmatpush1.bf16.msra.mxu0 %v2880
    %3304 = vmatprep.subr.bf16.mxu0 0
    %3305 = vmatpush1.bf16.msra.mxu0 %v2881
    %3306 = vmatprep.subr.bf16.mxu0 0
    %3307 = vmatpush1.bf16.msra.mxu0 %v2882
    %3308 = vmatprep.subr.bf16.mxu0 0
    %3309 = vmatpush1.bf16.msra.mxu0 %v2883
    %3310 = vmatprep.subr.bf16.mxu0 0
    %3311 = vmatpush1.bf16.msra.mxu0 %v2884
    %3312 = vmatprep.subr.bf16.mxu0 0
    %3313 = vmatpush1.bf16.msra.mxu0 %v2885
    %3314 = vmatprep.subr.bf16.mxu0 0
    %3315 = vmatpush1.bf16.msra.mxu0 %v2886
    %3316 = vmatprep.subr.bf16.mxu0 0
    %3317 = vmatpush1.bf16.msra.mxu0 %v2887
    %3318 = vmatprep.subr.bf16.mxu0 0
    %3319 = vmatpush1.bf16.msra.mxu0 %v2888
    %3320 = vmatprep.subr.bf16.mxu0 0
    %3321 = vmatpush1.bf16.msra.mxu0 %v2889
    %3322 = vmatprep.subr.bf16.mxu0 0
    %3323 = vmatpush1.bf16.msra.mxu0 %v2890
    %3324 = vmatprep.subr.bf16.mxu0 0
    %3325 = vmatpush1.bf16.msra.mxu0 %v2891
    %3326 = vmatprep.mubr.bf16.mxu0 %v2987
    %3327 = vmatmul.mubr.bf16.gmra.mrb[0].mxu0 %v2985
    %v3328 = vpop.f32.mrb[0].mxu0
    %v3329 = vadd.f32 %v3289, %v3328
    %v3330 = vpop.f32.mrb[0].mxu0
    %v3331 = vpop.f32.mrb[0].mxu0
    %v3332 = vpop.f32.mrb[0].mxu0
    %3333 = vdwg.mxu0
    %3334 = vmatprep.subr.bf16.mxu0 0
    %3335 = vmatpush1.bf16.msra.mxu0 %v2892
    %3336 = vmatprep.subr.bf16.mxu0 0
    %3337 = vmatpush1.bf16.msra.mxu0 %v2893
    %3338 = vmatprep.subr.bf16.mxu0 0
    %3339 = vmatpush1.bf16.msra.mxu0 %v2894
    %3340 = vmatprep.subr.bf16.mxu0 0
    %3341 = vmatpush1.bf16.msra.mxu0 %v2895
    %3342 = vmatprep.subr.bf16.mxu0 0
    %3343 = vmatpush1.bf16.msra.mxu0 %v2896
    %3344 = vmatprep.subr.bf16.mxu0 0
    %3345 = vmatpush1.bf16.msra.mxu0 %v2897
    %3346 = vmatprep.subr.bf16.mxu0 0
    %3347 = vmatpush1.bf16.msra.mxu0 %v2898
    %3348 = vmatprep.subr.bf16.mxu0 0
    %3349 = vmatpush1.bf16.msra.mxu0 %v2899
    %3350 = vmatprep.subr.bf16.mxu0 0
    %3351 = vmatpush1.bf16.msra.mxu0 %v2900
    %3352 = vmatprep.subr.bf16.mxu0 0
    %3353 = vmatpush1.bf16.msra.mxu0 %v2901
    %3354 = vmatprep.subr.bf16.mxu0 0
    %3355 = vmatpush1.bf16.msra.mxu0 %v2902
    %3356 = vmatprep.subr.bf16.mxu0 0
    %3357 = vmatpush1.bf16.msra.mxu0 %v2903
    %3358 = vmatprep.subr.bf16.mxu0 0
    %3359 = vmatpush1.bf16.msra.mxu0 %v2904
    %3360 = vmatprep.subr.bf16.mxu0 0
    %3361 = vmatpush1.bf16.msra.mxu0 %v2905
    %3362 = vmatprep.subr.bf16.mxu0 0
    %3363 = vmatpush1.bf16.msra.mxu0 %v2906
    %3364 = vmatprep.subr.bf16.mxu0 0
    %3365 = vmatpush1.bf16.msra.mxu0 %v2907
    %3366 = vmatprep.mubr.bf16.mxu0 %v2995
    %3367 = vmatmul.mubr.bf16.gmra.mrb[0].mxu0 %v2994
    %v3368 = vpop.f32.mrb[0].mxu0
    %v3369 = vadd.f32 %v3329, %v3368
    %v3370 = vpop.f32.mrb[0].mxu0
    %v3371 = vpop.f32.mrb[0].mxu0
    %v3372 = vpop.f32.mrb[0].mxu0
    %3373 = vdwg.mxu0
    %vm3374 = vcmp.gt.f32.partialorder %v3369, 0.0
    %v3375 = vmul.f32 %v3369, 0.01
    %v3376 = vsel %vm3374, %v3369, %v3375
    %v3377 = vld [vmem:[%s5] sm:$0xff]
    %v3378 = vld [vmem:[%s5 + $0x8] sm:$0xff]
    %v3379 = vld [vmem:[%s5 + $0x10] sm:$0xff]
    %v3380 = vld [vmem:[%s5 + $0x18] sm:$0xff]
    %v3381 = vld [vmem:[%s5 + $0x20] sm:$0xff]
    %v3382 = vld [vmem:[%s5 + $0x28] sm:$0xff]
    %v3383 = vld [vmem:[%s5 + $0x30] sm:$0xff]
    %v3384 = vld [vmem:[%s5 + $0x38] sm:$0xff]
    %v3385 = vld [vmem:[%s6] sm:$0x1]
    %v3387 = vlaneseq
    %v3388 = vshrl.u32 %v3387, 7
    %v3389 = vsub.s32 0, %v3388
    %v3390 = vrot.slane %v3385, %v3389
    %vm3392 = vcmask 523264
    %v3394 = vsel %vm3392, %v3376, 0
    %3396 = vmatprep.subr.mxu0 0.0
    %3397 = vmatpush1.msra.mxu0 %v3377
    %3398 = vmatprep.subr.mxu0 0.0
    %3399 = vmatpush1.msra.mxu0 %v3378
    %3400 = vmatprep.subr.mxu0 0.0
    %3401 = vmatpush1.msra.mxu0 %v3379
    %3402 = vmatprep.subr.mxu0 0.0
    %3403 = vmatpush1.msra.mxu0 %v3380
    %3404 = vmatprep.subr.mxu0 0.0
    %3405 = vmatpush1.msra.mxu0 %v3381
    %3406 = vmatprep.subr.mxu0 0.0
    %3407 = vmatpush1.msra.mxu0 %v3382
    %3408 = vmatprep.subr.mxu0 0.0
    %3409 = vmatpush1.msra.mxu0 %v3383
    %3410 = vmatprep.subr.mxu0 0.0
    %3411 = vmatpush1.msra.mxu0 %v3384
    %3412 = vmatprep.subr.mxu0 0.0
    %3413 = vmatpush1.msra.mxu0 0.0
    %3414 = vmatprep.subr.mxu0 0.0
    %3415 = vmatpush1.msra.mxu0 0.0
    %3416 = vmatprep.subr.mxu0 0.0
    %3417 = vmatpush1.msra.mxu0 0.0
    %3418 = vmatprep.subr.mxu0 0.0
    %3419 = vmatpush1.msra.mxu0 0.0
    %3420 = vmatprep.subr.mxu0 0.0
    %3421 = vmatpush1.msra.mxu0 0.0
    %3422 = vmatprep.subr.mxu0 0.0
    %3423 = vmatpush1.msra.mxu0 0.0
    %3424 = vmatprep.subr.mxu0 0.0
    %3425 = vmatpush1.msra.mxu0 0.0
    %3426 = vmatprep.subr.mxu0 0.0
    %3427 = vmatpush1.msra.mxu0 0.0
    %3428 = vmatprep.subr.mxu0 0.0
    %3429 = vmatpush1.msra.mxu0 0.0
    %3430 = vmatprep.subr.mxu0 0.0
    %3431 = vmatpush1.msra.mxu0 0.0
    %3432 = vmatprep.subr.mxu0 0.0
    %3433 = vmatpush1.msra.mxu0 0.0
    %3434 = vmatprep.subr.mxu0 0.0
    %3435 = vmatpush1.msra.mxu0 0.0
    %3436 = vmatprep.subr.mxu0 0.0
    %3437 = vmatpush1.msra.mxu0 0.0
    %3438 = vmatprep.subr.mxu0 0.0
    %3439 = vmatpush1.msra.mxu0 0.0
    %3440 = vmatprep.subr.mxu0 0.0
    %3441 = vmatpush1.msra.mxu0 0.0
    %3442 = vmatprep.subr.mxu0 0.0
    %3443 = vmatpush1.msra.mxu0 0.0
    %3444 = vmatprep.subr.mxu0 0.0
    %3445 = vmatpush1.msra.mxu0 0.0
    %3446 = vmatprep.subr.mxu0 0.0
    %3447 = vmatpush1.msra.mxu0 0.0
    %3448 = vmatprep.subr.mxu0 0.0
    %3449 = vmatpush1.msra.mxu0 0.0
    %3450 = vmatprep.subr.mxu0 0.0
    %3451 = vmatpush1.msra.mxu0 0.0
    %3452 = vmatprep.subr.mxu0 0.0
    %3453 = vmatpush1.msra.mxu0 0.0
    %3454 = vmatprep.subr.mxu0 0.0
    %3455 = vmatpush1.msra.mxu0 0.0
    %3456 = vmatprep.subr.mxu0 0.0
    %3457 = vmatpush1.msra.mxu0 0.0
    %3458 = vmatprep.subr.mxu0 0.0
    %3459 = vmatpush1.msra.mxu0 0.0
    %3460 = vmatprep.mubr.f32.mxu0 0.0
    %3461 = vmatmul.mubr.f32.gmra.mrb[0].mxu0 %v3394
    %v3462 = vpop.f32.mrb[0].mxu0
    %v3463 = vadd.f32 %v3390, %v3462
    %v3464 = vpop.f32.mrb[0].mxu0
    %3465 = vdwg.mxu0
    %vm3466 = vcmp.gt.f32.partialorder %v3463, 0.0
    %v3467 = vmul.f32 %v3463, 0.01
    %v3468 = vsel %vm3466, %v3463, %v3467
    %v3469 = vld [vmem:[%s7] sm:$0xff]
    %v3470 = vld [vmem:[%s7 + $0x8] sm:$0xff]
    %v3471 = vld [vmem:[%s7 + $0x10] sm:$0xff]
    %v3472 = vld [vmem:[%s7 + $0x18] sm:$0xff]
    %v3473 = vld [vmem:[%s8] sm:$0x1]
    %v3475 = vlaneseq
    %v3476 = vshrl.u32 %v3475, 7
    %v3477 = vsub.s32 0, %v3476
    %v3478 = vrot.slane %v3473, %v3477
    %vm3480 = vcmask 261120
    %v3482 = vsel %vm3480, %v3468, 0
    %3484 = vmatprep.subr.mxu0 0.0
    %3485 = vmatpush1.msra.mxu0 %v3469
    %3486 = vmatprep.subr.mxu0 0.0
    %3487 = vmatpush1.msra.mxu0 %v3470
    %3488 = vmatprep.subr.mxu0 0.0
    %3489 = vmatpush1.msra.mxu0 %v3471
    %3490 = vmatprep.subr.mxu0 0.0
    %3491 = vmatpush1.msra.mxu0 %v3472
    %3492 = vmatprep.subr.mxu0 0.0
    %3493 = vmatpush1.msra.mxu0 0.0
    %3494 = vmatprep.subr.mxu0 0.0
    %3495 = vmatpush1.msra.mxu0 0.0
    %3496 = vmatprep.subr.mxu0 0.0
    %3497 = vmatpush1.msra.mxu0 0.0
    %3498 = vmatprep.subr.mxu0 0.0
    %3499 = vmatpush1.msra.mxu0 0.0
    %3500 = vmatprep.subr.mxu0 0.0
    %3501 = vmatpush1.msra.mxu0 0.0
    %3502 = vmatprep.subr.mxu0 0.0
    %3503 = vmatpush1.msra.mxu0 0.0
    %3504 = vmatprep.subr.mxu0 0.0
    %3505 = vmatpush1.msra.mxu0 0.0
    %3506 = vmatprep.subr.mxu0 0.0
    %3507 = vmatpush1.msra.mxu0 0.0
    %3508 = vmatprep.subr.mxu0 0.0
    %3509 = vmatpush1.msra.mxu0 0.0
    %3510 = vmatprep.subr.mxu0 0.0
    %3511 = vmatpush1.msra.mxu0 0.0
    %3512 = vmatprep.subr.mxu0 0.0
    %3513 = vmatpush1.msra.mxu0 0.0
    %3514 = vmatprep.subr.mxu0 0.0
    %3515 = vmatpush1.msra.mxu0 0.0
    %3516 = vmatprep.subr.mxu0 0.0
    %3517 = vmatpush1.msra.mxu0 0.0
    %3518 = vmatprep.subr.mxu0 0.0
    %3519 = vmatpush1.msra.mxu0 0.0
    %3520 = vmatprep.subr.mxu0 0.0
    %3521 = vmatpush1.msra.mxu0 0.0
    %3522 = vmatprep.subr.mxu0 0.0
    %3523 = vmatpush1.msra.mxu0 0.0
    %3524 = vmatprep.subr.mxu0 0.0
    %3525 = vmatpush1.msra.mxu0 0.0
    %3526 = vmatprep.subr.mxu0 0.0
    %3527 = vmatpush1.msra.mxu0 0.0
    %3528 = vmatprep.subr.mxu0 0.0
    %3529 = vmatpush1.msra.mxu0 0.0
    %3530 = vmatprep.subr.mxu0 0.0
    %3531 = vmatpush1.msra.mxu0 0.0
    %3532 = vmatprep.subr.mxu0 0.0
    %3533 = vmatpush1.msra.mxu0 0.0
    %3534 = vmatprep.subr.mxu0 0.0
    %3535 = vmatpush1.msra.mxu0 0.0
    %3536 = vmatprep.subr.mxu0 0.0
    %3537 = vmatpush1.msra.mxu0 0.0
    %3538 = vmatprep.subr.mxu0 0.0
    %3539 = vmatpush1.msra.mxu0 0.0
    %3540 = vmatprep.subr.mxu0 0.0
    %3541 = vmatpush1.msra.mxu0 0.0
    %3542 = vmatprep.subr.mxu0 0.0
    %3543 = vmatpush1.msra.mxu0 0.0
    %3544 = vmatprep.subr.mxu0 0.0
    %3545 = vmatpush1.msra.mxu0 0.0
    %3546 = vmatprep.subr.mxu0 0.0
    %3547 = vmatpush1.msra.mxu0 0.0
    %3548 = vmatprep.mubr.f32.mxu0 0.0
    %3549 = vmatmul.mubr.f32.gmra.mrb[0].mxu0 %v3482
    %v3550 = vpop.f32.mrb[0].mxu0
    %v3551 = vadd.f32 %v3478, %v3550
    %v3552 = vpop.f32.mrb[0].mxu0
    %3553 = vdwg.mxu0
    %vm3554 = vcmask 59392
    %v3555 = vsel %vm3554, %v3551, 0.0
    %3556 = vadd.xlane.f32.xlu0 %v3555
    %v3557 = vpop.xlane.xlu0 %3556
    %v3558 = vrcp.pop 8.0
    %v3559 = vmul.f32 %v3557, %v3558
    %v3560 = vsub.f32 %v3551, %v3559
    %v3561 = vmul.f32 %v3560, %v3560
    %v3562 = vsel %vm3554, %v3561, 0.0
    %3563 = vadd.xlane.f32.xlu0 %v3562
    %v3564 = vpop.xlane.xlu0 %3563
    %v3565 = vmul.f32 %v3564, %v3558
    %v3566 = vadd.f32 %v3565, 1e-05
    %v3567 = vrsqrt.pop %v3566
    %v3568 = vmul.f32 %v3560, %v3567
    %v3569 = vsel %vm3554, %v3568, -inf
    %3570 = vmax.xlane.f32.xlu0 %v3569
    %v3571 = vpop.xlane.xlu0 %3570
    %v3572 = vsub.f32 %v3568, %v3571
    %v3573 = vmul.f32 %v3572, 1.442695
    %v3574 = vpow.pop %v3573
    %v3575 = vsel %vm3554, %v3574, 0.0
    %3576 = vadd.xlane.f32.xlu0 %v3575
    %v3577 = vpop.xlane.xlu0 %3576
    %v3578 = vrcp.pop %v3577
    %v3579 = vmul.f32 %v3574, %v3578
    %v3580 = vsel %vm3554, %v3579, 0.0
    %v3581 = vrot.slane %v3580, 4
    %v3582 = vadd.f32 %v3580, %v3581
    %v3583 = vrot.slane %v3582, 2
    %v3584 = vadd.f32 %v3582, %v3583
    %v3585 = vrot.slane %v3584, 1
    %v3586 = vadd.f32 %v3584, %v3585
    %v3587 = vrcp.pop 3.0
    %v3588 = vmul.f32 %v3586, %v3587
    %vm3589 = vcmask 57344
    %3590 = vst.msk [vmem:[#allocation6] sm:$0x1] %vm3589, %v3588
    // Predicated region
    $region68: #{segmented_3dcnn_forward.1} parent=1 // pred_check
      _
    $region69: #{segmented_3dcnn_forward.1} parent=1 // pred_check_branch
      %3592 = sbr.rel (0) target = $region71
    $region70: #{segmented_3dcnn_forward.1} parent=1 // pred_region
      %s3594 = ssub.s32 16, 16
      %3595 = vsyncadd [#allocation7], %s3594
      %s3597 = sshll.u32 [#allocation6], 4
      %s3598 = int_to_ptr.vmem [resolvable:$true] %s3597
      %3600 = dma.vmem_to_hbm [thread:$0]  %s3598, 16, %s9, [#allocation7]
    $region71: #{segmented_3dcnn_forward.1} parent=1 // pred_fallthru
      _
    // Predicated region
    $region72: #{segmented_3dcnn_forward.1} parent=1 // pred_check
      _
    $region73: #{segmented_3dcnn_forward.1} parent=1 // pred_check_branch
      %3602 = sbr.rel (0) target = $region75
    $region74: #{segmented_3dcnn_forward.1} parent=1 // pred_region
      %3603 = dma.done [#allocation7], 16
    $region75: #{segmented_3dcnn_forward.1} parent=1 // pred_fallthru
      _
    %3604 = vsyncpa [#allocation7], 1
  %3605 = vsyncmov [#allocation5]
  %s3606 = vpop.sfrf %3605
  %p3607 = scmp.eq.s32.totalorder %s3606, 0
  %p3608 = pneg %p3607
  %3610 = shalt.err (%p3608)

</llo_original>
